<compile_context>
chip_gen: v5e
topology: v5e:2x2
jax: 0.10.0
libtpu: 0.0.40
codegen_flags: <defaults>
</compile_context>

<pallas_src>
import numpy as np
import jax
import jax.numpy as jnp
from jax.experimental import pallas as pl
from jax.experimental.pallas import tpu as pltpu

HIDDEN = 32
FUSED = 2 * HIDDEN          # 64: t-net + s-net fused per coupling
DIM = 2                     # RealNVP_2d(dim=2)
IN_DIM = 1 + DIM // 2       # = 2 (variable + time)
N_NETS = 8                  # t1,s1,t2,s2,t3,s3,t4,s4
N_COUPLINGS = 4
N_HIDDEN_LAYERS = 3


# ---------------------------------------------------------------- kernel ----
def realnvp_kernel(x_ref, vecs_ref, wmat_ref, z_ref, ld_ref):
    # x_ref: (3, TN) rows = [lower, upper, t]; batch is on the lane axis.
    x = x_ref[...]
    lower = x[0:1, :]
    upper = x[1:2, :]
    t     = x[2:3, :]
    cdt = wmat_ref.dtype                              # bf16 (default) or f32

    def fused_net(a, c):
        """Fused t/s FCNN pair of coupling c.  a: (1, TN) -> (t_out, s_out)."""
        v = vecs_ref[c]                               # (64, 8) packed vectors, f32
        # layer 0: Linear(2, 64) as two lane-broadcast FMAs (no MXU, no concat)
        h = jnp.tanh(v[:, 0:1] * a + v[:, 1:2] * t + v[:, 2:3])        # (64, TN) f32
        # three fused block-diagonal hidden layers on the MXU
        # (bf16 operands, f32 accumulation; tanh/bias stay f32)
        for l in range(N_HIDDEN_LAYERS):
            w = wmat_ref[c, l]                        # (64, 64) in cdt
            h = jnp.tanh(
                jnp.dot(w, h.astype(cdt), preferred_element_type=jnp.float32)
                + v[:, 3 + l:4 + l])
        # final Linear(64 -> 2): two sublane reductions (XLU), MXU stays free
        hw = h * v[:, 6:7]
        t_out = jnp.sum(hw[:HIDDEN], axis=0, keepdims=True) + v[0:1, 7:8]
        s_out = jnp.sum(hw[HIDDEN:], axis=0, keepdims=True) + v[1:2, 7:8]
        return t_out, s_out

    # coupling 1: transform upper conditioned on (lower, t)
    t1, s1 = fused_net(lower, 0)
    upper = t1 + upper * jnp.exp(s1)
    ld = s1
    # coupling 2: transform lower conditioned on (upper, t)
    t2, s2 = fused_net(upper, 1)
    lower = t2 + lower * jnp.exp(s2)
    ld = ld + s2
    # coupling 3: transform upper conditioned on (lower, t)
    t3, s3 = fused_net(lower, 2)
    upper = t3 + upper * jnp.exp(s3)
    ld = ld + s3
    # coupling 4: transform lower conditioned on (upper, t)
    t4, s4 = fused_net(upper, 3)
    lower = t4 + lower * jnp.exp(s4)
    ld = ld + s4

    # lane-dense row stores (no concatenate)
    z_ref[0:1, :] = lower
    z_ref[1:2, :] = upper
    z_ref[2:3, :] = t
    ld_ref[...] = ld


# --------------------------------------------------------------- wrapper ----
def _pick_tile_n(n):
    """Largest tile up to 4096 lanes, but keep >= 2 grid tiles (v7x: 2 TCs)."""
    half = -(-n // 2)                           # ceil(N / 2)
    t = ((half + 127) // 128) * 128             # round up to lane width
    return int(min(4096, max(128, t)))


def realnvp_forward_t(xt, packed, *, tile_n=None, matmul_dtype=jnp.bfloat16):
    """Batch-on-lanes entry point (no transposes).

    xt: (3, N) float32, rows = [lower, upper, t].
    Returns (z_t (3, N), log_det (N,)).
    """
    vecs, wmat = packed
    N = xt.shape[1]
    if tile_n is None:
        tile_n = _pick_tile_n(N)
    assert tile_n % 128 == 0, "tile_n must be a multiple of 128 (lane width)"
    n_tiles = pl.cdiv(N, tile_n)
    n_pad = n_tiles * tile_n

    xt = jnp.asarray(xt, jnp.float32)
    if n_pad != N:
        xt = jnp.pad(xt, ((0, 0), (0, n_pad - N)))

    vecs = jnp.asarray(vecs, jnp.float32)               # VPU path stays f32
    wmat_c = jnp.asarray(wmat).astype(matmul_dtype)     # MXU operands (bf16 default)

    z_t, ld_t = pl.pallas_call(
        realnvp_kernel,
        out_shape=(jax.ShapeDtypeStruct((3, n_pad), jnp.float32),
                   jax.ShapeDtypeStruct((1, n_pad), jnp.float32)),
        grid_spec=pltpu.PrefetchScalarGridSpec(
            num_scalar_prefetch=0,
            grid=(n_tiles,),
            in_specs=[
                pl.BlockSpec((3, tile_n), lambda i: (0, i)),
                pl.BlockSpec(vecs.shape, lambda i: (0, 0, 0)),
                pl.BlockSpec(wmat_c.shape, lambda i: (0, 0, 0, 0)),
            ],
            out_specs=[
                pl.BlockSpec((3, tile_n), lambda i: (0, i)),
                pl.BlockSpec((1, tile_n), lambda i: (0, i)),
            ]),
        compiler_params=pltpu.CompilerParams(
            dimension_semantics=("parallel",)),
    )(xt, vecs, wmat_c)

    return z_t[:, :N], ld_t[0, :N]


def realnvp_forward(x, packed, *, tile_n=None, matmul_dtype=jnp.bfloat16):
    """Torch-style (N, 3) interface.  Adds two XLA transpose passes around the
    kernel; prefer realnvp_forward_t in hot loops."""
    z_t, log_det = realnvp_forward_t(jnp.asarray(x, jnp.float32).T, packed,
                                     tile_n=tile_n, matmul_dtype=matmul_dtype)
    return z_t.T, log_det


# --------------------------------------------------------- params & ref -----
def init_params(key):
    """Per-net params, torch-Linear-style init, weights stored as (in, out)."""
    def lin(k, fan_in, shape):
        bound = 1.0 / np.sqrt(fan_in)
        return jax.random.uniform(k, shape, jnp.float32, -bound, bound)

    w0s, b0s, w1s, b1s, w4s, b4s = [], [], [], [], [], []
    net_keys = jax.random.split(key, N_NETS)
    for n in range(N_NETS):
        ks = jax.random.split(net_keys[n], 10)
        w0s.append(lin(ks[0], IN_DIM, (IN_DIM, HIDDEN)))
        b0s.append(lin(ks[1], IN_DIM, (HIDDEN,)))
        w1, b1 = [], []
        for l in range(N_HIDDEN_LAYERS):
            w1.append(lin(ks[2 + 2 * l], HIDDEN, (HIDDEN, HIDDEN)))
            b1.append(lin(ks[3 + 2 * l], HIDDEN, (HIDDEN,)))
        w1s.append(jnp.stack(w1)); b1s.append(jnp.stack(b1))
        w4s.append(lin(ks[8], HIDDEN, (HIDDEN,)))       # Linear(32,1) weight col
        b4s.append(lin(ks[9], HIDDEN, (1,)))
    return (jnp.stack(w0s), jnp.stack(b0s), jnp.stack(w1s),
            jnp.stack(b1s), jnp.stack(w4s), jnp.stack(b4s))


def pack_params(params):
    """Pack per-net params into the fused batch-on-lanes layout."""
    w0, b0, w1, b1, w4, b4 = [np.asarray(p) for p in params]
    vecs = np.zeros((N_COUPLINGS, FUSED, 8), np.float32)
    wmat = np.zeros((N_COUPLINGS, N_HIDDEN_LAYERS, FUSED, FUSED), np.float32)
    for c in range(N_COUPLINGS):
        tn, sn = 2 * c, 2 * c + 1
        vecs[c, :HIDDEN, 0] = w0[tn, 0]; vecs[c, HIDDEN:, 0] = w0[sn, 0]  # var weight
        vecs[c, :HIDDEN, 1] = w0[tn, 1]; vecs[c, HIDDEN:, 1] = w0[sn, 1]  # time weight
        vecs[c, :HIDDEN, 2] = b0[tn];    vecs[c, HIDDEN:, 2] = b0[sn]
        for l in range(N_HIDDEN_LAYERS):
            vecs[c, :HIDDEN, 3 + l] = b1[tn, l]
            vecs[c, HIDDEN:, 3 + l] = b1[sn, l]
            wmat[c, l, :HIDDEN, :HIDDEN] = w1[tn, l].T   # block-diag, transposed
            wmat[c, l, HIDDEN:, HIDDEN:] = w1[sn, l].T
        vecs[c, :HIDDEN, 6] = w4[tn];    vecs[c, HIDDEN:, 6] = w4[sn]
        vecs[c, 0, 7] = b4[tn, 0];       vecs[c, 1, 7] = b4[sn, 0]
    return jnp.asarray(vecs), jnp.asarray(wmat)


def _fcnn_ref(x2, idx, params):
    w0, b0, w1, b1, w4, b4 = params
    h = jnp.tanh(x2 @ w0[idx] + b0[idx])
    for l in range(N_HIDDEN_LAYERS):
        h = jnp.tanh(h @ w1[idx, l] + b1[idx, l])
    return h @ w4[idx][:, None] + b4[idx]


def realnvp_ref(x, params):
    lower, upper, t = x[:, 0:1], x[:, 1:2], x[:, 2:3]
    in1 = jnp.concatenate([lower, t], 1)
    t1, s1 = _fcnn_ref(in1, 0, params), _fcnn_ref(in1, 1, params)
    upper = t1 + upper * jnp.exp(s1)
    in2 = jnp.concatenate([upper, t], 1)
    t2, s2 = _fcnn_ref(in2, 2, params), _fcnn_ref(in2, 3, params)
    lower = t2 + lower * jnp.exp(s2)
    in3 = jnp.concatenate([lower, t], 1)
    t3, s3 = _fcnn_ref(in3, 4, params), _fcnn_ref(in3, 5, params)
    upper = t3 + upper * jnp.exp(s3)
    in4 = jnp.concatenate([upper, t], 1)
    t4, s4 = _fcnn_ref(in4, 6, params), _fcnn_ref(in4, 7, params)
    lower = t4 + lower * jnp.exp(s4)
    z = jnp.concatenate([lower, upper, t], 1)
    return z, (s1 + s2 + s3 + s4)[:, 0]


# ------------------------------------------------------------------ main ----
if __name__ == "__main__":
    key = jax.random.PRNGKey(0)
    kp, kx = jax.random.split(key)
    params = init_params(kp)
    packed = pack_params(params)

    # batch of samples, rows = [lower, upper, t]; non-multiple of 128 to
    # exercise the padding path; auto tile -> 512 lanes x 2 tiles (both v7x TCs).
    N = 1000
    x = jax.random.normal(kx, (N, 3), jnp.float32)
    xt = x.T                                            # batch-on-lanes (3, N)

    z_ref, ld_ref = realnvp_ref(x, params)

    # default path: bf16 MXU operands, f32 accumulation / tanh / exp
    z_t, log_det = realnvp_forward_t(xt, packed)
    jax.block_until_ready((z_t, log_det))
    np.testing.assert_allclose(np.asarray(z_t.T), np.asarray(z_ref),
                               rtol=5e-2, atol=5e-2)
    np.testing.assert_allclose(np.asarray(log_det), np.asarray(ld_ref),
                               rtol=5e-2, atol=5e-2)

    # full-f32 path: exact forward semantics of the torch module
    z32_t, ld32 = realnvp_forward_t(xt, packed, matmul_dtype=jnp.float32)
    jax.block_until_ready((z32_t, ld32))
    np.testing.assert_allclose(np.asarray(z32_t.T), np.asarray(z_ref),
                               rtol=1e-5, atol=1e-5)
    np.testing.assert_allclose(np.asarray(ld32), np.asarray(ld_ref),
                               rtol=1e-5, atol=1e-5)

    print("KERNEL_OK")
</pallas_src>

<mosaic_0001>
module attributes {stable_mosaic.version = 11 : i64} {
  func.func @realnvp_kernel(%arg0: i32, %arg1: memref<3x512xf32, #tpu.memory_space<vmem>>, %arg2: memref<4x64x8xf32, #tpu.memory_space<vmem>>, %arg3: memref<4x3x64x64xbf16, #tpu.memory_space<vmem>>, %arg4: memref<3x512xf32, #tpu.memory_space<vmem>>, %arg5: memref<1x512xf32, #tpu.memory_space<vmem>>) attributes {dimension_semantics = [#tpu.dimension_semantics<parallel>], iteration_bounds = array<i64: 2>, scalar_prefetch = 0 : i64, scratch_operands = 0 : i64, tpu.core_type = #tpu.core_type<tc>, window_params = [{transform_indices = @transform_0, window_bounds = array<i64: 3, 512>}, {pipeline_mode = #tpu.pipeline_mode<synchronous>, transform_indices = @transform_1, window_bounds = array<i64: 4, 64, 8>}, {pipeline_mode = #tpu.pipeline_mode<synchronous>, transform_indices = @transform_2, window_bounds = array<i64: 4, 3, 64, 64>}, {transform_indices = @transform_3, window_bounds = array<i64: 3, 512>}, {transform_indices = @transform_4, window_bounds = array<i64: 1, 512>}]} {
    %c0 = arith.constant 0 : index
    %c0_0 = arith.constant 0 : index
    %0 = vector.load %arg1[%c0, %c0_0] : memref<3x512xf32, #tpu.memory_space<vmem>>, vector<3x512xf32>
    %1 = vector.extract_strided_slice %0 {offsets = [0, 0], sizes = [1, 512], strides = [1, 1]} : vector<3x512xf32> to vector<1x512xf32>
    %2 = vector.extract_strided_slice %0 {offsets = [1, 0], sizes = [1, 512], strides = [1, 1]} : vector<3x512xf32> to vector<1x512xf32>
    %3 = vector.extract_strided_slice %0 {offsets = [2, 0], sizes = [1, 512], strides = [1, 1]} : vector<3x512xf32> to vector<1x512xf32>
    %c0_1 = arith.constant 0 : index
    %c0_2 = arith.constant 0 : index
    %c0_3 = arith.constant 0 : index
    %4 = vector.load %arg2[%c0_1, %c0_2, %c0_3] : memref<4x64x8xf32, #tpu.memory_space<vmem>>, vector<1x64x8xf32>
    %5 = vector.shape_cast %4 : vector<1x64x8xf32> to vector<64x8xf32>
    %6 = vector.extract_strided_slice %5 {offsets = [0, 0], sizes = [64, 1], strides = [1, 1]} : vector<64x8xf32> to vector<64x1xf32>
    %7 = vector.broadcast %6 : vector<64x1xf32> to vector<64x512xf32>
    %8 = vector.broadcast %1 : vector<1x512xf32> to vector<64x512xf32>
    %9 = arith.mulf %7, %8 : vector<64x512xf32>
    %10 = vector.extract_strided_slice %5 {offsets = [0, 1], sizes = [64, 1], strides = [1, 1]} : vector<64x8xf32> to vector<64x1xf32>
    %11 = vector.broadcast %10 : vector<64x1xf32> to vector<64x512xf32>
    %12 = vector.broadcast %3 : vector<1x512xf32> to vector<64x512xf32>
    %13 = arith.mulf %11, %12 : vector<64x512xf32>
    %14 = arith.addf %9, %13 : vector<64x512xf32>
    %15 = vector.extract_strided_slice %5 {offsets = [0, 2], sizes = [64, 1], strides = [1, 1]} : vector<64x8xf32> to vector<64x1xf32>
    %16 = vector.broadcast %15 : vector<64x1xf32> to vector<64x512xf32>
    %17 = arith.addf %14, %16 : vector<64x512xf32>
    %18 = math.tanh %17 : vector<64x512xf32>
    %c0_4 = arith.constant 0 : index
    %c0_5 = arith.constant 0 : index
    %c0_6 = arith.constant 0 : index
    %c0_7 = arith.constant 0 : index
    %19 = vector.load %arg3[%c0_4, %c0_5, %c0_6, %c0_7] : memref<4x3x64x64xbf16, #tpu.memory_space<vmem>>, vector<1x1x64x64xbf16>
    %20 = vector.shape_cast %19 : vector<1x1x64x64xbf16> to vector<64x64xbf16>
    %21 = arith.truncf %18 : vector<64x512xf32> to vector<64x512xbf16>
    %cst = arith.constant dense<0.000000e+00> : vector<64x512xf32>
    %22 = tpu.matmul %20, %21, %cst {dimension_numbers = #tpu.dot_dimension_numbers<[1], [0], [0], [1], [0, 0, 1, 1], [], []>} : vector<64x64xbf16>, vector<64x512xbf16>, vector<64x512xf32> -> vector<64x512xf32>
    %23 = vector.extract_strided_slice %5 {offsets = [0, 3], sizes = [64, 1], strides = [1, 1]} : vector<64x8xf32> to vector<64x1xf32>
    %24 = vector.broadcast %23 : vector<64x1xf32> to vector<64x512xf32>
    %25 = arith.addf %22, %24 : vector<64x512xf32>
    %26 = math.tanh %25 : vector<64x512xf32>
    %c0_8 = arith.constant 0 : index
    %c1 = arith.constant 1 : index
    %c0_9 = arith.constant 0 : index
    %c0_10 = arith.constant 0 : index
    %27 = vector.load %arg3[%c0_8, %c1, %c0_9, %c0_10] : memref<4x3x64x64xbf16, #tpu.memory_space<vmem>>, vector<1x1x64x64xbf16>
    %28 = vector.shape_cast %27 : vector<1x1x64x64xbf16> to vector<64x64xbf16>
    %29 = arith.truncf %26 : vector<64x512xf32> to vector<64x512xbf16>
    %cst_11 = arith.constant dense<0.000000e+00> : vector<64x512xf32>
    %30 = tpu.matmul %28, %29, %cst_11 {dimension_numbers = #tpu.dot_dimension_numbers<[1], [0], [0], [1], [0, 0, 1, 1], [], []>} : vector<64x64xbf16>, vector<64x512xbf16>, vector<64x512xf32> -> vector<64x512xf32>
    %31 = vector.extract_strided_slice %5 {offsets = [0, 4], sizes = [64, 1], strides = [1, 1]} : vector<64x8xf32> to vector<64x1xf32>
    %32 = vector.broadcast %31 : vector<64x1xf32> to vector<64x512xf32>
    %33 = arith.addf %30, %32 : vector<64x512xf32>
    %34 = math.tanh %33 : vector<64x512xf32>
    %c0_12 = arith.constant 0 : index
    %c2 = arith.constant 2 : index
    %c0_13 = arith.constant 0 : index
    %c0_14 = arith.constant 0 : index
    %35 = vector.load %arg3[%c0_12, %c2, %c0_13, %c0_14] : memref<4x3x64x64xbf16, #tpu.memory_space<vmem>>, vector<1x1x64x64xbf16>
    %36 = vector.shape_cast %35 : vector<1x1x64x64xbf16> to vector<64x64xbf16>
    %37 = arith.truncf %34 : vector<64x512xf32> to vector<64x512xbf16>
    %cst_15 = arith.constant dense<0.000000e+00> : vector<64x512xf32>
    %38 = tpu.matmul %36, %37, %cst_15 {dimension_numbers = #tpu.dot_dimension_numbers<[1], [0], [0], [1], [0, 0, 1, 1], [], []>} : vector<64x64xbf16>, vector<64x512xbf16>, vector<64x512xf32> -> vector<64x512xf32>
    %39 = vector.extract_strided_slice %5 {offsets = [0, 5], sizes = [64, 1], strides = [1, 1]} : vector<64x8xf32> to vector<64x1xf32>
    %40 = vector.broadcast %39 : vector<64x1xf32> to vector<64x512xf32>
    %41 = arith.addf %38, %40 : vector<64x512xf32>
    %42 = math.tanh %41 : vector<64x512xf32>
    %43 = vector.extract_strided_slice %5 {offsets = [0, 6], sizes = [64, 1], strides = [1, 1]} : vector<64x8xf32> to vector<64x1xf32>
    %44 = vector.broadcast %43 : vector<64x1xf32> to vector<64x512xf32>
    %45 = arith.mulf %42, %44 : vector<64x512xf32>
    %46 = vector.extract_strided_slice %45 {offsets = [0, 0], sizes = [32, 512], strides = [1, 1]} : vector<64x512xf32> to vector<32x512xf32>
    %cst_16 = arith.constant dense<0.000000e+00> : vector<512xf32>
    %47 = vector.multi_reduction <add>, %46, %cst_16 [0] : vector<32x512xf32> to vector<512xf32>
    %48 = vector.shape_cast %47 : vector<512xf32> to vector<1x512xf32>
    %49 = vector.extract_strided_slice %5 {offsets = [0, 7], sizes = [1, 1], strides = [1, 1]} : vector<64x8xf32> to vector<1x1xf32>
    %50 = vector.broadcast %49 : vector<1x1xf32> to vector<1x512xf32>
    %51 = arith.addf %48, %50 : vector<1x512xf32>
    %52 = vector.extract_strided_slice %45 {offsets = [32, 0], sizes = [32, 512], strides = [1, 1]} : vector<64x512xf32> to vector<32x512xf32>
    %cst_17 = arith.constant dense<0.000000e+00> : vector<512xf32>
    %53 = vector.multi_reduction <add>, %52, %cst_17 [0] : vector<32x512xf32> to vector<512xf32>
    %54 = vector.shape_cast %53 : vector<512xf32> to vector<1x512xf32>
    %55 = vector.extract_strided_slice %5 {offsets = [1, 7], sizes = [1, 1], strides = [1, 1]} : vector<64x8xf32> to vector<1x1xf32>
    %56 = vector.broadcast %55 : vector<1x1xf32> to vector<1x512xf32>
    %57 = arith.addf %54, %56 : vector<1x512xf32>
    %58 = math.exp %57 : vector<1x512xf32>
    %59 = arith.mulf %2, %58 : vector<1x512xf32>
    %60 = arith.addf %51, %59 : vector<1x512xf32>
    %c1_18 = arith.constant 1 : index
    %c0_19 = arith.constant 0 : index
    %c0_20 = arith.constant 0 : index
    %61 = vector.load %arg2[%c1_18, %c0_19, %c0_20] : memref<4x64x8xf32, #tpu.memory_space<vmem>>, vector<1x64x8xf32>
    %62 = vector.shape_cast %61 : vector<1x64x8xf32> to vector<64x8xf32>
    %63 = vector.extract_strided_slice %62 {offsets = [0, 0], sizes = [64, 1], strides = [1, 1]} : vector<64x8xf32> to vector<64x1xf32>
    %64 = vector.broadcast %63 : vector<64x1xf32> to vector<64x512xf32>
    %65 = vector.broadcast %60 : vector<1x512xf32> to vector<64x512xf32>
    %66 = arith.mulf %64, %65 : vector<64x512xf32>
    %67 = vector.extract_strided_slice %62 {offsets = [0, 1], sizes = [64, 1], strides = [1, 1]} : vector<64x8xf32> to vector<64x1xf32>
    %68 = vector.broadcast %67 : vector<64x1xf32> to vector<64x512xf32>
    %69 = vector.broadcast %3 : vector<1x512xf32> to vector<64x512xf32>
    %70 = arith.mulf %68, %69 : vector<64x512xf32>
    %71 = arith.addf %66, %70 : vector<64x512xf32>
    %72 = vector.extract_strided_slice %62 {offsets = [0, 2], sizes = [64, 1], strides = [1, 1]} : vector<64x8xf32> to vector<64x1xf32>
    %73 = vector.broadcast %72 : vector<64x1xf32> to vector<64x512xf32>
    %74 = arith.addf %71, %73 : vector<64x512xf32>
    %75 = math.tanh %74 : vector<64x512xf32>
    %c1_21 = arith.constant 1 : index
    %c0_22 = arith.constant 0 : index
    %c0_23 = arith.constant 0 : index
    %c0_24 = arith.constant 0 : index
    %76 = vector.load %arg3[%c1_21, %c0_22, %c0_23, %c0_24] : memref<4x3x64x64xbf16, #tpu.memory_space<vmem>>, vector<1x1x64x64xbf16>
    %77 = vector.shape_cast %76 : vector<1x1x64x64xbf16> to vector<64x64xbf16>
    %78 = arith.truncf %75 : vector<64x512xf32> to vector<64x512xbf16>
    %cst_25 = arith.constant dense<0.000000e+00> : vector<64x512xf32>
    %79 = tpu.matmul %77, %78, %cst_25 {dimension_numbers = #tpu.dot_dimension_numbers<[1], [0], [0], [1], [0, 0, 1, 1], [], []>} : vector<64x64xbf16>, vector<64x512xbf16>, vector<64x512xf32> -> vector<64x512xf32>
    %80 = vector.extract_strided_slice %62 {offsets = [0, 3], sizes = [64, 1], strides = [1, 1]} : vector<64x8xf32> to vector<64x1xf32>
    %81 = vector.broadcast %80 : vector<64x1xf32> to vector<64x512xf32>
    %82 = arith.addf %79, %81 : vector<64x512xf32>
    %83 = math.tanh %82 : vector<64x512xf32>
    %c1_26 = arith.constant 1 : index
    %c1_27 = arith.constant 1 : index
    %c0_28 = arith.constant 0 : index
    %c0_29 = arith.constant 0 : index
    %84 = vector.load %arg3[%c1_26, %c1_27, %c0_28, %c0_29] : memref<4x3x64x64xbf16, #tpu.memory_space<vmem>>, vector<1x1x64x64xbf16>
    %85 = vector.shape_cast %84 : vector<1x1x64x64xbf16> to vector<64x64xbf16>
    %86 = arith.truncf %83 : vector<64x512xf32> to vector<64x512xbf16>
    %cst_30 = arith.constant dense<0.000000e+00> : vector<64x512xf32>
    %87 = tpu.matmul %85, %86, %cst_30 {dimension_numbers = #tpu.dot_dimension_numbers<[1], [0], [0], [1], [0, 0, 1, 1], [], []>} : vector<64x64xbf16>, vector<64x512xbf16>, vector<64x512xf32> -> vector<64x512xf32>
    %88 = vector.extract_strided_slice %62 {offsets = [0, 4], sizes = [64, 1], strides = [1, 1]} : vector<64x8xf32> to vector<64x1xf32>
    %89 = vector.broadcast %88 : vector<64x1xf32> to vector<64x512xf32>
    %90 = arith.addf %87, %89 : vector<64x512xf32>
    %91 = math.tanh %90 : vector<64x512xf32>
    %c1_31 = arith.constant 1 : index
    %c2_32 = arith.constant 2 : index
    %c0_33 = arith.constant 0 : index
    %c0_34 = arith.constant 0 : index
    %92 = vector.load %arg3[%c1_31, %c2_32, %c0_33, %c0_34] : memref<4x3x64x64xbf16, #tpu.memory_space<vmem>>, vector<1x1x64x64xbf16>
    %93 = vector.shape_cast %92 : vector<1x1x64x64xbf16> to vector<64x64xbf16>
    %94 = arith.truncf %91 : vector<64x512xf32> to vector<64x512xbf16>
    %cst_35 = arith.constant dense<0.000000e+00> : vector<64x512xf32>
    %95 = tpu.matmul %93, %94, %cst_35 {dimension_numbers = #tpu.dot_dimension_numbers<[1], [0], [0], [1], [0, 0, 1, 1], [], []>} : vector<64x64xbf16>, vector<64x512xbf16>, vector<64x512xf32> -> vector<64x512xf32>
    %96 = vector.extract_strided_slice %62 {offsets = [0, 5], sizes = [64, 1], strides = [1, 1]} : vector<64x8xf32> to vector<64x1xf32>
    %97 = vector.broadcast %96 : vector<64x1xf32> to vector<64x512xf32>
    %98 = arith.addf %95, %97 : vector<64x512xf32>
    %99 = math.tanh %98 : vector<64x512xf32>
    %100 = vector.extract_strided_slice %62 {offsets = [0, 6], sizes = [64, 1], strides = [1, 1]} : vector<64x8xf32> to vector<64x1xf32>
    %101 = vector.broadcast %100 : vector<64x1xf32> to vector<64x512xf32>
    %102 = arith.mulf %99, %101 : vector<64x512xf32>
    %103 = vector.extract_strided_slice %102 {offsets = [0, 0], sizes = [32, 512], strides = [1, 1]} : vector<64x512xf32> to vector<32x512xf32>
    %cst_36 = arith.constant dense<0.000000e+00> : vector<512xf32>
    %104 = vector.multi_reduction <add>, %103, %cst_36 [0] : vector<32x512xf32> to vector<512xf32>
    %105 = vector.shape_cast %104 : vector<512xf32> to vector<1x512xf32>
    %106 = vector.extract_strided_slice %62 {offsets = [0, 7], sizes = [1, 1], strides = [1, 1]} : vector<64x8xf32> to vector<1x1xf32>
    %107 = vector.broadcast %106 : vector<1x1xf32> to vector<1x512xf32>
    %108 = arith.addf %105, %107 : vector<1x512xf32>
    %109 = vector.extract_strided_slice %102 {offsets = [32, 0], sizes = [32, 512], strides = [1, 1]} : vector<64x512xf32> to vector<32x512xf32>
    %cst_37 = arith.constant dense<0.000000e+00> : vector<512xf32>
    %110 = vector.multi_reduction <add>, %109, %cst_37 [0] : vector<32x512xf32> to vector<512xf32>
    %111 = vector.shape_cast %110 : vector<512xf32> to vector<1x512xf32>
    %112 = vector.extract_strided_slice %62 {offsets = [1, 7], sizes = [1, 1], strides = [1, 1]} : vector<64x8xf32> to vector<1x1xf32>
    %113 = vector.broadcast %112 : vector<1x1xf32> to vector<1x512xf32>
    %114 = arith.addf %111, %113 : vector<1x512xf32>
    %115 = math.exp %114 : vector<1x512xf32>
    %116 = arith.mulf %1, %115 : vector<1x512xf32>
    %117 = arith.addf %108, %116 : vector<1x512xf32>
    %118 = arith.addf %57, %114 : vector<1x512xf32>
    %c2_38 = arith.constant 2 : index
    %c0_39 = arith.constant 0 : index
    %c0_40 = arith.constant 0 : index
    %119 = vector.load %arg2[%c2_38, %c0_39, %c0_40] : memref<4x64x8xf32, #tpu.memory_space<vmem>>, vector<1x64x8xf32>
    %120 = vector.shape_cast %119 : vector<1x64x8xf32> to vector<64x8xf32>
    %121 = vector.extract_strided_slice %120 {offsets = [0, 0], sizes = [64, 1], strides = [1, 1]} : vector<64x8xf32> to vector<64x1xf32>
    %122 = vector.broadcast %121 : vector<64x1xf32> to vector<64x512xf32>
    %123 = vector.broadcast %117 : vector<1x512xf32> to vector<64x512xf32>
    %124 = arith.mulf %122, %123 : vector<64x512xf32>
    %125 = vector.extract_strided_slice %120 {offsets = [0, 1], sizes = [64, 1], strides = [1, 1]} : vector<64x8xf32> to vector<64x1xf32>
    %126 = vector.broadcast %125 : vector<64x1xf32> to vector<64x512xf32>
    %127 = vector.broadcast %3 : vector<1x512xf32> to vector<64x512xf32>
    %128 = arith.mulf %126, %127 : vector<64x512xf32>
    %129 = arith.addf %124, %128 : vector<64x512xf32>
    %130 = vector.extract_strided_slice %120 {offsets = [0, 2], sizes = [64, 1], strides = [1, 1]} : vector<64x8xf32> to vector<64x1xf32>
    %131 = vector.broadcast %130 : vector<64x1xf32> to vector<64x512xf32>
    %132 = arith.addf %129, %131 : vector<64x512xf32>
    %133 = math.tanh %132 : vector<64x512xf32>
    %c2_41 = arith.constant 2 : index
    %c0_42 = arith.constant 0 : index
    %c0_43 = arith.constant 0 : index
    %c0_44 = arith.constant 0 : index
    %134 = vector.load %arg3[%c2_41, %c0_42, %c0_43, %c0_44] : memref<4x3x64x64xbf16, #tpu.memory_space<vmem>>, vector<1x1x64x64xbf16>
    %135 = vector.shape_cast %134 : vector<1x1x64x64xbf16> to vector<64x64xbf16>
    %136 = arith.truncf %133 : vector<64x512xf32> to vector<64x512xbf16>
    %cst_45 = arith.constant dense<0.000000e+00> : vector<64x512xf32>
    %137 = tpu.matmul %135, %136, %cst_45 {dimension_numbers = #tpu.dot_dimension_numbers<[1], [0], [0], [1], [0, 0, 1, 1], [], []>} : vector<64x64xbf16>, vector<64x512xbf16>, vector<64x512xf32> -> vector<64x512xf32>
    %138 = vector.extract_strided_slice %120 {offsets = [0, 3], sizes = [64, 1], strides = [1, 1]} : vector<64x8xf32> to vector<64x1xf32>
    %139 = vector.broadcast %138 : vector<64x1xf32> to vector<64x512xf32>
    %140 = arith.addf %137, %139 : vector<64x512xf32>
    %141 = math.tanh %140 : vector<64x512xf32>
    %c2_46 = arith.constant 2 : index
    %c1_47 = arith.constant 1 : index
    %c0_48 = arith.constant 0 : index
    %c0_49 = arith.constant 0 : index
    %142 = vector.load %arg3[%c2_46, %c1_47, %c0_48, %c0_49] : memref<4x3x64x64xbf16, #tpu.memory_space<vmem>>, vector<1x1x64x64xbf16>
    %143 = vector.shape_cast %142 : vector<1x1x64x64xbf16> to vector<64x64xbf16>
    %144 = arith.truncf %141 : vector<64x512xf32> to vector<64x512xbf16>
    %cst_50 = arith.constant dense<0.000000e+00> : vector<64x512xf32>
    %145 = tpu.matmul %143, %144, %cst_50 {dimension_numbers = #tpu.dot_dimension_numbers<[1], [0], [0], [1], [0, 0, 1, 1], [], []>} : vector<64x64xbf16>, vector<64x512xbf16>, vector<64x512xf32> -> vector<64x512xf32>
    %146 = vector.extract_strided_slice %120 {offsets = [0, 4], sizes = [64, 1], strides = [1, 1]} : vector<64x8xf32> to vector<64x1xf32>
    %147 = vector.broadcast %146 : vector<64x1xf32> to vector<64x512xf32>
    %148 = arith.addf %145, %147 : vector<64x512xf32>
    %149 = math.tanh %148 : vector<64x512xf32>
    %c2_51 = arith.constant 2 : index
    %c2_52 = arith.constant 2 : index
    %c0_53 = arith.constant 0 : index
    %c0_54 = arith.constant 0 : index
    %150 = vector.load %arg3[%c2_51, %c2_52, %c0_53, %c0_54] : memref<4x3x64x64xbf16, #tpu.memory_space<vmem>>, vector<1x1x64x64xbf16>
    %151 = vector.shape_cast %150 : vector<1x1x64x64xbf16> to vector<64x64xbf16>
    %152 = arith.truncf %149 : vector<64x512xf32> to vector<64x512xbf16>
    %cst_55 = arith.constant dense<0.000000e+00> : vector<64x512xf32>
    %153 = tpu.matmul %151, %152, %cst_55 {dimension_numbers = #tpu.dot_dimension_numbers<[1], [0], [0], [1], [0, 0, 1, 1], [], []>} : vector<64x64xbf16>, vector<64x512xbf16>, vector<64x512xf32> -> vector<64x512xf32>
    %154 = vector.extract_strided_slice %120 {offsets = [0, 5], sizes = [64, 1], strides = [1, 1]} : vector<64x8xf32> to vector<64x1xf32>
    %155 = vector.broadcast %154 : vector<64x1xf32> to vector<64x512xf32>
    %156 = arith.addf %153, %155 : vector<64x512xf32>
    %157 = math.tanh %156 : vector<64x512xf32>
    %158 = vector.extract_strided_slice %120 {offsets = [0, 6], sizes = [64, 1], strides = [1, 1]} : vector<64x8xf32> to vector<64x1xf32>
    %159 = vector.broadcast %158 : vector<64x1xf32> to vector<64x512xf32>
    %160 = arith.mulf %157, %159 : vector<64x512xf32>
    %161 = vector.extract_strided_slice %160 {offsets = [0, 0], sizes = [32, 512], strides = [1, 1]} : vector<64x512xf32> to vector<32x512xf32>
    %cst_56 = arith.constant dense<0.000000e+00> : vector<512xf32>
    %162 = vector.multi_reduction <add>, %161, %cst_56 [0] : vector<32x512xf32> to vector<512xf32>
    %163 = vector.shape_cast %162 : vector<512xf32> to vector<1x512xf32>
    %164 = vector.extract_strided_slice %120 {offsets = [0, 7], sizes = [1, 1], strides = [1, 1]} : vector<64x8xf32> to vector<1x1xf32>
    %165 = vector.broadcast %164 : vector<1x1xf32> to vector<1x512xf32>
    %166 = arith.addf %163, %165 : vector<1x512xf32>
    %167 = vector.extract_strided_slice %160 {offsets = [32, 0], sizes = [32, 512], strides = [1, 1]} : vector<64x512xf32> to vector<32x512xf32>
    %cst_57 = arith.constant dense<0.000000e+00> : vector<512xf32>
    %168 = vector.multi_reduction <add>, %167, %cst_57 [0] : vector<32x512xf32> to vector<512xf32>
    %169 = vector.shape_cast %168 : vector<512xf32> to vector<1x512xf32>
    %170 = vector.extract_strided_slice %120 {offsets = [1, 7], sizes = [1, 1], strides = [1, 1]} : vector<64x8xf32> to vector<1x1xf32>
    %171 = vector.broadcast %170 : vector<1x1xf32> to vector<1x512xf32>
    %172 = arith.addf %169, %171 : vector<1x512xf32>
    %173 = math.exp %172 : vector<1x512xf32>
    %174 = arith.mulf %60, %173 : vector<1x512xf32>
    %175 = arith.addf %166, %174 : vector<1x512xf32>
    %176 = arith.addf %118, %172 : vector<1x512xf32>
    %c3 = arith.constant 3 : index
    %c0_58 = arith.constant 0 : index
    %c0_59 = arith.constant 0 : index
    %177 = vector.load %arg2[%c3, %c0_58, %c0_59] : memref<4x64x8xf32, #tpu.memory_space<vmem>>, vector<1x64x8xf32>
    %178 = vector.shape_cast %177 : vector<1x64x8xf32> to vector<64x8xf32>
    %179 = vector.extract_strided_slice %178 {offsets = [0, 0], sizes = [64, 1], strides = [1, 1]} : vector<64x8xf32> to vector<64x1xf32>
    %180 = vector.broadcast %179 : vector<64x1xf32> to vector<64x512xf32>
    %181 = vector.broadcast %175 : vector<1x512xf32> to vector<64x512xf32>
    %182 = arith.mulf %180, %181 : vector<64x512xf32>
    %183 = vector.extract_strided_slice %178 {offsets = [0, 1], sizes = [64, 1], strides = [1, 1]} : vector<64x8xf32> to vector<64x1xf32>
    %184 = vector.broadcast %183 : vector<64x1xf32> to vector<64x512xf32>
    %185 = vector.broadcast %3 : vector<1x512xf32> to vector<64x512xf32>
    %186 = arith.mulf %184, %185 : vector<64x512xf32>
    %187 = arith.addf %182, %186 : vector<64x512xf32>
    %188 = vector.extract_strided_slice %178 {offsets = [0, 2], sizes = [64, 1], strides = [1, 1]} : vector<64x8xf32> to vector<64x1xf32>
    %189 = vector.broadcast %188 : vector<64x1xf32> to vector<64x512xf32>
    %190 = arith.addf %187, %189 : vector<64x512xf32>
    %191 = math.tanh %190 : vector<64x512xf32>
    %c3_60 = arith.constant 3 : index
    %c0_61 = arith.constant 0 : index
    %c0_62 = arith.constant 0 : index
    %c0_63 = arith.constant 0 : index
    %192 = vector.load %arg3[%c3_60, %c0_61, %c0_62, %c0_63] : memref<4x3x64x64xbf16, #tpu.memory_space<vmem>>, vector<1x1x64x64xbf16>
    %193 = vector.shape_cast %192 : vector<1x1x64x64xbf16> to vector<64x64xbf16>
    %194 = arith.truncf %191 : vector<64x512xf32> to vector<64x512xbf16>
    %cst_64 = arith.constant dense<0.000000e+00> : vector<64x512xf32>
    %195 = tpu.matmul %193, %194, %cst_64 {dimension_numbers = #tpu.dot_dimension_numbers<[1], [0], [0], [1], [0, 0, 1, 1], [], []>} : vector<64x64xbf16>, vector<64x512xbf16>, vector<64x512xf32> -> vector<64x512xf32>
    %196 = vector.extract_strided_slice %178 {offsets = [0, 3], sizes = [64, 1], strides = [1, 1]} : vector<64x8xf32> to vector<64x1xf32>
    %197 = vector.broadcast %196 : vector<64x1xf32> to vector<64x512xf32>
    %198 = arith.addf %195, %197 : vector<64x512xf32>
    %199 = math.tanh %198 : vector<64x512xf32>
    %c3_65 = arith.constant 3 : index
    %c1_66 = arith.constant 1 : index
    %c0_67 = arith.constant 0 : index
    %c0_68 = arith.constant 0 : index
    %200 = vector.load %arg3[%c3_65, %c1_66, %c0_67, %c0_68] : memref<4x3x64x64xbf16, #tpu.memory_space<vmem>>, vector<1x1x64x64xbf16>
    %201 = vector.shape_cast %200 : vector<1x1x64x64xbf16> to vector<64x64xbf16>
    %202 = arith.truncf %199 : vector<64x512xf32> to vector<64x512xbf16>
    %cst_69 = arith.constant dense<0.000000e+00> : vector<64x512xf32>
    %203 = tpu.matmul %201, %202, %cst_69 {dimension_numbers = #tpu.dot_dimension_numbers<[1], [0], [0], [1], [0, 0, 1, 1], [], []>} : vector<64x64xbf16>, vector<64x512xbf16>, vector<64x512xf32> -> vector<64x512xf32>
    %204 = vector.extract_strided_slice %178 {offsets = [0, 4], sizes = [64, 1], strides = [1, 1]} : vector<64x8xf32> to vector<64x1xf32>
    %205 = vector.broadcast %204 : vector<64x1xf32> to vector<64x512xf32>
    %206 = arith.addf %203, %205 : vector<64x512xf32>
    %207 = math.tanh %206 : vector<64x512xf32>
    %c3_70 = arith.constant 3 : index
    %c2_71 = arith.constant 2 : index
    %c0_72 = arith.constant 0 : index
    %c0_73 = arith.constant 0 : index
    %208 = vector.load %arg3[%c3_70, %c2_71, %c0_72, %c0_73] : memref<4x3x64x64xbf16, #tpu.memory_space<vmem>>, vector<1x1x64x64xbf16>
    %209 = vector.shape_cast %208 : vector<1x1x64x64xbf16> to vector<64x64xbf16>
    %210 = arith.truncf %207 : vector<64x512xf32> to vector<64x512xbf16>
    %cst_74 = arith.constant dense<0.000000e+00> : vector<64x512xf32>
    %211 = tpu.matmul %209, %210, %cst_74 {dimension_numbers = #tpu.dot_dimension_numbers<[1], [0], [0], [1], [0, 0, 1, 1], [], []>} : vector<64x64xbf16>, vector<64x512xbf16>, vector<64x512xf32> -> vector<64x512xf32>
    %212 = vector.extract_strided_slice %178 {offsets = [0, 5], sizes = [64, 1], strides = [1, 1]} : vector<64x8xf32> to vector<64x1xf32>
    %213 = vector.broadcast %212 : vector<64x1xf32> to vector<64x512xf32>
    %214 = arith.addf %211, %213 : vector<64x512xf32>
    %215 = math.tanh %214 : vector<64x512xf32>
    %216 = vector.extract_strided_slice %178 {offsets = [0, 6], sizes = [64, 1], strides = [1, 1]} : vector<64x8xf32> to vector<64x1xf32>
    %217 = vector.broadcast %216 : vector<64x1xf32> to vector<64x512xf32>
    %218 = arith.mulf %215, %217 : vector<64x512xf32>
    %219 = vector.extract_strided_slice %218 {offsets = [0, 0], sizes = [32, 512], strides = [1, 1]} : vector<64x512xf32> to vector<32x512xf32>
    %cst_75 = arith.constant dense<0.000000e+00> : vector<512xf32>
    %220 = vector.multi_reduction <add>, %219, %cst_75 [0] : vector<32x512xf32> to vector<512xf32>
    %221 = vector.shape_cast %220 : vector<512xf32> to vector<1x512xf32>
    %222 = vector.extract_strided_slice %178 {offsets = [0, 7], sizes = [1, 1], strides = [1, 1]} : vector<64x8xf32> to vector<1x1xf32>
    %223 = vector.broadcast %222 : vector<1x1xf32> to vector<1x512xf32>
    %224 = arith.addf %221, %223 : vector<1x512xf32>
    %225 = vector.extract_strided_slice %218 {offsets = [32, 0], sizes = [32, 512], strides = [1, 1]} : vector<64x512xf32> to vector<32x512xf32>
    %cst_76 = arith.constant dense<0.000000e+00> : vector<512xf32>
    %226 = vector.multi_reduction <add>, %225, %cst_76 [0] : vector<32x512xf32> to vector<512xf32>
    %227 = vector.shape_cast %226 : vector<512xf32> to vector<1x512xf32>
    %228 = vector.extract_strided_slice %178 {offsets = [1, 7], sizes = [1, 1], strides = [1, 1]} : vector<64x8xf32> to vector<1x1xf32>
    %229 = vector.broadcast %228 : vector<1x1xf32> to vector<1x512xf32>
    %230 = arith.addf %227, %229 : vector<1x512xf32>
    %231 = math.exp %230 : vector<1x512xf32>
    %232 = arith.mulf %117, %231 : vector<1x512xf32>
    %233 = arith.addf %224, %232 : vector<1x512xf32>
    %234 = arith.addf %176, %230 : vector<1x512xf32>
    %c0_77 = arith.constant 0 : index
    %c0_78 = arith.constant 0 : index
    %235 = vector.load %arg4[%c0_77, %c0_78] : memref<3x512xf32, #tpu.memory_space<vmem>>, vector<1x512xf32>
    tpu.vector_store %arg4[%c0_77, %c0_78], %233 {strides = array<i32>} : memref<3x512xf32, #tpu.memory_space<vmem>>, vector<1x512xf32>,
    %c1_79 = arith.constant 1 : index
    %c0_80 = arith.constant 0 : index
    %236 = vector.load %arg4[%c1_79, %c0_80] : memref<3x512xf32, #tpu.memory_space<vmem>>, vector<1x512xf32>
    tpu.vector_store %arg4[%c1_79, %c0_80], %175 {strides = array<i32>} : memref<3x512xf32, #tpu.memory_space<vmem>>, vector<1x512xf32>,
    %c2_81 = arith.constant 2 : index
    %c0_82 = arith.constant 0 : index
    %237 = vector.load %arg4[%c2_81, %c0_82] : memref<3x512xf32, #tpu.memory_space<vmem>>, vector<1x512xf32>
    tpu.vector_store %arg4[%c2_81, %c0_82], %3 {strides = array<i32>} : memref<3x512xf32, #tpu.memory_space<vmem>>, vector<1x512xf32>,
    %c0_83 = arith.constant 0 : index
    %c0_84 = arith.constant 0 : index
    %238 = vector.load %arg5[%c0_83, %c0_84] : memref<1x512xf32, #tpu.memory_space<vmem>>, vector<1x512xf32>
    tpu.vector_store %arg5[%c0_83, %c0_84], %234 {strides = array<i32>} : memref<1x512xf32, #tpu.memory_space<vmem>>, vector<1x512xf32>,
    return
  }
  func.func @transform_0(%arg0: i32) -> (i32, i32) {
    %c0_i32 = arith.constant 0 : i32
    %c0_i32_0 = arith.constant 0 : i32
    return %c0_i32, %arg0 : i32, i32
  }
  func.func @transform_1(%arg0: i32) -> (i32, i32, i32) {
    %c0_i32 = arith.constant 0 : i32
    %c0_i32_0 = arith.constant 0 : i32
    %c0_i32_1 = arith.constant 0 : i32
    %c0_i32_2 = arith.constant 0 : i32
    return %c0_i32, %c0_i32_0, %c0_i32_1 : i32, i32, i32
  }
  func.func @transform_2(%arg0: i32) -> (i32, i32, i32, i32) {
    %c0_i32 = arith.constant 0 : i32
    %c0_i32_0 = arith.constant 0 : i32
    %c0_i32_1 = arith.constant 0 : i32
    %c0_i32_2 = arith.constant 0 : i32
    %c0_i32_3 = arith.constant 0 : i32
    return %c0_i32, %c0_i32_0, %c0_i32_1, %c0_i32_2 : i32, i32, i32, i32
  }
  func.func @transform_3(%arg0: i32) -> (i32, i32) {
    %c0_i32 = arith.constant 0 : i32
    %c0_i32_0 = arith.constant 0 : i32
    return %c0_i32, %arg0 : i32, i32
  }
  func.func @transform_4(%arg0: i32) -> (i32, i32) {
    %c0_i32 = arith.constant 0 : i32
    %c0_i32_0 = arith.constant 0 : i32
    return %c0_i32, %arg0 : i32, i32
  }
}

</mosaic_0001>

<llo_original>
// kernel: tpu_custom_call.1
$region0: #{tpu_custom_call.1}
  #allocation0 [shape = 'u32[]', space=smem, size = 0x4, offset = 0x4, fixed_abs, tag = 'smem constant byte address 0x4 - core index']
  #allocation1 [shape = 'u32[72,128]{1,0:T(1,128)}', space=vmem, size = 0x9000, scoped, tag = 'internal scratch']
  %s0 = inlined_call_operand.vmem [shape: f32[3,1024], index: 0, kind: input, shape index: {}]
  %s1 = inlined_call_operand.vmem [shape: f32[4,64,8], index: 1, kind: input, shape index: {}]
  %s2 = inlined_call_operand.hbm [shape: bf16[4,3,64,64], index: 2, kind: input, shape index: {}]
  %s3 = inlined_call_operand.hbm [shape: f32[3,1024], index: 3, kind: output, shape index: {0}]
  %s4 = inlined_call_operand.hbm [shape: f32[1,1024], index: 4, kind: output, shape index: {1}]
  %5 = xla_tuple %s3, %s4
  %s6 = sld [smem:[#allocation0]]
  $region57: #{tpu_custom_call.1} parent=0
    _
  %s8 = ssub.s32 1, %s6
  %s9 = scalar_select 0, %s8, %s6
  $region1: #{tpu_custom_call.1} parent=0
    #allocation2 [shape = 'u8[196608]{0}', space=vmem, size = 0x30000, scoped, tag = 'input window, operand 2, single buffered']
    #allocation3 [shape = 's32[2]{0}', space=sflag, size = 0x8, scoped, tag = 'scoped memory for tpu_custom_call.1']
    #allocation4 [shape = 's32[2]{0}', space=sflag, size = 0x8, scoped, tag = 'scoped memory for tpu_custom_call.1']
    #allocation5 [shape = 'u8[16384]{0}', space=vmem, size = 0x4000, scoped, tag = 'output window, operand 0']
    #allocation6 [shape = 'u8[4096]{0}', space=vmem, size = 0x1000, scoped, tag = 'output window, operand 1']
    #allocation7 [shape = 's32[2]{0}', space=sflag, size = 0x8, scoped, tag = 'scoped memory for tpu_custom_call.1']
    %10 = vsyncpa [#allocation3], 0
    %11 = vsyncpa [#allocation4], 0
    %s12 = scalar_lea.sflag [#allocation4], 1
    %13 = vsyncpa %s12, 0
    %14 = vsyncpa [#allocation7], 0
    %s15 = scalar_lea.sflag [#allocation7], 1
    %16 = vsyncpa %s15, 0
    loop: start=0, step=1, limit=4
    $region2: #{tpu_custom_call.1} parent=1 // loop_pre_header
      _
    $region3: #{tpu_custom_call.1} parent=1 // loop_header
      %s18 = sphi 0, %s22
      %p19 = scmp.ge.s32.totalorder %s18, 4
      %s28 = sphi 0, %s30
      %s31 = sphi 0, %s28
      %s32 = sphi 0, %s31
      %s48 = sphi 0, %s32
      %s52 = sphi 0, %s52
      %s54 = sphi 0, %s52
      %s55 = sphi 0, %s54
      %s69 = sphi 0, %s55
      %s73 = sphi 0, %s73
      %s75 = sphi 0, %s73
      %s76 = sphi 0, %s75
      %s90 = sphi 0, %s76
      %s96 = sphi 0, %s98
      %s99 = sphi 0, %s96
      %s100 = sphi 0, %s99
      %s116 = sphi 0, %s100
      %s122 = sphi 0, %s124
      %s125 = sphi 0, %s122
      %s126 = sphi 0, %s125
      %s142 = sphi 0, %s126
    $region4: #{tpu_custom_call.1} parent=1 // loop_header_branch
      %21 = sbr.rel (%p19) target = $region8
    $region5: #{tpu_custom_call.1} parent=1 // loop_body
      %s23 = ssub.s32 %s18, 1
      %s24 = ssub.s32 %s18, 2
      %s25 = sadd.s32 %s18, 1
      %s26 = ssub.s32 %s18, %s25
      %p27 = scmp.eq.s32.totalorder %s26, 0
      %s29 = sadd.s32 %s28, 1
      %s30 = scalar_select %p27, %s28, %s29
      %p33 = pneg %p27
      %p34 = scmp.eq.s32.totalorder %s18, 1
      %p35 = por %p33, %p34
      %p36 = scmp.ne.s32.totalorder %s28, %s31
      %p37 = scmp.eq.s32.totalorder %s18, 0
      %p38 = por %p36, %p37
      %p39 = scmp.ne.s32.totalorder %s28, %s31
      %p40 = scmp.eq.s32.totalorder %s23, 1
      %p41 = por %p39, %p40
      %p42 = scmp.ne.s32.totalorder %s31, %s32
      %p43 = scmp.eq.s32.totalorder %s23, 0
      %p44 = por %p42, %p43
      %p45 = scmp.ne.s32.totalorder %s31, %s32
      %p46 = scmp.eq.s32.totalorder %s24, 1
      %p47 = por %p45, %p46
      %p49 = scmp.ne.s32.totalorder %s32, %s48
      %p50 = scmp.eq.s32.totalorder %s24, 0
      %p51 = por %p49, %p50
      %s53 = sadd.s32 %s52, 1
      %p56 = scmp.eq.s32.totalorder %s18, 1
      %p57 = scmp.ne.s32.totalorder %s52, %s54
      %p58 = scmp.eq.s32.totalorder %s18, 0
      %p59 = por %p57, %p58
      %p60 = scmp.ne.s32.totalorder %s52, %s54
      %p61 = scmp.eq.s32.totalorder %s23, 1
      %p62 = por %p60, %p61
      %p63 = scmp.ne.s32.totalorder %s54, %s55
      %p64 = scmp.eq.s32.totalorder %s23, 0
      %p65 = por %p63, %p64
      %p66 = scmp.ne.s32.totalorder %s54, %s55
      %p67 = scmp.eq.s32.totalorder %s24, 1
      %p68 = por %p66, %p67
      %p70 = scmp.ne.s32.totalorder %s55, %s69
      %p71 = scmp.eq.s32.totalorder %s24, 0
      %p72 = por %p70, %p71
      %s74 = sadd.s32 %s73, 1
      %p77 = scmp.eq.s32.totalorder %s18, 1
      %p78 = scmp.ne.s32.totalorder %s73, %s75
      %p79 = scmp.eq.s32.totalorder %s18, 0
      %p80 = por %p78, %p79
      %p81 = scmp.ne.s32.totalorder %s73, %s75
      %p82 = scmp.eq.s32.totalorder %s23, 1
      %p83 = por %p81, %p82
      %p84 = scmp.ne.s32.totalorder %s75, %s76
      %p85 = scmp.eq.s32.totalorder %s23, 0
      %p86 = por %p84, %p85
      %p87 = scmp.ne.s32.totalorder %s75, %s76
      %p88 = scmp.eq.s32.totalorder %s24, 1
      %p89 = por %p87, %p88
      %p91 = scmp.ne.s32.totalorder %s76, %s90
      %p92 = scmp.eq.s32.totalorder %s24, 0
      %p93 = por %p91, %p92
      %s94 = ssub.s32 %s18, %s25
      %p95 = scmp.eq.s32.totalorder %s94, 0
      %s97 = sadd.s32 %s96, 1
      %s98 = scalar_select %p95, %s96, %s97
      %p101 = pneg %p95
      %p102 = scmp.eq.s32.totalorder %s18, 1
      %p103 = por %p101, %p102
      %p104 = scmp.ne.s32.totalorder %s96, %s99
      %p105 = scmp.eq.s32.totalorder %s18, 0
      %p106 = por %p104, %p105
      %p107 = scmp.ne.s32.totalorder %s96, %s99
      %p108 = scmp.eq.s32.totalorder %s23, 1
      %p109 = por %p107, %p108
      %p110 = scmp.ne.s32.totalorder %s99, %s100
      %p111 = scmp.eq.s32.totalorder %s23, 0
      %p112 = por %p110, %p111
      %p113 = scmp.ne.s32.totalorder %s99, %s100
      %p114 = scmp.eq.s32.totalorder %s24, 1
      %p115 = por %p113, %p114
      %p117 = scmp.ne.s32.totalorder %s100, %s116
      %p118 = scmp.eq.s32.totalorder %s24, 0
      %p119 = por %p117, %p118
      %s120 = ssub.s32 %s18, %s25
      %p121 = scmp.eq.s32.totalorder %s120, 0
      %s123 = sadd.s32 %s122, 1
      %s124 = scalar_select %p121, %s122, %s123
      %p127 = pneg %p121
      %p128 = scmp.eq.s32.totalorder %s18, 1
      %p129 = por %p127, %p128
      %p130 = scmp.ne.s32.totalorder %s122, %s125
      %p131 = scmp.eq.s32.totalorder %s18, 0
      %p132 = por %p130, %p131
      %p133 = scmp.ne.s32.totalorder %s122, %s125
      %p134 = scmp.eq.s32.totalorder %s23, 1
      %p135 = por %p133, %p134
      %p136 = scmp.ne.s32.totalorder %s125, %s126
      %p137 = scmp.eq.s32.totalorder %s23, 0
      %p138 = por %p136, %p137
      %p139 = scmp.ne.s32.totalorder %s125, %s126
      %p140 = scmp.eq.s32.totalorder %s24, 1
      %p141 = por %p139, %p140
      %p143 = scmp.ne.s32.totalorder %s126, %s142
      %p144 = scmp.eq.s32.totalorder %s24, 0
      %p145 = por %p143, %p144
      %p146 = scmp.le.s32.totalorder 1, %s18
      %p147 = scmp.lt.s32.totalorder %s18, 3
      %p148 = pnand %p146, %p147
      %p149 = pneg %p148
      // Predicated region
      $region9: #{tpu_custom_call.1} parent=5 // pred_check
        _
      $region10: #{tpu_custom_call.1} parent=5 // pred_check_branch
        %151 = sbr.rel (%p148) target = $region12
      $region11: #{tpu_custom_call.1} parent=5 // pred_region
        %s152 = ssub.s32 %s18, 1
        // Predicated region
        $region13: #{tpu_custom_call.1} parent=11 // pred_check
          %p153 = pneg %p65
        $region14: #{tpu_custom_call.1} parent=11 // pred_check_branch
          %155 = sbr.rel (%p153) target = $region16
        $region15: #{tpu_custom_call.1} parent=11 // pred_region
          _
        $region16: #{tpu_custom_call.1} parent=11 // pred_fallthru
          _
        // Predicated region
        $region17: #{tpu_custom_call.1} parent=11 // pred_check
          %p156 = pneg %p86
        $region18: #{tpu_custom_call.1} parent=11 // pred_check_branch
          %158 = sbr.rel (%p156) target = $region20
        $region19: #{tpu_custom_call.1} parent=11 // pred_region
          %160 = vsyncadd [#allocation3], 0
          %s161 = sshll.u32 %s2, 4
          %s162 = int_to_ptr.hbm [resolvable:$true] %s161
          %s163 = sshll.u32 [#allocation2], 4
          %s164 = int_to_ptr.vmem [resolvable:$true] %s163
          %169 = dma.hbm_to_vmem [thread:$0]  %s162, 6144, %s164, [#allocation3], 64, 64, 4
        $region20: #{tpu_custom_call.1} parent=11 // pred_fallthru
          _
      $region12: #{tpu_custom_call.1} parent=5 // pred_fallthru
        _
      %p170 = scmp.lt.s32.totalorder %s18, 2
      // Predicated region
      $region21: #{tpu_custom_call.1} parent=5 // pred_check
        %p171 = pneg %p170
      $region22: #{tpu_custom_call.1} parent=5 // pred_check_branch
        %173 = sbr.rel (%p171) target = $region24
      $region23: #{tpu_custom_call.1} parent=5 // pred_region
        // Predicated region
        $region25: #{tpu_custom_call.1} parent=23 // pred_check
          %p174 = pneg %p38
        $region26: #{tpu_custom_call.1} parent=23 // pred_check_branch
          %176 = sbr.rel (%p174) target = $region28
        $region27: #{tpu_custom_call.1} parent=23 // pred_region
          %s177 = smul.u32 4, %s18
          %p178 = scmp.lt.s32.totalorder %s177, 7
          %s179 = scalar_select %p178, %s177, 7
          %s180 = smul.addr %s179, 4
          %s181 = scalar_lea.vmem %s0, %s180
          %s182 = smul.u32 4, %s18
        $region28: #{tpu_custom_call.1} parent=23 // pred_fallthru
          _
      $region24: #{tpu_custom_call.1} parent=5 // pred_fallthru
        _
      %p183 = scmp.le.s32.totalorder 1, %s18
      %p184 = scmp.lt.s32.totalorder %s18, 3
      %p185 = pnand %p183, %p184
      %p186 = pneg %p185
      // Predicated region
      $region29: #{tpu_custom_call.1} parent=5 // pred_check
        _
      $region30: #{tpu_custom_call.1} parent=5 // pred_check_branch
        %188 = sbr.rel (%p185) target = $region32
      $region31: #{tpu_custom_call.1} parent=5 // pred_region
        %s189 = ssub.s32 %s18, 1
        // Predicated region
        $region33: #{tpu_custom_call.1} parent=31 // pred_check
          %p190 = pneg %p86
        $region34: #{tpu_custom_call.1} parent=31 // pred_check_branch
          %192 = sbr.rel (%p190) target = $region36
        $region35: #{tpu_custom_call.1} parent=31 // pred_region
          %194 = dma.done [#allocation3], 6144
        $region36: #{tpu_custom_call.1} parent=31 // pred_fallthru
          _
        %s195 = smul.u32 4, %s23
        %p196 = scmp.lt.s32.totalorder %s195, 7
        %s197 = scalar_select %p196, %s195, 7
        %s198 = smul.addr %s197, 4
        %s199 = scalar_lea.vmem %s0, %s198
        %p200 = pneg %p44
        %p201 = pneg %p41
        %p202 = pneg %p65
        %p203 = pneg %p62
        %p204 = pneg %p86
        %p205 = pneg %p83
        %p206 = pneg %p112
        %p207 = pneg %p109
        %s208 = sand.u32 %s99, 1
        %s209 = scalar_lea.sflag [#allocation4], %s208
        %s210 = sand.u32 %s99, 1
        %s211 = smul.addr %s210, 16
        %s212 = scalar_lea.vmem [#allocation5], %s211
        %p213 = pneg %p138
        %p214 = pneg %p135
        %s215 = sand.u32 %s125, 1
        %s216 = scalar_lea.sflag [#allocation7], %s215
        %s217 = sand.u32 %s125, 1
        %s218 = smul.addr %s217, 4
        %s219 = scalar_lea.vmem [#allocation6], %s218
        %s220 = smul.u32 4, %s23
        %p221 = scmp.lt.s32.totalorder %s220, 7
        %s222 = scalar_select %p221, %s220, 7
        %s223 = smul.addr %s222, 4
        %s224 = scalar_lea.vmem %s0, %s223
        %s225 = smul.u32 4, %s23
        %s226 = smul.u32 4, %s23
        %s227 = smul.u32 4, %s23
        %v229 = vld [vmem:[%s224] sm:$0x77]
        %v230 = vld [vmem:[%s224 + $0x8] sm:$0x77]
        %v231 = vld [vmem:[%s1] sm:$0xff]
        %v232 = vld [vmem:[%s1 + $0x8] sm:$0xff]
        %v233 = vld [vmem:[%s1 + $0x10] sm:$0xff]
        %v234 = vld [vmem:[%s1 + $0x18] sm:$0xff]
        %v235 = vld [vmem:[%s1 + $0x20] sm:$0xff]
        %v236 = vld [vmem:[%s1 + $0x28] sm:$0xff]
        %v237 = vld [vmem:[%s1 + $0x30] sm:$0xff]
        %v238 = vld [vmem:[%s1 + $0x38] sm:$0xff]
        %240 = vset.pattern.permute.xlu0 0
        %241 = vperm.xlu0 %240, %v231
        %v242 = vpop.permute.xlu0 %241
        %245 = vset.pattern.permute.xlu0 0
        %246 = vperm.xlu0 %245, %v232
        %v247 = vpop.permute.xlu0 %246
        %250 = vset.pattern.permute.xlu0 0
        %251 = vperm.xlu0 %250, %v233
        %v252 = vpop.permute.xlu0 %251
        %255 = vset.pattern.permute.xlu0 0
        %256 = vperm.xlu0 %255, %v234
        %v257 = vpop.permute.xlu0 %256
        %260 = vset.pattern.permute.xlu0 0
        %261 = vperm.xlu0 %260, %v235
        %v262 = vpop.permute.xlu0 %261
        %265 = vset.pattern.permute.xlu0 0
        %266 = vperm.xlu0 %265, %v236
        %v267 = vpop.permute.xlu0 %266
        %270 = vset.pattern.permute.xlu0 0
        %271 = vperm.xlu0 %270, %v237
        %v272 = vpop.permute.xlu0 %271
        %275 = vset.pattern.permute.xlu0 0
        %276 = vperm.xlu0 %275, %v238
        %v277 = vpop.permute.xlu0 %276
        %v281 = vperm.slane %v229, 0
        %v282 = vperm.slane %v229, 4
        %v283 = vperm.slane %v230, 0
        %v284 = vperm.slane %v230, 4
        %v289 = vperm.slane %v281, 0
        %v290 = vperm.slane %v282, 0
        %v291 = vperm.slane %v283, 0
        %v292 = vperm.slane %v284, 0
        %v293 = vmul.f32 %v242, %v289
        %v294 = vmul.f32 %v242, %v290
        %v295 = vmul.f32 %v242, %v291
        %v296 = vmul.f32 %v242, %v292
        %v297 = vmul.f32 %v247, %v289
        %v298 = vmul.f32 %v247, %v290
        %v299 = vmul.f32 %v247, %v291
        %v300 = vmul.f32 %v247, %v292
        %v301 = vmul.f32 %v252, %v289
        %v302 = vmul.f32 %v252, %v290
        %v303 = vmul.f32 %v252, %v291
        %v304 = vmul.f32 %v252, %v292
        %v305 = vmul.f32 %v257, %v289
        %v306 = vmul.f32 %v257, %v290
        %v307 = vmul.f32 %v257, %v291
        %v308 = vmul.f32 %v257, %v292
        %v309 = vmul.f32 %v262, %v289
        %v310 = vmul.f32 %v262, %v290
        %v311 = vmul.f32 %v262, %v291
        %v312 = vmul.f32 %v262, %v292
        %v313 = vmul.f32 %v267, %v289
        %v314 = vmul.f32 %v267, %v290
        %v315 = vmul.f32 %v267, %v291
        %v316 = vmul.f32 %v267, %v292
        %v317 = vmul.f32 %v272, %v289
        %v318 = vmul.f32 %v272, %v290
        %v319 = vmul.f32 %v272, %v291
        %v320 = vmul.f32 %v272, %v292
        %v321 = vmul.f32 %v277, %v289
        %v322 = vmul.f32 %v277, %v290
        %v323 = vmul.f32 %v277, %v291
        %v324 = vmul.f32 %v277, %v292
        %325 = vset.pattern.permute.xlu0 1
        %326 = vperm.xlu0 %325, %v231
        %v327 = vpop.permute.xlu0 %326
        %329 = vset.pattern.permute.xlu0 1
        %330 = vperm.xlu0 %329, %v232
        %v331 = vpop.permute.xlu0 %330
        %333 = vset.pattern.permute.xlu0 1
        %334 = vperm.xlu0 %333, %v233
        %v335 = vpop.permute.xlu0 %334
        %337 = vset.pattern.permute.xlu0 1
        %338 = vperm.xlu0 %337, %v234
        %v339 = vpop.permute.xlu0 %338
        %341 = vset.pattern.permute.xlu0 1
        %342 = vperm.xlu0 %341, %v235
        %v343 = vpop.permute.xlu0 %342
        %345 = vset.pattern.permute.xlu0 1
        %346 = vperm.xlu0 %345, %v236
        %v347 = vpop.permute.xlu0 %346
        %349 = vset.pattern.permute.xlu0 1
        %350 = vperm.xlu0 %349, %v237
        %v351 = vpop.permute.xlu0 %350
        %353 = vset.pattern.permute.xlu0 1
        %354 = vperm.xlu0 %353, %v238
        %v355 = vpop.permute.xlu0 %354
        %v357 = vperm.slane %v229, 2
        %v358 = vperm.slane %v229, 6
        %v359 = vperm.slane %v230, 2
        %v360 = vperm.slane %v230, 6
        %v365 = vperm.slane %v357, 2
        %v366 = vperm.slane %v358, 2
        %v367 = vperm.slane %v359, 2
        %v368 = vperm.slane %v360, 2
        %v369 = vmul.f32 %v327, %v365
        %v370 = vmul.f32 %v327, %v366
        %v371 = vmul.f32 %v327, %v367
        %v372 = vmul.f32 %v327, %v368
        %v373 = vmul.f32 %v331, %v365
        %v374 = vmul.f32 %v331, %v366
        %v375 = vmul.f32 %v331, %v367
        %v376 = vmul.f32 %v331, %v368
        %v377 = vmul.f32 %v335, %v365
        %v378 = vmul.f32 %v335, %v366
        %v379 = vmul.f32 %v335, %v367
        %v380 = vmul.f32 %v335, %v368
        %v381 = vmul.f32 %v339, %v365
        %v382 = vmul.f32 %v339, %v366
        %v383 = vmul.f32 %v339, %v367
        %v384 = vmul.f32 %v339, %v368
        %v385 = vmul.f32 %v343, %v365
        %v386 = vmul.f32 %v343, %v366
        %v387 = vmul.f32 %v343, %v367
        %v388 = vmul.f32 %v343, %v368
        %v389 = vmul.f32 %v347, %v365
        %v390 = vmul.f32 %v347, %v366
        %v391 = vmul.f32 %v347, %v367
        %v392 = vmul.f32 %v347, %v368
        %v393 = vmul.f32 %v351, %v365
        %v394 = vmul.f32 %v351, %v366
        %v395 = vmul.f32 %v351, %v367
        %v396 = vmul.f32 %v351, %v368
        %v397 = vmul.f32 %v355, %v365
        %v398 = vmul.f32 %v355, %v366
        %v399 = vmul.f32 %v355, %v367
        %v400 = vmul.f32 %v355, %v368
        %v401 = vadd.f32 %v293, %v369
        %v402 = vadd.f32 %v294, %v370
        %v403 = vadd.f32 %v295, %v371
        %v404 = vadd.f32 %v296, %v372
        %v405 = vadd.f32 %v297, %v373
        %v406 = vadd.f32 %v298, %v374
        %v407 = vadd.f32 %v299, %v375
        %v408 = vadd.f32 %v300, %v376
        %v409 = vadd.f32 %v301, %v377
        %v410 = vadd.f32 %v302, %v378
        %v411 = vadd.f32 %v303, %v379
        %v412 = vadd.f32 %v304, %v380
        %v413 = vadd.f32 %v305, %v381
        %v414 = vadd.f32 %v306, %v382
        %v415 = vadd.f32 %v307, %v383
        %v416 = vadd.f32 %v308, %v384
        %v417 = vadd.f32 %v309, %v385
        %v418 = vadd.f32 %v310, %v386
        %v419 = vadd.f32 %v311, %v387
        %v420 = vadd.f32 %v312, %v388
        %v421 = vadd.f32 %v313, %v389
        %v422 = vadd.f32 %v314, %v390
        %v423 = vadd.f32 %v315, %v391
        %v424 = vadd.f32 %v316, %v392
        %v425 = vadd.f32 %v317, %v393
        %v426 = vadd.f32 %v318, %v394
        %v427 = vadd.f32 %v319, %v395
        %v428 = vadd.f32 %v320, %v396
        %v429 = vadd.f32 %v321, %v397
        %v430 = vadd.f32 %v322, %v398
        %v431 = vadd.f32 %v323, %v399
        %v432 = vadd.f32 %v324, %v400
        %433 = vset.pattern.permute.xlu0 2
        %434 = vperm.xlu0 %433, %v231
        %v435 = vpop.permute.xlu0 %434
        %437 = vset.pattern.permute.xlu0 2
        %438 = vperm.xlu0 %437, %v232
        %v439 = vpop.permute.xlu0 %438
        %441 = vset.pattern.permute.xlu0 2
        %442 = vperm.xlu0 %441, %v233
        %v443 = vpop.permute.xlu0 %442
        %445 = vset.pattern.permute.xlu0 2
        %446 = vperm.xlu0 %445, %v234
        %v447 = vpop.permute.xlu0 %446
        %449 = vset.pattern.permute.xlu0 2
        %450 = vperm.xlu0 %449, %v235
        %v451 = vpop.permute.xlu0 %450
        %453 = vset.pattern.permute.xlu0 2
        %454 = vperm.xlu0 %453, %v236
        %v455 = vpop.permute.xlu0 %454
        %457 = vset.pattern.permute.xlu0 2
        %458 = vperm.xlu0 %457, %v237
        %v459 = vpop.permute.xlu0 %458
        %461 = vset.pattern.permute.xlu0 2
        %462 = vperm.xlu0 %461, %v238
        %v463 = vpop.permute.xlu0 %462
        %v465 = vadd.f32 %v401, %v435
        %v466 = vadd.f32 %v402, %v435
        %v467 = vadd.f32 %v403, %v435
        %v468 = vadd.f32 %v404, %v435
        %v469 = vadd.f32 %v405, %v439
        %v470 = vadd.f32 %v406, %v439
        %v471 = vadd.f32 %v407, %v439
        %v472 = vadd.f32 %v408, %v439
        %v473 = vadd.f32 %v409, %v443
        %v474 = vadd.f32 %v410, %v443
        %v475 = vadd.f32 %v411, %v443
        %v476 = vadd.f32 %v412, %v443
        %v477 = vadd.f32 %v413, %v447
        %v478 = vadd.f32 %v414, %v447
        %v479 = vadd.f32 %v415, %v447
        %v480 = vadd.f32 %v416, %v447
        %v481 = vadd.f32 %v417, %v451
        %v482 = vadd.f32 %v418, %v451
        %v483 = vadd.f32 %v419, %v451
        %v484 = vadd.f32 %v420, %v451
        %v485 = vadd.f32 %v421, %v455
        %v486 = vadd.f32 %v422, %v455
        %v487 = vadd.f32 %v423, %v455
        %v488 = vadd.f32 %v424, %v455
        %v489 = vadd.f32 %v425, %v459
        %v490 = vadd.f32 %v426, %v459
        %v491 = vadd.f32 %v427, %v459
        %v492 = vadd.f32 %v428, %v459
        %v493 = vadd.f32 %v429, %v463
        %v494 = vadd.f32 %v430, %v463
        %v495 = vadd.f32 %v431, %v463
        %v496 = vadd.f32 %v432, %v463
        %v497 = vtanh.pop %v465
        %v498 = vtanh.pop %v466
        %v499 = vtanh.pop %v467
        %v500 = vtanh.pop %v468
        %v501 = vtanh.pop %v469
        %v502 = vtanh.pop %v470
        %v503 = vtanh.pop %v471
        %v504 = vtanh.pop %v472
        %v505 = vtanh.pop %v473
        %v506 = vtanh.pop %v474
        %v507 = vtanh.pop %v475
        %v508 = vtanh.pop %v476
        %v509 = vtanh.pop %v477
        %v510 = vtanh.pop %v478
        %v511 = vtanh.pop %v479
        %v512 = vtanh.pop %v480
        %v513 = vtanh.pop %v481
        %v514 = vtanh.pop %v482
        %v515 = vtanh.pop %v483
        %v516 = vtanh.pop %v484
        %v517 = vtanh.pop %v485
        %v518 = vtanh.pop %v486
        %v519 = vtanh.pop %v487
        %v520 = vtanh.pop %v488
        %v521 = vtanh.pop %v489
        %v522 = vtanh.pop %v490
        %v523 = vtanh.pop %v491
        %v524 = vtanh.pop %v492
        %v525 = vtanh.pop %v493
        %v526 = vtanh.pop %v494
        %v527 = vtanh.pop %v495
        %v528 = vtanh.pop %v496
        %v529 = vld [vmem:[#allocation2] sm:$0xf]
        %v530 = vld [vmem:[#allocation2 + $0x4] sm:$0xf]
        %v531 = vld [vmem:[#allocation2 + $0x8] sm:$0xf]
        %v532 = vld [vmem:[#allocation2 + $0xc] sm:$0xf]
        %v533 = vld [vmem:[#allocation2 + $0x10] sm:$0xf]
        %v534 = vld [vmem:[#allocation2 + $0x14] sm:$0xf]
        %v535 = vld [vmem:[#allocation2 + $0x18] sm:$0xf]
        %v536 = vld [vmem:[#allocation2 + $0x1c] sm:$0xf]
        %v537 = vpack.c.bf16 %v501, %v497
        %v538 = vpack.c.bf16 %v502, %v498
        %v539 = vpack.c.bf16 %v503, %v499
        %v540 = vpack.c.bf16 %v504, %v500
        %v541 = vpack.c.bf16 %v509, %v505
        %v542 = vpack.c.bf16 %v510, %v506
        %v543 = vpack.c.bf16 %v511, %v507
        %v544 = vpack.c.bf16 %v512, %v508
        %v545 = vpack.c.bf16 %v517, %v513
        %v546 = vpack.c.bf16 %v518, %v514
        %v547 = vpack.c.bf16 %v519, %v515
        %v548 = vpack.c.bf16 %v520, %v516
        %v549 = vpack.c.bf16 %v525, %v521
        %v550 = vpack.c.bf16 %v526, %v522
        %v551 = vpack.c.bf16 %v527, %v523
        %v552 = vpack.c.bf16 %v528, %v524
        %553 = vset.pattern.permute.xlu0 3
        %554 = vperm.xlu0 %553, %v231
        %v555 = vpop.permute.xlu0 %554
        %557 = vset.pattern.permute.xlu0 3
        %558 = vperm.xlu0 %557, %v232
        %v559 = vpop.permute.xlu0 %558
        %561 = vset.pattern.permute.xlu0 3
        %562 = vperm.xlu0 %561, %v233
        %v563 = vpop.permute.xlu0 %562
        %565 = vset.pattern.permute.xlu0 3
        %566 = vperm.xlu0 %565, %v234
        %v567 = vpop.permute.xlu0 %566
        %569 = vset.pattern.permute.xlu0 3
        %570 = vperm.xlu0 %569, %v235
        %v571 = vpop.permute.xlu0 %570
        %573 = vset.pattern.permute.xlu0 3
        %574 = vperm.xlu0 %573, %v236
        %v575 = vpop.permute.xlu0 %574
        %577 = vset.pattern.permute.xlu0 3
        %578 = vperm.xlu0 %577, %v237
        %v579 = vpop.permute.xlu0 %578
        %581 = vset.pattern.permute.xlu0 3
        %582 = vperm.xlu0 %581, %v238
        %v583 = vpop.permute.xlu0 %582
        %v593 = vunpack.c.l.b16 %v529
        %v594 = vunpack.c.l.b16 %v530
        %v595 = vunpack.c.l.b16 %v531
        %v596 = vunpack.c.l.b16 %v532
        %v597 = vunpack.c.l.b16 %v533
        %v598 = vunpack.c.l.b16 %v534
        %v599 = vunpack.c.l.b16 %v535
        %v600 = vunpack.c.l.b16 %v536
        %v601 = vpack.c.b16 %v594, %v593
        %v602 = vpack.c.b16 %v596, %v595
        %v603 = vpack.c.b16 %v598, %v597
        %v604 = vpack.c.b16 %v600, %v599
        %vm605 = vcmask 523264
        %v607 = vsel %vm605, %v601, 0
        %v610 = vsel %vm605, %v602, 0
        %v613 = vsel %vm605, %v603, 0
        %v616 = vsel %vm605, %v604, 0
        %618 = vmatpush.bf16.msra.mxu0 0
        %619 = vmatpush.bf16.msra.mxu0 0
        %620 = vmatpush.bf16.msra.mxu0 0
        %621 = vmatpush.bf16.msra.mxu0 0
        %622 = vmatpush.bf16.msra.mxu0 %v549
        %623 = vmatpush.bf16.msra.mxu0 %v545
        %624 = vmatpush.bf16.msra.mxu0 %v541
        %625 = vmatpush.bf16.msra.mxu0 %v537
        %626 = vmatmul.bf16.gmra.mxu0 %v607
        %v627 = vpop.f32.mrf.mxu0
        %v628 = vadd.f32 %v555, %v627
        %v629 = vpop.f32.mrf.mxu0
        %v630 = vadd.f32 %v559, %v629
        %631 = vmatmul.bf16.gmra.mxu0 %v610
        %v632 = vpop.f32.mrf.mxu0
        %v633 = vadd.f32 %v563, %v632
        %v634 = vpop.f32.mrf.mxu0
        %v635 = vadd.f32 %v567, %v634
        %636 = vmatmul.bf16.gmra.mxu0 %v613
        %v637 = vpop.f32.mrf.mxu0
        %v638 = vadd.f32 %v571, %v637
        %v639 = vpop.f32.mrf.mxu0
        %v640 = vadd.f32 %v575, %v639
        %641 = vmatmul.bf16.gmra.mxu0 %v616
        %v642 = vpop.f32.mrf.mxu0
        %v643 = vadd.f32 %v579, %v642
        %v644 = vpop.f32.mrf.mxu0
        %v645 = vadd.f32 %v583, %v644
        %646 = vdwg.mxu0
        %647 = vmatpush.bf16.msra.mxu0 0
        %648 = vmatpush.bf16.msra.mxu0 0
        %649 = vmatpush.bf16.msra.mxu0 0
        %650 = vmatpush.bf16.msra.mxu0 0
        %651 = vmatpush.bf16.msra.mxu0 %v550
        %652 = vmatpush.bf16.msra.mxu0 %v546
        %653 = vmatpush.bf16.msra.mxu0 %v542
        %654 = vmatpush.bf16.msra.mxu0 %v538
        %655 = vmatmul.bf16.gmra.mxu0 %v607
        %v656 = vpop.f32.mrf.mxu0
        %v657 = vadd.f32 %v555, %v656
        %v658 = vpop.f32.mrf.mxu0
        %v659 = vadd.f32 %v559, %v658
        %660 = vmatmul.bf16.gmra.mxu0 %v610
        %v661 = vpop.f32.mrf.mxu0
        %v662 = vadd.f32 %v563, %v661
        %v663 = vpop.f32.mrf.mxu0
        %v664 = vadd.f32 %v567, %v663
        %665 = vmatmul.bf16.gmra.mxu0 %v613
        %v666 = vpop.f32.mrf.mxu0
        %v667 = vadd.f32 %v571, %v666
        %v668 = vpop.f32.mrf.mxu0
        %v669 = vadd.f32 %v575, %v668
        %670 = vmatmul.bf16.gmra.mxu0 %v616
        %v671 = vpop.f32.mrf.mxu0
        %v672 = vadd.f32 %v579, %v671
        %v673 = vpop.f32.mrf.mxu0
        %v674 = vadd.f32 %v583, %v673
        %675 = vdwg.mxu0
        %676 = vmatpush.bf16.msra.mxu0 0
        %677 = vmatpush.bf16.msra.mxu0 0
        %678 = vmatpush.bf16.msra.mxu0 0
        %679 = vmatpush.bf16.msra.mxu0 0
        %680 = vmatpush.bf16.msra.mxu0 %v551
        %681 = vmatpush.bf16.msra.mxu0 %v547
        %682 = vmatpush.bf16.msra.mxu0 %v543
        %683 = vmatpush.bf16.msra.mxu0 %v539
        %684 = vmatmul.bf16.gmra.mxu0 %v607
        %v685 = vpop.f32.mrf.mxu0
        %v686 = vadd.f32 %v555, %v685
        %v687 = vpop.f32.mrf.mxu0
        %v688 = vadd.f32 %v559, %v687
        %689 = vmatmul.bf16.gmra.mxu0 %v610
        %v690 = vpop.f32.mrf.mxu0
        %v691 = vadd.f32 %v563, %v690
        %v692 = vpop.f32.mrf.mxu0
        %v693 = vadd.f32 %v567, %v692
        %694 = vmatmul.bf16.gmra.mxu0 %v613
        %v695 = vpop.f32.mrf.mxu0
        %v696 = vadd.f32 %v571, %v695
        %v697 = vpop.f32.mrf.mxu0
        %v698 = vadd.f32 %v575, %v697
        %699 = vmatmul.bf16.gmra.mxu0 %v616
        %v700 = vpop.f32.mrf.mxu0
        %v701 = vadd.f32 %v579, %v700
        %v702 = vpop.f32.mrf.mxu0
        %v703 = vadd.f32 %v583, %v702
        %704 = vdwg.mxu0
        %705 = vmatpush.bf16.msra.mxu0 0
        %706 = vmatpush.bf16.msra.mxu0 0
        %707 = vmatpush.bf16.msra.mxu0 0
        %708 = vmatpush.bf16.msra.mxu0 0
        %709 = vmatpush.bf16.msra.mxu0 %v552
        %710 = vmatpush.bf16.msra.mxu0 %v548
        %711 = vmatpush.bf16.msra.mxu0 %v544
        %712 = vmatpush.bf16.msra.mxu0 %v540
        %713 = vmatmul.bf16.gmra.mxu0 %v607
        %v714 = vpop.f32.mrf.mxu0
        %v715 = vadd.f32 %v555, %v714
        %v716 = vpop.f32.mrf.mxu0
        %v717 = vadd.f32 %v559, %v716
        %718 = vmatmul.bf16.gmra.mxu0 %v610
        %v719 = vpop.f32.mrf.mxu0
        %v720 = vadd.f32 %v563, %v719
        %v721 = vpop.f32.mrf.mxu0
        %v722 = vadd.f32 %v567, %v721
        %723 = vmatmul.bf16.gmra.mxu0 %v613
        %v724 = vpop.f32.mrf.mxu0
        %v725 = vadd.f32 %v571, %v724
        %v726 = vpop.f32.mrf.mxu0
        %v727 = vadd.f32 %v575, %v726
        %728 = vmatmul.bf16.gmra.mxu0 %v616
        %v729 = vpop.f32.mrf.mxu0
        %v730 = vadd.f32 %v579, %v729
        %v731 = vpop.f32.mrf.mxu0
        %v732 = vadd.f32 %v583, %v731
        %733 = vdwg.mxu0
        %v734 = vtanh.pop %v628
        %v735 = vtanh.pop %v657
        %v736 = vtanh.pop %v686
        %v737 = vtanh.pop %v715
        %v738 = vtanh.pop %v630
        %v739 = vtanh.pop %v659
        %v740 = vtanh.pop %v688
        %v741 = vtanh.pop %v717
        %v742 = vtanh.pop %v633
        %v743 = vtanh.pop %v662
        %v744 = vtanh.pop %v691
        %v745 = vtanh.pop %v720
        %v746 = vtanh.pop %v635
        %v747 = vtanh.pop %v664
        %v748 = vtanh.pop %v693
        %v749 = vtanh.pop %v722
        %v750 = vtanh.pop %v638
        %v751 = vtanh.pop %v667
        %v752 = vtanh.pop %v696
        %v753 = vtanh.pop %v725
        %v754 = vtanh.pop %v640
        %v755 = vtanh.pop %v669
        %v756 = vtanh.pop %v698
        %v757 = vtanh.pop %v727
        %v758 = vtanh.pop %v643
        %v759 = vtanh.pop %v672
        %v760 = vtanh.pop %v701
        %v761 = vtanh.pop %v730
        %v762 = vtanh.pop %v645
        %v763 = vtanh.pop %v674
        %v764 = vtanh.pop %v703
        %v765 = vtanh.pop %v732
        %s766 = scalar_lea.vmem [#allocation2], 32
        %v767 = vld [vmem:[%s766] sm:$0xf]
        %v768 = vld [vmem:[%s766 + $0x4] sm:$0xf]
        %v769 = vld [vmem:[%s766 + $0x8] sm:$0xf]
        %v770 = vld [vmem:[%s766 + $0xc] sm:$0xf]
        %v771 = vld [vmem:[%s766 + $0x10] sm:$0xf]
        %v772 = vld [vmem:[%s766 + $0x14] sm:$0xf]
        %v773 = vld [vmem:[%s766 + $0x18] sm:$0xf]
        %v774 = vld [vmem:[%s766 + $0x1c] sm:$0xf]
        %v775 = vpack.c.bf16 %v738, %v734
        %v776 = vpack.c.bf16 %v739, %v735
        %v777 = vpack.c.bf16 %v740, %v736
        %v778 = vpack.c.bf16 %v741, %v737
        %v779 = vpack.c.bf16 %v746, %v742
        %v780 = vpack.c.bf16 %v747, %v743
        %v781 = vpack.c.bf16 %v748, %v744
        %v782 = vpack.c.bf16 %v749, %v745
        %v783 = vpack.c.bf16 %v754, %v750
        %v784 = vpack.c.bf16 %v755, %v751
        %v785 = vpack.c.bf16 %v756, %v752
        %v786 = vpack.c.bf16 %v757, %v753
        %v787 = vpack.c.bf16 %v762, %v758
        %v788 = vpack.c.bf16 %v763, %v759
        %v789 = vpack.c.bf16 %v764, %v760
        %v790 = vpack.c.bf16 %v765, %v761
        %791 = vset.pattern.permute.xlu0 4
        %792 = vperm.xlu0 %791, %v231
        %v793 = vpop.permute.xlu0 %792
        %795 = vset.pattern.permute.xlu0 4
        %796 = vperm.xlu0 %795, %v232
        %v797 = vpop.permute.xlu0 %796
        %799 = vset.pattern.permute.xlu0 4
        %800 = vperm.xlu0 %799, %v233
        %v801 = vpop.permute.xlu0 %800
        %803 = vset.pattern.permute.xlu0 4
        %804 = vperm.xlu0 %803, %v234
        %v805 = vpop.permute.xlu0 %804
        %807 = vset.pattern.permute.xlu0 4
        %808 = vperm.xlu0 %807, %v235
        %v809 = vpop.permute.xlu0 %808
        %811 = vset.pattern.permute.xlu0 4
        %812 = vperm.xlu0 %811, %v236
        %v813 = vpop.permute.xlu0 %812
        %815 = vset.pattern.permute.xlu0 4
        %816 = vperm.xlu0 %815, %v237
        %v817 = vpop.permute.xlu0 %816
        %819 = vset.pattern.permute.xlu0 4
        %820 = vperm.xlu0 %819, %v238
        %v821 = vpop.permute.xlu0 %820
        %v831 = vunpack.c.l.b16 %v767
        %v832 = vunpack.c.l.b16 %v768
        %v833 = vunpack.c.l.b16 %v769
        %v834 = vunpack.c.l.b16 %v770
        %v835 = vunpack.c.l.b16 %v771
        %v836 = vunpack.c.l.b16 %v772
        %v837 = vunpack.c.l.b16 %v773
        %v838 = vunpack.c.l.b16 %v774
        %v839 = vpack.c.b16 %v832, %v831
        %v840 = vpack.c.b16 %v834, %v833
        %v841 = vpack.c.b16 %v836, %v835
        %v842 = vpack.c.b16 %v838, %v837
        %v844 = vsel %vm605, %v839, 0
        %v847 = vsel %vm605, %v840, 0
        %v850 = vsel %vm605, %v841, 0
        %v853 = vsel %vm605, %v842, 0
        %855 = vmatpush.bf16.msra.mxu0 0
        %856 = vmatpush.bf16.msra.mxu0 0
        %857 = vmatpush.bf16.msra.mxu0 0
        %858 = vmatpush.bf16.msra.mxu0 0
        %859 = vmatpush.bf16.msra.mxu0 %v787
        %860 = vmatpush.bf16.msra.mxu0 %v783
        %861 = vmatpush.bf16.msra.mxu0 %v779
        %862 = vmatpush.bf16.msra.mxu0 %v775
        %863 = vmatmul.bf16.gmra.mxu0 %v844
        %v864 = vpop.f32.mrf.mxu0
        %v865 = vadd.f32 %v793, %v864
        %v866 = vpop.f32.mrf.mxu0
        %v867 = vadd.f32 %v797, %v866
        %868 = vmatmul.bf16.gmra.mxu0 %v847
        %v869 = vpop.f32.mrf.mxu0
        %v870 = vadd.f32 %v801, %v869
        %v871 = vpop.f32.mrf.mxu0
        %v872 = vadd.f32 %v805, %v871
        %873 = vmatmul.bf16.gmra.mxu0 %v850
        %v874 = vpop.f32.mrf.mxu0
        %v875 = vadd.f32 %v809, %v874
        %v876 = vpop.f32.mrf.mxu0
        %v877 = vadd.f32 %v813, %v876
        %878 = vmatmul.bf16.gmra.mxu0 %v853
        %v879 = vpop.f32.mrf.mxu0
        %v880 = vadd.f32 %v817, %v879
        %v881 = vpop.f32.mrf.mxu0
        %v882 = vadd.f32 %v821, %v881
        %883 = vdwg.mxu0
        %884 = vmatpush.bf16.msra.mxu0 0
        %885 = vmatpush.bf16.msra.mxu0 0
        %886 = vmatpush.bf16.msra.mxu0 0
        %887 = vmatpush.bf16.msra.mxu0 0
        %888 = vmatpush.bf16.msra.mxu0 %v788
        %889 = vmatpush.bf16.msra.mxu0 %v784
        %890 = vmatpush.bf16.msra.mxu0 %v780
        %891 = vmatpush.bf16.msra.mxu0 %v776
        %892 = vmatmul.bf16.gmra.mxu0 %v844
        %v893 = vpop.f32.mrf.mxu0
        %v894 = vadd.f32 %v793, %v893
        %v895 = vpop.f32.mrf.mxu0
        %v896 = vadd.f32 %v797, %v895
        %897 = vmatmul.bf16.gmra.mxu0 %v847
        %v898 = vpop.f32.mrf.mxu0
        %v899 = vadd.f32 %v801, %v898
        %v900 = vpop.f32.mrf.mxu0
        %v901 = vadd.f32 %v805, %v900
        %902 = vmatmul.bf16.gmra.mxu0 %v850
        %v903 = vpop.f32.mrf.mxu0
        %v904 = vadd.f32 %v809, %v903
        %v905 = vpop.f32.mrf.mxu0
        %v906 = vadd.f32 %v813, %v905
        %907 = vmatmul.bf16.gmra.mxu0 %v853
        %v908 = vpop.f32.mrf.mxu0
        %v909 = vadd.f32 %v817, %v908
        %v910 = vpop.f32.mrf.mxu0
        %v911 = vadd.f32 %v821, %v910
        %912 = vdwg.mxu0
        %913 = vmatpush.bf16.msra.mxu0 0
        %914 = vmatpush.bf16.msra.mxu0 0
        %915 = vmatpush.bf16.msra.mxu0 0
        %916 = vmatpush.bf16.msra.mxu0 0
        %917 = vmatpush.bf16.msra.mxu0 %v789
        %918 = vmatpush.bf16.msra.mxu0 %v785
        %919 = vmatpush.bf16.msra.mxu0 %v781
        %920 = vmatpush.bf16.msra.mxu0 %v777
        %921 = vmatmul.bf16.gmra.mxu0 %v844
        %v922 = vpop.f32.mrf.mxu0
        %v923 = vadd.f32 %v793, %v922
        %v924 = vpop.f32.mrf.mxu0
        %v925 = vadd.f32 %v797, %v924
        %926 = vmatmul.bf16.gmra.mxu0 %v847
        %v927 = vpop.f32.mrf.mxu0
        %v928 = vadd.f32 %v801, %v927
        %v929 = vpop.f32.mrf.mxu0
        %v930 = vadd.f32 %v805, %v929
        %931 = vmatmul.bf16.gmra.mxu0 %v850
        %v932 = vpop.f32.mrf.mxu0
        %v933 = vadd.f32 %v809, %v932
        %v934 = vpop.f32.mrf.mxu0
        %v935 = vadd.f32 %v813, %v934
        %936 = vmatmul.bf16.gmra.mxu0 %v853
        %v937 = vpop.f32.mrf.mxu0
        %v938 = vadd.f32 %v817, %v937
        %v939 = vpop.f32.mrf.mxu0
        %v940 = vadd.f32 %v821, %v939
        %941 = vdwg.mxu0
        %942 = vmatpush.bf16.msra.mxu0 0
        %943 = vmatpush.bf16.msra.mxu0 0
        %944 = vmatpush.bf16.msra.mxu0 0
        %945 = vmatpush.bf16.msra.mxu0 0
        %946 = vmatpush.bf16.msra.mxu0 %v790
        %947 = vmatpush.bf16.msra.mxu0 %v786
        %948 = vmatpush.bf16.msra.mxu0 %v782
        %949 = vmatpush.bf16.msra.mxu0 %v778
        %950 = vmatmul.bf16.gmra.mxu0 %v844
        %v951 = vpop.f32.mrf.mxu0
        %v952 = vadd.f32 %v793, %v951
        %v953 = vpop.f32.mrf.mxu0
        %v954 = vadd.f32 %v797, %v953
        %955 = vmatmul.bf16.gmra.mxu0 %v847
        %v956 = vpop.f32.mrf.mxu0
        %v957 = vadd.f32 %v801, %v956
        %v958 = vpop.f32.mrf.mxu0
        %v959 = vadd.f32 %v805, %v958
        %960 = vmatmul.bf16.gmra.mxu0 %v850
        %v961 = vpop.f32.mrf.mxu0
        %v962 = vadd.f32 %v809, %v961
        %v963 = vpop.f32.mrf.mxu0
        %v964 = vadd.f32 %v813, %v963
        %965 = vmatmul.bf16.gmra.mxu0 %v853
        %v966 = vpop.f32.mrf.mxu0
        %v967 = vadd.f32 %v817, %v966
        %v968 = vpop.f32.mrf.mxu0
        %v969 = vadd.f32 %v821, %v968
        %970 = vdwg.mxu0
        %v971 = vtanh.pop %v865
        %v972 = vtanh.pop %v894
        %v973 = vtanh.pop %v923
        %v974 = vtanh.pop %v952
        %v975 = vtanh.pop %v867
        %v976 = vtanh.pop %v896
        %v977 = vtanh.pop %v925
        %v978 = vtanh.pop %v954
        %v979 = vtanh.pop %v870
        %v980 = vtanh.pop %v899
        %v981 = vtanh.pop %v928
        %v982 = vtanh.pop %v957
        %v983 = vtanh.pop %v872
        %v984 = vtanh.pop %v901
        %v985 = vtanh.pop %v930
        %v986 = vtanh.pop %v959
        %v987 = vtanh.pop %v875
        %v988 = vtanh.pop %v904
        %v989 = vtanh.pop %v933
        %v990 = vtanh.pop %v962
        %v991 = vtanh.pop %v877
        %v992 = vtanh.pop %v906
        %v993 = vtanh.pop %v935
        %v994 = vtanh.pop %v964
        %v995 = vtanh.pop %v880
        %v996 = vtanh.pop %v909
        %v997 = vtanh.pop %v938
        %v998 = vtanh.pop %v967
        %v999 = vtanh.pop %v882
        %v1000 = vtanh.pop %v911
        %v1001 = vtanh.pop %v940
        %v1002 = vtanh.pop %v969
        %s1003 = scalar_lea.vmem [#allocation2], 64
        %v1004 = vld [vmem:[%s1003] sm:$0xf]
        %v1005 = vld [vmem:[%s1003 + $0x4] sm:$0xf]
        %v1006 = vld [vmem:[%s1003 + $0x8] sm:$0xf]
        %v1007 = vld [vmem:[%s1003 + $0xc] sm:$0xf]
        %v1008 = vld [vmem:[%s1003 + $0x10] sm:$0xf]
        %v1009 = vld [vmem:[%s1003 + $0x14] sm:$0xf]
        %v1010 = vld [vmem:[%s1003 + $0x18] sm:$0xf]
        %v1011 = vld [vmem:[%s1003 + $0x1c] sm:$0xf]
        %v1012 = vpack.c.bf16 %v975, %v971
        %v1013 = vpack.c.bf16 %v976, %v972
        %v1014 = vpack.c.bf16 %v977, %v973
        %v1015 = vpack.c.bf16 %v978, %v974
        %v1016 = vpack.c.bf16 %v983, %v979
        %v1017 = vpack.c.bf16 %v984, %v980
        %v1018 = vpack.c.bf16 %v985, %v981
        %v1019 = vpack.c.bf16 %v986, %v982
        %v1020 = vpack.c.bf16 %v991, %v987
        %v1021 = vpack.c.bf16 %v992, %v988
        %v1022 = vpack.c.bf16 %v993, %v989
        %v1023 = vpack.c.bf16 %v994, %v990
        %v1024 = vpack.c.bf16 %v999, %v995
        %v1025 = vpack.c.bf16 %v1000, %v996
        %v1026 = vpack.c.bf16 %v1001, %v997
        %v1027 = vpack.c.bf16 %v1002, %v998
        %1028 = vset.pattern.permute.xlu0 5
        %1029 = vperm.xlu0 %1028, %v231
        %v1030 = vpop.permute.xlu0 %1029
        %1032 = vset.pattern.permute.xlu0 5
        %1033 = vperm.xlu0 %1032, %v232
        %v1034 = vpop.permute.xlu0 %1033
        %1036 = vset.pattern.permute.xlu0 5
        %1037 = vperm.xlu0 %1036, %v233
        %v1038 = vpop.permute.xlu0 %1037
        %1040 = vset.pattern.permute.xlu0 5
        %1041 = vperm.xlu0 %1040, %v234
        %v1042 = vpop.permute.xlu0 %1041
        %1044 = vset.pattern.permute.xlu0 5
        %1045 = vperm.xlu0 %1044, %v235
        %v1046 = vpop.permute.xlu0 %1045
        %1048 = vset.pattern.permute.xlu0 5
        %1049 = vperm.xlu0 %1048, %v236
        %v1050 = vpop.permute.xlu0 %1049
        %1052 = vset.pattern.permute.xlu0 5
        %1053 = vperm.xlu0 %1052, %v237
        %v1054 = vpop.permute.xlu0 %1053
        %1056 = vset.pattern.permute.xlu0 5
        %1057 = vperm.xlu0 %1056, %v238
        %v1058 = vpop.permute.xlu0 %1057
        %v1068 = vunpack.c.l.b16 %v1004
        %v1069 = vunpack.c.l.b16 %v1005
        %v1070 = vunpack.c.l.b16 %v1006
        %v1071 = vunpack.c.l.b16 %v1007
        %v1072 = vunpack.c.l.b16 %v1008
        %v1073 = vunpack.c.l.b16 %v1009
        %v1074 = vunpack.c.l.b16 %v1010
        %v1075 = vunpack.c.l.b16 %v1011
        %v1076 = vpack.c.b16 %v1069, %v1068
        %v1077 = vpack.c.b16 %v1071, %v1070
        %v1078 = vpack.c.b16 %v1073, %v1072
        %v1079 = vpack.c.b16 %v1075, %v1074
        %v1081 = vsel %vm605, %v1076, 0
        %v1084 = vsel %vm605, %v1077, 0
        %v1087 = vsel %vm605, %v1078, 0
        %v1090 = vsel %vm605, %v1079, 0
        %1092 = vmatpush.bf16.msra.mxu0 0
        %1093 = vmatpush.bf16.msra.mxu0 0
        %1094 = vmatpush.bf16.msra.mxu0 0
        %1095 = vmatpush.bf16.msra.mxu0 0
        %1096 = vmatpush.bf16.msra.mxu0 %v1024
        %1097 = vmatpush.bf16.msra.mxu0 %v1020
        %1098 = vmatpush.bf16.msra.mxu0 %v1016
        %1099 = vmatpush.bf16.msra.mxu0 %v1012
        %1100 = vmatmul.bf16.gmra.mxu0 %v1081
        %v1101 = vpop.f32.mrf.mxu0
        %v1102 = vadd.f32 %v1030, %v1101
        %v1103 = vpop.f32.mrf.mxu0
        %v1104 = vadd.f32 %v1034, %v1103
        %1105 = vmatmul.bf16.gmra.mxu0 %v1084
        %v1106 = vpop.f32.mrf.mxu0
        %v1107 = vadd.f32 %v1038, %v1106
        %v1108 = vpop.f32.mrf.mxu0
        %v1109 = vadd.f32 %v1042, %v1108
        %1110 = vmatmul.bf16.gmra.mxu0 %v1087
        %v1111 = vpop.f32.mrf.mxu0
        %v1112 = vadd.f32 %v1046, %v1111
        %v1113 = vpop.f32.mrf.mxu0
        %v1114 = vadd.f32 %v1050, %v1113
        %1115 = vmatmul.bf16.gmra.mxu0 %v1090
        %v1116 = vpop.f32.mrf.mxu0
        %v1117 = vadd.f32 %v1054, %v1116
        %v1118 = vpop.f32.mrf.mxu0
        %v1119 = vadd.f32 %v1058, %v1118
        %1120 = vdwg.mxu0
        %1121 = vmatpush.bf16.msra.mxu0 0
        %1122 = vmatpush.bf16.msra.mxu0 0
        %1123 = vmatpush.bf16.msra.mxu0 0
        %1124 = vmatpush.bf16.msra.mxu0 0
        %1125 = vmatpush.bf16.msra.mxu0 %v1025
        %1126 = vmatpush.bf16.msra.mxu0 %v1021
        %1127 = vmatpush.bf16.msra.mxu0 %v1017
        %1128 = vmatpush.bf16.msra.mxu0 %v1013
        %1129 = vmatmul.bf16.gmra.mxu0 %v1081
        %v1130 = vpop.f32.mrf.mxu0
        %v1131 = vadd.f32 %v1030, %v1130
        %v1132 = vpop.f32.mrf.mxu0
        %v1133 = vadd.f32 %v1034, %v1132
        %1134 = vmatmul.bf16.gmra.mxu0 %v1084
        %v1135 = vpop.f32.mrf.mxu0
        %v1136 = vadd.f32 %v1038, %v1135
        %v1137 = vpop.f32.mrf.mxu0
        %v1138 = vadd.f32 %v1042, %v1137
        %1139 = vmatmul.bf16.gmra.mxu0 %v1087
        %v1140 = vpop.f32.mrf.mxu0
        %v1141 = vadd.f32 %v1046, %v1140
        %v1142 = vpop.f32.mrf.mxu0
        %v1143 = vadd.f32 %v1050, %v1142
        %1144 = vmatmul.bf16.gmra.mxu0 %v1090
        %v1145 = vpop.f32.mrf.mxu0
        %v1146 = vadd.f32 %v1054, %v1145
        %v1147 = vpop.f32.mrf.mxu0
        %v1148 = vadd.f32 %v1058, %v1147
        %1149 = vdwg.mxu0
        %1150 = vmatpush.bf16.msra.mxu0 0
        %1151 = vmatpush.bf16.msra.mxu0 0
        %1152 = vmatpush.bf16.msra.mxu0 0
        %1153 = vmatpush.bf16.msra.mxu0 0
        %1154 = vmatpush.bf16.msra.mxu0 %v1026
        %1155 = vmatpush.bf16.msra.mxu0 %v1022
        %1156 = vmatpush.bf16.msra.mxu0 %v1018
        %1157 = vmatpush.bf16.msra.mxu0 %v1014
        %1158 = vmatmul.bf16.gmra.mxu0 %v1081
        %v1159 = vpop.f32.mrf.mxu0
        %v1160 = vadd.f32 %v1030, %v1159
        %v1161 = vpop.f32.mrf.mxu0
        %v1162 = vadd.f32 %v1034, %v1161
        %1163 = vmatmul.bf16.gmra.mxu0 %v1084
        %v1164 = vpop.f32.mrf.mxu0
        %v1165 = vadd.f32 %v1038, %v1164
        %v1166 = vpop.f32.mrf.mxu0
        %v1167 = vadd.f32 %v1042, %v1166
        %1168 = vmatmul.bf16.gmra.mxu0 %v1087
        %v1169 = vpop.f32.mrf.mxu0
        %v1170 = vadd.f32 %v1046, %v1169
        %v1171 = vpop.f32.mrf.mxu0
        %v1172 = vadd.f32 %v1050, %v1171
        %1173 = vmatmul.bf16.gmra.mxu0 %v1090
        %v1174 = vpop.f32.mrf.mxu0
        %v1175 = vadd.f32 %v1054, %v1174
        %v1176 = vpop.f32.mrf.mxu0
        %v1177 = vadd.f32 %v1058, %v1176
        %1178 = vdwg.mxu0
        %1179 = vmatpush.bf16.msra.mxu0 0
        %1180 = vmatpush.bf16.msra.mxu0 0
        %1181 = vmatpush.bf16.msra.mxu0 0
        %1182 = vmatpush.bf16.msra.mxu0 0
        %1183 = vmatpush.bf16.msra.mxu0 %v1027
        %1184 = vmatpush.bf16.msra.mxu0 %v1023
        %1185 = vmatpush.bf16.msra.mxu0 %v1019
        %1186 = vmatpush.bf16.msra.mxu0 %v1015
        %1187 = vmatmul.bf16.gmra.mxu0 %v1081
        %v1188 = vpop.f32.mrf.mxu0
        %v1189 = vadd.f32 %v1030, %v1188
        %v1190 = vpop.f32.mrf.mxu0
        %v1191 = vadd.f32 %v1034, %v1190
        %1192 = vmatmul.bf16.gmra.mxu0 %v1084
        %v1193 = vpop.f32.mrf.mxu0
        %v1194 = vadd.f32 %v1038, %v1193
        %v1195 = vpop.f32.mrf.mxu0
        %v1196 = vadd.f32 %v1042, %v1195
        %1197 = vmatmul.bf16.gmra.mxu0 %v1087
        %v1198 = vpop.f32.mrf.mxu0
        %v1199 = vadd.f32 %v1046, %v1198
        %v1200 = vpop.f32.mrf.mxu0
        %v1201 = vadd.f32 %v1050, %v1200
        %1202 = vmatmul.bf16.gmra.mxu0 %v1090
        %v1203 = vpop.f32.mrf.mxu0
        %v1204 = vadd.f32 %v1054, %v1203
        %v1205 = vpop.f32.mrf.mxu0
        %v1206 = vadd.f32 %v1058, %v1205
        %1207 = vdwg.mxu0
        %v1208 = vtanh.pop %v1102
        %v1209 = vtanh.pop %v1131
        %v1210 = vtanh.pop %v1160
        %v1211 = vtanh.pop %v1189
        %v1212 = vtanh.pop %v1104
        %v1213 = vtanh.pop %v1133
        %v1214 = vtanh.pop %v1162
        %v1215 = vtanh.pop %v1191
        %v1216 = vtanh.pop %v1107
        %v1217 = vtanh.pop %v1136
        %v1218 = vtanh.pop %v1165
        %v1219 = vtanh.pop %v1194
        %v1220 = vtanh.pop %v1109
        %v1221 = vtanh.pop %v1138
        %v1222 = vtanh.pop %v1167
        %v1223 = vtanh.pop %v1196
        %v1224 = vtanh.pop %v1112
        %v1225 = vtanh.pop %v1141
        %v1226 = vtanh.pop %v1170
        %v1227 = vtanh.pop %v1199
        %v1228 = vtanh.pop %v1114
        %v1229 = vtanh.pop %v1143
        %v1230 = vtanh.pop %v1172
        %v1231 = vtanh.pop %v1201
        %v1232 = vtanh.pop %v1117
        %v1233 = vtanh.pop %v1146
        %v1234 = vtanh.pop %v1175
        %v1235 = vtanh.pop %v1204
        %v1236 = vtanh.pop %v1119
        %v1237 = vtanh.pop %v1148
        %v1238 = vtanh.pop %v1177
        %v1239 = vtanh.pop %v1206
        %1240 = vset.pattern.permute.xlu0 6
        %1241 = vperm.xlu0 %1240, %v231
        %v1242 = vpop.permute.xlu0 %1241
        %1244 = vset.pattern.permute.xlu0 6
        %1245 = vperm.xlu0 %1244, %v232
        %v1246 = vpop.permute.xlu0 %1245
        %1248 = vset.pattern.permute.xlu0 6
        %1249 = vperm.xlu0 %1248, %v233
        %v1250 = vpop.permute.xlu0 %1249
        %1252 = vset.pattern.permute.xlu0 6
        %1253 = vperm.xlu0 %1252, %v234
        %v1254 = vpop.permute.xlu0 %1253
        %1256 = vset.pattern.permute.xlu0 6
        %1257 = vperm.xlu0 %1256, %v235
        %v1258 = vpop.permute.xlu0 %1257
        %1260 = vset.pattern.permute.xlu0 6
        %1261 = vperm.xlu0 %1260, %v236
        %v1262 = vpop.permute.xlu0 %1261
        %1264 = vset.pattern.permute.xlu0 6
        %1265 = vperm.xlu0 %1264, %v237
        %v1266 = vpop.permute.xlu0 %1265
        %1268 = vset.pattern.permute.xlu0 6
        %1269 = vperm.xlu0 %1268, %v238
        %v1270 = vpop.permute.xlu0 %1269
        %v1272 = vmul.f32 %v1208, %v1242
        %v1273 = vmul.f32 %v1209, %v1242
        %v1274 = vmul.f32 %v1210, %v1242
        %v1275 = vmul.f32 %v1211, %v1242
        %v1276 = vmul.f32 %v1212, %v1246
        %v1277 = vmul.f32 %v1213, %v1246
        %v1278 = vmul.f32 %v1214, %v1246
        %v1279 = vmul.f32 %v1215, %v1246
        %v1280 = vmul.f32 %v1216, %v1250
        %v1281 = vmul.f32 %v1217, %v1250
        %v1282 = vmul.f32 %v1218, %v1250
        %v1283 = vmul.f32 %v1219, %v1250
        %v1284 = vmul.f32 %v1220, %v1254
        %v1285 = vmul.f32 %v1221, %v1254
        %v1286 = vmul.f32 %v1222, %v1254
        %v1287 = vmul.f32 %v1223, %v1254
        %v1288 = vmul.f32 %v1224, %v1258
        %v1289 = vmul.f32 %v1225, %v1258
        %v1290 = vmul.f32 %v1226, %v1258
        %v1291 = vmul.f32 %v1227, %v1258
        %v1292 = vmul.f32 %v1228, %v1262
        %v1293 = vmul.f32 %v1229, %v1262
        %v1294 = vmul.f32 %v1230, %v1262
        %v1295 = vmul.f32 %v1231, %v1262
        %v1296 = vmul.f32 %v1232, %v1266
        %v1297 = vmul.f32 %v1233, %v1266
        %v1298 = vmul.f32 %v1234, %v1266
        %v1299 = vmul.f32 %v1235, %v1266
        %v1300 = vmul.f32 %v1236, %v1270
        %v1301 = vmul.f32 %v1237, %v1270
        %v1302 = vmul.f32 %v1238, %v1270
        %v1303 = vmul.f32 %v1239, %v1270
        %v1304 = vadd.f32 %v1272, %v1276
        %v1305 = vadd.f32 %v1304, %v1280
        %v1306 = vadd.f32 %v1305, %v1284
        %v1307 = vrot.slane %v1306, 4
        %v1308 = vadd.f32 %v1306, %v1307
        %v1309 = vrot.slane %v1308, 2
        %v1310 = vadd.f32 %v1308, %v1309
        %v1311 = vrot.slane %v1310, 1
        %v1312 = vadd.f32 %v1310, %v1311
        %v1313 = vadd.f32 %v1273, %v1277
        %v1314 = vadd.f32 %v1313, %v1281
        %v1315 = vadd.f32 %v1314, %v1285
        %v1316 = vrot.slane %v1315, 4
        %v1317 = vadd.f32 %v1315, %v1316
        %v1318 = vrot.slane %v1317, 2
        %v1319 = vadd.f32 %v1317, %v1318
        %v1320 = vrot.slane %v1319, 1
        %v1321 = vadd.f32 %v1319, %v1320
        %v1322 = vadd.f32 %v1274, %v1278
        %v1323 = vadd.f32 %v1322, %v1282
        %v1324 = vadd.f32 %v1323, %v1286
        %v1325 = vrot.slane %v1324, 4
        %v1326 = vadd.f32 %v1324, %v1325
        %v1327 = vrot.slane %v1326, 2
        %v1328 = vadd.f32 %v1326, %v1327
        %v1329 = vrot.slane %v1328, 1
        %v1330 = vadd.f32 %v1328, %v1329
        %v1331 = vadd.f32 %v1275, %v1279
        %v1332 = vadd.f32 %v1331, %v1283
        %v1333 = vadd.f32 %v1332, %v1287
        %v1334 = vrot.slane %v1333, 4
        %v1335 = vadd.f32 %v1333, %v1334
        %v1336 = vrot.slane %v1335, 2
        %v1337 = vadd.f32 %v1335, %v1336
        %v1338 = vrot.slane %v1337, 1
        %v1339 = vadd.f32 %v1337, %v1338
        %1340 = vset.pattern.permute.xlu0 7
        %1341 = vperm.xlu0 %1340, %v231
        %v1342 = vpop.permute.xlu0 %1341
        %v1344 = vadd.f32 %v1312, %v1342
        %v1345 = vadd.f32 %v1321, %v1342
        %v1346 = vadd.f32 %v1330, %v1342
        %v1347 = vadd.f32 %v1339, %v1342
        %v1348 = vadd.f32 %v1288, %v1292
        %v1349 = vadd.f32 %v1348, %v1296
        %v1350 = vadd.f32 %v1349, %v1300
        %v1351 = vrot.slane %v1350, 4
        %v1352 = vadd.f32 %v1350, %v1351
        %v1353 = vrot.slane %v1352, 2
        %v1354 = vadd.f32 %v1352, %v1353
        %v1355 = vrot.slane %v1354, 1
        %v1356 = vadd.f32 %v1354, %v1355
        %v1357 = vadd.f32 %v1289, %v1293
        %v1358 = vadd.f32 %v1357, %v1297
        %v1359 = vadd.f32 %v1358, %v1301
        %v1360 = vrot.slane %v1359, 4
        %v1361 = vadd.f32 %v1359, %v1360
        %v1362 = vrot.slane %v1361, 2
        %v1363 = vadd.f32 %v1361, %v1362
        %v1364 = vrot.slane %v1363, 1
        %v1365 = vadd.f32 %v1363, %v1364
        %v1366 = vadd.f32 %v1290, %v1294
        %v1367 = vadd.f32 %v1366, %v1298
        %v1368 = vadd.f32 %v1367, %v1302
        %v1369 = vrot.slane %v1368, 4
        %v1370 = vadd.f32 %v1368, %v1369
        %v1371 = vrot.slane %v1370, 2
        %v1372 = vadd.f32 %v1370, %v1371
        %v1373 = vrot.slane %v1372, 1
        %v1374 = vadd.f32 %v1372, %v1373
        %v1375 = vadd.f32 %v1291, %v1295
        %v1376 = vadd.f32 %v1375, %v1299
        %v1377 = vadd.f32 %v1376, %v1303
        %v1378 = vrot.slane %v1377, 4
        %v1379 = vadd.f32 %v1377, %v1378
        %v1380 = vrot.slane %v1379, 2
        %v1381 = vadd.f32 %v1379, %v1380
        %v1382 = vrot.slane %v1381, 1
        %v1383 = vadd.f32 %v1381, %v1382
        %v1384 = vadd.f32 %v1356, %v1342
        %v1385 = vadd.f32 %v1365, %v1342
        %v1386 = vadd.f32 %v1374, %v1342
        %v1387 = vadd.f32 %v1383, %v1342
        %v1388 = vmul.f32 %v1384, 1.442695
        %v1389 = vpow.pop %v1388
        %v1390 = vmul.f32 %v1385, 1.442695
        %v1391 = vpow.pop %v1390
        %v1392 = vmul.f32 %v1386, 1.442695
        %v1393 = vpow.pop %v1392
        %v1394 = vmul.f32 %v1387, 1.442695
        %v1395 = vpow.pop %v1394
        %v1400 = vrot.slane %v1391, 4
        %v1401 = vrot.slane %v1395, 4
        %vm1402 = vcmask 1043456
        %v1403 = vsel %vm1402, %v1389, %v1400
        %v1404 = vsel %vm1402, %v1393, %v1401
        %v1407 = vmul.f32 %v229, %v1403
        %v1408 = vmul.f32 %v230, %v1404
        %v1411 = vperm.slane %v1407, 1
        %v1412 = vperm.slane %v1407, 5
        %v1413 = vperm.slane %v1408, 1
        %v1414 = vperm.slane %v1408, 5
        %v1419 = vadd.f32 %v1344, %v1411
        %v1420 = vadd.f32 %v1345, %v1412
        %v1421 = vadd.f32 %v1346, %v1413
        %v1422 = vadd.f32 %v1347, %v1414
        %s1423 = scalar_lea.vmem %s1, 64
        %v1424 = vld [vmem:[%s1423] sm:$0xff]
        %v1425 = vld [vmem:[%s1423 + $0x8] sm:$0xff]
        %v1426 = vld [vmem:[%s1423 + $0x10] sm:$0xff]
        %v1427 = vld [vmem:[%s1423 + $0x18] sm:$0xff]
        %v1428 = vld [vmem:[%s1423 + $0x20] sm:$0xff]
        %v1429 = vld [vmem:[%s1423 + $0x28] sm:$0xff]
        %v1430 = vld [vmem:[%s1423 + $0x30] sm:$0xff]
        %v1431 = vld [vmem:[%s1423 + $0x38] sm:$0xff]
        %1433 = vset.pattern.permute.xlu0 0
        %1434 = vperm.xlu0 %1433, %v1424
        %v1435 = vpop.permute.xlu0 %1434
        %1438 = vset.pattern.permute.xlu0 0
        %1439 = vperm.xlu0 %1438, %v1425
        %v1440 = vpop.permute.xlu0 %1439
        %1443 = vset.pattern.permute.xlu0 0
        %1444 = vperm.xlu0 %1443, %v1426
        %v1445 = vpop.permute.xlu0 %1444
        %1448 = vset.pattern.permute.xlu0 0
        %1449 = vperm.xlu0 %1448, %v1427
        %v1450 = vpop.permute.xlu0 %1449
        %1453 = vset.pattern.permute.xlu0 0
        %1454 = vperm.xlu0 %1453, %v1428
        %v1455 = vpop.permute.xlu0 %1454
        %1458 = vset.pattern.permute.xlu0 0
        %1459 = vperm.xlu0 %1458, %v1429
        %v1460 = vpop.permute.xlu0 %1459
        %1463 = vset.pattern.permute.xlu0 0
        %1464 = vperm.xlu0 %1463, %v1430
        %v1465 = vpop.permute.xlu0 %1464
        %1468 = vset.pattern.permute.xlu0 0
        %1469 = vperm.xlu0 %1468, %v1431
        %v1470 = vpop.permute.xlu0 %1469
        %v1472 = vperm.slane %v1419, 0
        %v1473 = vperm.slane %v1420, 0
        %v1474 = vperm.slane %v1421, 0
        %v1475 = vperm.slane %v1422, 0
        %v1476 = vmul.f32 %v1435, %v1472
        %v1477 = vmul.f32 %v1435, %v1473
        %v1478 = vmul.f32 %v1435, %v1474
        %v1479 = vmul.f32 %v1435, %v1475
        %v1480 = vmul.f32 %v1440, %v1472
        %v1481 = vmul.f32 %v1440, %v1473
        %v1482 = vmul.f32 %v1440, %v1474
        %v1483 = vmul.f32 %v1440, %v1475
        %v1484 = vmul.f32 %v1445, %v1472
        %v1485 = vmul.f32 %v1445, %v1473
        %v1486 = vmul.f32 %v1445, %v1474
        %v1487 = vmul.f32 %v1445, %v1475
        %v1488 = vmul.f32 %v1450, %v1472
        %v1489 = vmul.f32 %v1450, %v1473
        %v1490 = vmul.f32 %v1450, %v1474
        %v1491 = vmul.f32 %v1450, %v1475
        %v1492 = vmul.f32 %v1455, %v1472
        %v1493 = vmul.f32 %v1455, %v1473
        %v1494 = vmul.f32 %v1455, %v1474
        %v1495 = vmul.f32 %v1455, %v1475
        %v1496 = vmul.f32 %v1460, %v1472
        %v1497 = vmul.f32 %v1460, %v1473
        %v1498 = vmul.f32 %v1460, %v1474
        %v1499 = vmul.f32 %v1460, %v1475
        %v1500 = vmul.f32 %v1465, %v1472
        %v1501 = vmul.f32 %v1465, %v1473
        %v1502 = vmul.f32 %v1465, %v1474
        %v1503 = vmul.f32 %v1465, %v1475
        %v1504 = vmul.f32 %v1470, %v1472
        %v1505 = vmul.f32 %v1470, %v1473
        %v1506 = vmul.f32 %v1470, %v1474
        %v1507 = vmul.f32 %v1470, %v1475
        %1508 = vset.pattern.permute.xlu0 1
        %1509 = vperm.xlu0 %1508, %v1424
        %v1510 = vpop.permute.xlu0 %1509
        %1512 = vset.pattern.permute.xlu0 1
        %1513 = vperm.xlu0 %1512, %v1425
        %v1514 = vpop.permute.xlu0 %1513
        %1516 = vset.pattern.permute.xlu0 1
        %1517 = vperm.xlu0 %1516, %v1426
        %v1518 = vpop.permute.xlu0 %1517
        %1520 = vset.pattern.permute.xlu0 1
        %1521 = vperm.xlu0 %1520, %v1427
        %v1522 = vpop.permute.xlu0 %1521
        %1524 = vset.pattern.permute.xlu0 1
        %1525 = vperm.xlu0 %1524, %v1428
        %v1526 = vpop.permute.xlu0 %1525
        %1528 = vset.pattern.permute.xlu0 1
        %1529 = vperm.xlu0 %1528, %v1429
        %v1530 = vpop.permute.xlu0 %1529
        %1532 = vset.pattern.permute.xlu0 1
        %1533 = vperm.xlu0 %1532, %v1430
        %v1534 = vpop.permute.xlu0 %1533
        %1536 = vset.pattern.permute.xlu0 1
        %1537 = vperm.xlu0 %1536, %v1431
        %v1538 = vpop.permute.xlu0 %1537
        %v1540 = vmul.f32 %v1510, %v365
        %v1541 = vmul.f32 %v1510, %v366
        %v1542 = vmul.f32 %v1510, %v367
        %v1543 = vmul.f32 %v1510, %v368
        %v1544 = vmul.f32 %v1514, %v365
        %v1545 = vmul.f32 %v1514, %v366
        %v1546 = vmul.f32 %v1514, %v367
        %v1547 = vmul.f32 %v1514, %v368
        %v1548 = vmul.f32 %v1518, %v365
        %v1549 = vmul.f32 %v1518, %v366
        %v1550 = vmul.f32 %v1518, %v367
        %v1551 = vmul.f32 %v1518, %v368
        %v1552 = vmul.f32 %v1522, %v365
        %v1553 = vmul.f32 %v1522, %v366
        %v1554 = vmul.f32 %v1522, %v367
        %v1555 = vmul.f32 %v1522, %v368
        %v1556 = vmul.f32 %v1526, %v365
        %v1557 = vmul.f32 %v1526, %v366
        %v1558 = vmul.f32 %v1526, %v367
        %v1559 = vmul.f32 %v1526, %v368
        %v1560 = vmul.f32 %v1530, %v365
        %v1561 = vmul.f32 %v1530, %v366
        %v1562 = vmul.f32 %v1530, %v367
        %v1563 = vmul.f32 %v1530, %v368
        %v1564 = vmul.f32 %v1534, %v365
        %v1565 = vmul.f32 %v1534, %v366
        %v1566 = vmul.f32 %v1534, %v367
        %v1567 = vmul.f32 %v1534, %v368
        %v1568 = vmul.f32 %v1538, %v365
        %v1569 = vmul.f32 %v1538, %v366
        %v1570 = vmul.f32 %v1538, %v367
        %v1571 = vmul.f32 %v1538, %v368
        %v1572 = vadd.f32 %v1476, %v1540
        %v1573 = vadd.f32 %v1477, %v1541
        %v1574 = vadd.f32 %v1478, %v1542
        %v1575 = vadd.f32 %v1479, %v1543
        %v1576 = vadd.f32 %v1480, %v1544
        %v1577 = vadd.f32 %v1481, %v1545
        %v1578 = vadd.f32 %v1482, %v1546
        %v1579 = vadd.f32 %v1483, %v1547
        %v1580 = vadd.f32 %v1484, %v1548
        %v1581 = vadd.f32 %v1485, %v1549
        %v1582 = vadd.f32 %v1486, %v1550
        %v1583 = vadd.f32 %v1487, %v1551
        %v1584 = vadd.f32 %v1488, %v1552
        %v1585 = vadd.f32 %v1489, %v1553
        %v1586 = vadd.f32 %v1490, %v1554
        %v1587 = vadd.f32 %v1491, %v1555
        %v1588 = vadd.f32 %v1492, %v1556
        %v1589 = vadd.f32 %v1493, %v1557
        %v1590 = vadd.f32 %v1494, %v1558
        %v1591 = vadd.f32 %v1495, %v1559
        %v1592 = vadd.f32 %v1496, %v1560
        %v1593 = vadd.f32 %v1497, %v1561
        %v1594 = vadd.f32 %v1498, %v1562
        %v1595 = vadd.f32 %v1499, %v1563
        %v1596 = vadd.f32 %v1500, %v1564
        %v1597 = vadd.f32 %v1501, %v1565
        %v1598 = vadd.f32 %v1502, %v1566
        %v1599 = vadd.f32 %v1503, %v1567
        %v1600 = vadd.f32 %v1504, %v1568
        %v1601 = vadd.f32 %v1505, %v1569
        %v1602 = vadd.f32 %v1506, %v1570
        %v1603 = vadd.f32 %v1507, %v1571
        %1604 = vset.pattern.permute.xlu0 2
        %1605 = vperm.xlu0 %1604, %v1424
        %v1606 = vpop.permute.xlu0 %1605
        %1608 = vset.pattern.permute.xlu0 2
        %1609 = vperm.xlu0 %1608, %v1425
        %v1610 = vpop.permute.xlu0 %1609
        %1612 = vset.pattern.permute.xlu0 2
        %1613 = vperm.xlu0 %1612, %v1426
        %v1614 = vpop.permute.xlu0 %1613
        %1616 = vset.pattern.permute.xlu0 2
        %1617 = vperm.xlu0 %1616, %v1427
        %v1618 = vpop.permute.xlu0 %1617
        %1620 = vset.pattern.permute.xlu0 2
        %1621 = vperm.xlu0 %1620, %v1428
        %v1622 = vpop.permute.xlu0 %1621
        %1624 = vset.pattern.permute.xlu0 2
        %1625 = vperm.xlu0 %1624, %v1429
        %v1626 = vpop.permute.xlu0 %1625
        %1628 = vset.pattern.permute.xlu0 2
        %1629 = vperm.xlu0 %1628, %v1430
        %v1630 = vpop.permute.xlu0 %1629
        %1632 = vset.pattern.permute.xlu0 2
        %1633 = vperm.xlu0 %1632, %v1431
        %v1634 = vpop.permute.xlu0 %1633
        %v1636 = vadd.f32 %v1572, %v1606
        %v1637 = vadd.f32 %v1573, %v1606
        %v1638 = vadd.f32 %v1574, %v1606
        %v1639 = vadd.f32 %v1575, %v1606
        %v1640 = vadd.f32 %v1576, %v1610
        %v1641 = vadd.f32 %v1577, %v1610
        %v1642 = vadd.f32 %v1578, %v1610
        %v1643 = vadd.f32 %v1579, %v1610
        %v1644 = vadd.f32 %v1580, %v1614
        %v1645 = vadd.f32 %v1581, %v1614
        %v1646 = vadd.f32 %v1582, %v1614
        %v1647 = vadd.f32 %v1583, %v1614
        %v1648 = vadd.f32 %v1584, %v1618
        %v1649 = vadd.f32 %v1585, %v1618
        %v1650 = vadd.f32 %v1586, %v1618
        %v1651 = vadd.f32 %v1587, %v1618
        %v1652 = vadd.f32 %v1588, %v1622
        %v1653 = vadd.f32 %v1589, %v1622
        %v1654 = vadd.f32 %v1590, %v1622
        %v1655 = vadd.f32 %v1591, %v1622
        %v1656 = vadd.f32 %v1592, %v1626
        %v1657 = vadd.f32 %v1593, %v1626
        %v1658 = vadd.f32 %v1594, %v1626
        %v1659 = vadd.f32 %v1595, %v1626
        %v1660 = vadd.f32 %v1596, %v1630
        %v1661 = vadd.f32 %v1597, %v1630
        %v1662 = vadd.f32 %v1598, %v1630
        %v1663 = vadd.f32 %v1599, %v1630
        %v1664 = vadd.f32 %v1600, %v1634
        %v1665 = vadd.f32 %v1601, %v1634
        %v1666 = vadd.f32 %v1602, %v1634
        %v1667 = vadd.f32 %v1603, %v1634
        %v1668 = vtanh.pop %v1636
        %v1669 = vtanh.pop %v1637
        %v1670 = vtanh.pop %v1638
        %v1671 = vtanh.pop %v1639
        %v1672 = vtanh.pop %v1640
        %v1673 = vtanh.pop %v1641
        %v1674 = vtanh.pop %v1642
        %v1675 = vtanh.pop %v1643
        %v1676 = vtanh.pop %v1644
        %v1677 = vtanh.pop %v1645
        %v1678 = vtanh.pop %v1646
        %v1679 = vtanh.pop %v1647
        %v1680 = vtanh.pop %v1648
        %v1681 = vtanh.pop %v1649
        %v1682 = vtanh.pop %v1650
        %v1683 = vtanh.pop %v1651
        %v1684 = vtanh.pop %v1652
        %v1685 = vtanh.pop %v1653
        %v1686 = vtanh.pop %v1654
        %v1687 = vtanh.pop %v1655
        %v1688 = vtanh.pop %v1656
        %v1689 = vtanh.pop %v1657
        %v1690 = vtanh.pop %v1658
        %v1691 = vtanh.pop %v1659
        %v1692 = vtanh.pop %v1660
        %v1693 = vtanh.pop %v1661
        %v1694 = vtanh.pop %v1662
        %v1695 = vtanh.pop %v1663
        %v1696 = vtanh.pop %v1664
        %v1697 = vtanh.pop %v1665
        %v1698 = vtanh.pop %v1666
        %v1699 = vtanh.pop %v1667
        %s1700 = scalar_lea.vmem [#allocation2], 96
        %v1701 = vld [vmem:[%s1700] sm:$0xf]
        %v1702 = vld [vmem:[%s1700 + $0x4] sm:$0xf]
        %v1703 = vld [vmem:[%s1700 + $0x8] sm:$0xf]
        %v1704 = vld [vmem:[%s1700 + $0xc] sm:$0xf]
        %v1705 = vld [vmem:[%s1700 + $0x10] sm:$0xf]
        %v1706 = vld [vmem:[%s1700 + $0x14] sm:$0xf]
        %v1707 = vld [vmem:[%s1700 + $0x18] sm:$0xf]
        %v1708 = vld [vmem:[%s1700 + $0x1c] sm:$0xf]
        %v1709 = vpack.c.bf16 %v1672, %v1668
        %v1710 = vpack.c.bf16 %v1673, %v1669
        %v1711 = vpack.c.bf16 %v1674, %v1670
        %v1712 = vpack.c.bf16 %v1675, %v1671
        %v1713 = vpack.c.bf16 %v1680, %v1676
        %v1714 = vpack.c.bf16 %v1681, %v1677
        %v1715 = vpack.c.bf16 %v1682, %v1678
        %v1716 = vpack.c.bf16 %v1683, %v1679
        %v1717 = vpack.c.bf16 %v1688, %v1684
        %v1718 = vpack.c.bf16 %v1689, %v1685
        %v1719 = vpack.c.bf16 %v1690, %v1686
        %v1720 = vpack.c.bf16 %v1691, %v1687
        %v1721 = vpack.c.bf16 %v1696, %v1692
        %v1722 = vpack.c.bf16 %v1697, %v1693
        %v1723 = vpack.c.bf16 %v1698, %v1694
        %v1724 = vpack.c.bf16 %v1699, %v1695
        %1725 = vset.pattern.permute.xlu0 3
        %1726 = vperm.xlu0 %1725, %v1424
        %v1727 = vpop.permute.xlu0 %1726
        %1729 = vset.pattern.permute.xlu0 3
        %1730 = vperm.xlu0 %1729, %v1425
        %v1731 = vpop.permute.xlu0 %1730
        %1733 = vset.pattern.permute.xlu0 3
        %1734 = vperm.xlu0 %1733, %v1426
        %v1735 = vpop.permute.xlu0 %1734
        %1737 = vset.pattern.permute.xlu0 3
        %1738 = vperm.xlu0 %1737, %v1427
        %v1739 = vpop.permute.xlu0 %1738
        %1741 = vset.pattern.permute.xlu0 3
        %1742 = vperm.xlu0 %1741, %v1428
        %v1743 = vpop.permute.xlu0 %1742
        %1745 = vset.pattern.permute.xlu0 3
        %1746 = vperm.xlu0 %1745, %v1429
        %v1747 = vpop.permute.xlu0 %1746
        %1749 = vset.pattern.permute.xlu0 3
        %1750 = vperm.xlu0 %1749, %v1430
        %v1751 = vpop.permute.xlu0 %1750
        %1753 = vset.pattern.permute.xlu0 3
        %1754 = vperm.xlu0 %1753, %v1431
        %v1755 = vpop.permute.xlu0 %1754
        %v1765 = vunpack.c.l.b16 %v1701
        %v1766 = vunpack.c.l.b16 %v1702
        %v1767 = vunpack.c.l.b16 %v1703
        %v1768 = vunpack.c.l.b16 %v1704
        %v1769 = vunpack.c.l.b16 %v1705
        %v1770 = vunpack.c.l.b16 %v1706
        %v1771 = vunpack.c.l.b16 %v1707
        %v1772 = vunpack.c.l.b16 %v1708
        %v1773 = vpack.c.b16 %v1766, %v1765
        %v1774 = vpack.c.b16 %v1768, %v1767
        %v1775 = vpack.c.b16 %v1770, %v1769
        %v1776 = vpack.c.b16 %v1772, %v1771
        %v1778 = vsel %vm605, %v1773, 0
        %v1781 = vsel %vm605, %v1774, 0
        %v1784 = vsel %vm605, %v1775, 0
        %v1787 = vsel %vm605, %v1776, 0
        %1789 = vmatpush.bf16.msra.mxu0 0
        %1790 = vmatpush.bf16.msra.mxu0 0
        %1791 = vmatpush.bf16.msra.mxu0 0
        %1792 = vmatpush.bf16.msra.mxu0 0
        %1793 = vmatpush.bf16.msra.mxu0 %v1721
        %1794 = vmatpush.bf16.msra.mxu0 %v1717
        %1795 = vmatpush.bf16.msra.mxu0 %v1713
        %1796 = vmatpush.bf16.msra.mxu0 %v1709
        %1797 = vmatmul.bf16.gmra.mxu0 %v1778
        %v1798 = vpop.f32.mrf.mxu0
        %v1799 = vadd.f32 %v1727, %v1798
        %v1800 = vpop.f32.mrf.mxu0
        %v1801 = vadd.f32 %v1731, %v1800
        %1802 = vmatmul.bf16.gmra.mxu0 %v1781
        %v1803 = vpop.f32.mrf.mxu0
        %v1804 = vadd.f32 %v1735, %v1803
        %v1805 = vpop.f32.mrf.mxu0
        %v1806 = vadd.f32 %v1739, %v1805
        %1807 = vmatmul.bf16.gmra.mxu0 %v1784
        %v1808 = vpop.f32.mrf.mxu0
        %v1809 = vadd.f32 %v1743, %v1808
        %v1810 = vpop.f32.mrf.mxu0
        %v1811 = vadd.f32 %v1747, %v1810
        %1812 = vmatmul.bf16.gmra.mxu0 %v1787
        %v1813 = vpop.f32.mrf.mxu0
        %v1814 = vadd.f32 %v1751, %v1813
        %v1815 = vpop.f32.mrf.mxu0
        %v1816 = vadd.f32 %v1755, %v1815
        %1817 = vdwg.mxu0
        %1818 = vmatpush.bf16.msra.mxu0 0
        %1819 = vmatpush.bf16.msra.mxu0 0
        %1820 = vmatpush.bf16.msra.mxu0 0
        %1821 = vmatpush.bf16.msra.mxu0 0
        %1822 = vmatpush.bf16.msra.mxu0 %v1722
        %1823 = vmatpush.bf16.msra.mxu0 %v1718
        %1824 = vmatpush.bf16.msra.mxu0 %v1714
        %1825 = vmatpush.bf16.msra.mxu0 %v1710
        %1826 = vmatmul.bf16.gmra.mxu0 %v1778
        %v1827 = vpop.f32.mrf.mxu0
        %v1828 = vadd.f32 %v1727, %v1827
        %v1829 = vpop.f32.mrf.mxu0
        %v1830 = vadd.f32 %v1731, %v1829
        %1831 = vmatmul.bf16.gmra.mxu0 %v1781
        %v1832 = vpop.f32.mrf.mxu0
        %v1833 = vadd.f32 %v1735, %v1832
        %v1834 = vpop.f32.mrf.mxu0
        %v1835 = vadd.f32 %v1739, %v1834
        %1836 = vmatmul.bf16.gmra.mxu0 %v1784
        %v1837 = vpop.f32.mrf.mxu0
        %v1838 = vadd.f32 %v1743, %v1837
        %v1839 = vpop.f32.mrf.mxu0
        %v1840 = vadd.f32 %v1747, %v1839
        %1841 = vmatmul.bf16.gmra.mxu0 %v1787
        %v1842 = vpop.f32.mrf.mxu0
        %v1843 = vadd.f32 %v1751, %v1842
        %v1844 = vpop.f32.mrf.mxu0
        %v1845 = vadd.f32 %v1755, %v1844
        %1846 = vdwg.mxu0
        %1847 = vmatpush.bf16.msra.mxu0 0
        %1848 = vmatpush.bf16.msra.mxu0 0
        %1849 = vmatpush.bf16.msra.mxu0 0
        %1850 = vmatpush.bf16.msra.mxu0 0
        %1851 = vmatpush.bf16.msra.mxu0 %v1723
        %1852 = vmatpush.bf16.msra.mxu0 %v1719
        %1853 = vmatpush.bf16.msra.mxu0 %v1715
        %1854 = vmatpush.bf16.msra.mxu0 %v1711
        %1855 = vmatmul.bf16.gmra.mxu0 %v1778
        %v1856 = vpop.f32.mrf.mxu0
        %v1857 = vadd.f32 %v1727, %v1856
        %v1858 = vpop.f32.mrf.mxu0
        %v1859 = vadd.f32 %v1731, %v1858
        %1860 = vmatmul.bf16.gmra.mxu0 %v1781
        %v1861 = vpop.f32.mrf.mxu0
        %v1862 = vadd.f32 %v1735, %v1861
        %v1863 = vpop.f32.mrf.mxu0
        %v1864 = vadd.f32 %v1739, %v1863
        %1865 = vmatmul.bf16.gmra.mxu0 %v1784
        %v1866 = vpop.f32.mrf.mxu0
        %v1867 = vadd.f32 %v1743, %v1866
        %v1868 = vpop.f32.mrf.mxu0
        %v1869 = vadd.f32 %v1747, %v1868
        %1870 = vmatmul.bf16.gmra.mxu0 %v1787
        %v1871 = vpop.f32.mrf.mxu0
        %v1872 = vadd.f32 %v1751, %v1871
        %v1873 = vpop.f32.mrf.mxu0
        %v1874 = vadd.f32 %v1755, %v1873
        %1875 = vdwg.mxu0
        %1876 = vmatpush.bf16.msra.mxu0 0
        %1877 = vmatpush.bf16.msra.mxu0 0
        %1878 = vmatpush.bf16.msra.mxu0 0
        %1879 = vmatpush.bf16.msra.mxu0 0
        %1880 = vmatpush.bf16.msra.mxu0 %v1724
        %1881 = vmatpush.bf16.msra.mxu0 %v1720
        %1882 = vmatpush.bf16.msra.mxu0 %v1716
        %1883 = vmatpush.bf16.msra.mxu0 %v1712
        %1884 = vmatmul.bf16.gmra.mxu0 %v1778
        %v1885 = vpop.f32.mrf.mxu0
        %v1886 = vadd.f32 %v1727, %v1885
        %v1887 = vpop.f32.mrf.mxu0
        %v1888 = vadd.f32 %v1731, %v1887
        %1889 = vmatmul.bf16.gmra.mxu0 %v1781
        %v1890 = vpop.f32.mrf.mxu0
        %v1891 = vadd.f32 %v1735, %v1890
        %v1892 = vpop.f32.mrf.mxu0
        %v1893 = vadd.f32 %v1739, %v1892
        %1894 = vmatmul.bf16.gmra.mxu0 %v1784
        %v1895 = vpop.f32.mrf.mxu0
        %v1896 = vadd.f32 %v1743, %v1895
        %v1897 = vpop.f32.mrf.mxu0
        %v1898 = vadd.f32 %v1747, %v1897
        %1899 = vmatmul.bf16.gmra.mxu0 %v1787
        %v1900 = vpop.f32.mrf.mxu0
        %v1901 = vadd.f32 %v1751, %v1900
        %v1902 = vpop.f32.mrf.mxu0
        %v1903 = vadd.f32 %v1755, %v1902
        %1904 = vdwg.mxu0
        %v1905 = vtanh.pop %v1799
        %v1906 = vtanh.pop %v1828
        %v1907 = vtanh.pop %v1857
        %v1908 = vtanh.pop %v1886
        %v1909 = vtanh.pop %v1801
        %v1910 = vtanh.pop %v1830
        %v1911 = vtanh.pop %v1859
        %v1912 = vtanh.pop %v1888
        %v1913 = vtanh.pop %v1804
        %v1914 = vtanh.pop %v1833
        %v1915 = vtanh.pop %v1862
        %v1916 = vtanh.pop %v1891
        %v1917 = vtanh.pop %v1806
        %v1918 = vtanh.pop %v1835
        %v1919 = vtanh.pop %v1864
        %v1920 = vtanh.pop %v1893
        %v1921 = vtanh.pop %v1809
        %v1922 = vtanh.pop %v1838
        %v1923 = vtanh.pop %v1867
        %v1924 = vtanh.pop %v1896
        %v1925 = vtanh.pop %v1811
        %v1926 = vtanh.pop %v1840
        %v1927 = vtanh.pop %v1869
        %v1928 = vtanh.pop %v1898
        %v1929 = vtanh.pop %v1814
        %v1930 = vtanh.pop %v1843
        %v1931 = vtanh.pop %v1872
        %v1932 = vtanh.pop %v1901
        %v1933 = vtanh.pop %v1816
        %v1934 = vtanh.pop %v1845
        %v1935 = vtanh.pop %v1874
        %v1936 = vtanh.pop %v1903
        %s1937 = scalar_lea.vmem [#allocation2], 128
        %v1938 = vld [vmem:[%s1937] sm:$0xf]
        %v1939 = vld [vmem:[%s1937 + $0x4] sm:$0xf]
        %v1940 = vld [vmem:[%s1937 + $0x8] sm:$0xf]
        %v1941 = vld [vmem:[%s1937 + $0xc] sm:$0xf]
        %v1942 = vld [vmem:[%s1937 + $0x10] sm:$0xf]
        %v1943 = vld [vmem:[%s1937 + $0x14] sm:$0xf]
        %v1944 = vld [vmem:[%s1937 + $0x18] sm:$0xf]
        %v1945 = vld [vmem:[%s1937 + $0x1c] sm:$0xf]
        %v1946 = vpack.c.bf16 %v1909, %v1905
        %v1947 = vpack.c.bf16 %v1910, %v1906
        %v1948 = vpack.c.bf16 %v1911, %v1907
        %v1949 = vpack.c.bf16 %v1912, %v1908
        %v1950 = vpack.c.bf16 %v1917, %v1913
        %v1951 = vpack.c.bf16 %v1918, %v1914
        %v1952 = vpack.c.bf16 %v1919, %v1915
        %v1953 = vpack.c.bf16 %v1920, %v1916
        %v1954 = vpack.c.bf16 %v1925, %v1921
        %v1955 = vpack.c.bf16 %v1926, %v1922
        %v1956 = vpack.c.bf16 %v1927, %v1923
        %v1957 = vpack.c.bf16 %v1928, %v1924
        %v1958 = vpack.c.bf16 %v1933, %v1929
        %v1959 = vpack.c.bf16 %v1934, %v1930
        %v1960 = vpack.c.bf16 %v1935, %v1931
        %v1961 = vpack.c.bf16 %v1936, %v1932
        %1962 = vset.pattern.permute.xlu0 4
        %1963 = vperm.xlu0 %1962, %v1424
        %v1964 = vpop.permute.xlu0 %1963
        %1966 = vset.pattern.permute.xlu0 4
        %1967 = vperm.xlu0 %1966, %v1425
        %v1968 = vpop.permute.xlu0 %1967
        %1970 = vset.pattern.permute.xlu0 4
        %1971 = vperm.xlu0 %1970, %v1426
        %v1972 = vpop.permute.xlu0 %1971
        %1974 = vset.pattern.permute.xlu0 4
        %1975 = vperm.xlu0 %1974, %v1427
        %v1976 = vpop.permute.xlu0 %1975
        %1978 = vset.pattern.permute.xlu0 4
        %1979 = vperm.xlu0 %1978, %v1428
        %v1980 = vpop.permute.xlu0 %1979
        %1982 = vset.pattern.permute.xlu0 4
        %1983 = vperm.xlu0 %1982, %v1429
        %v1984 = vpop.permute.xlu0 %1983
        %1986 = vset.pattern.permute.xlu0 4
        %1987 = vperm.xlu0 %1986, %v1430
        %v1988 = vpop.permute.xlu0 %1987
        %1990 = vset.pattern.permute.xlu0 4
        %1991 = vperm.xlu0 %1990, %v1431
        %v1992 = vpop.permute.xlu0 %1991
        %v2002 = vunpack.c.l.b16 %v1938
        %v2003 = vunpack.c.l.b16 %v1939
        %v2004 = vunpack.c.l.b16 %v1940
        %v2005 = vunpack.c.l.b16 %v1941
        %v2006 = vunpack.c.l.b16 %v1942
        %v2007 = vunpack.c.l.b16 %v1943
        %v2008 = vunpack.c.l.b16 %v1944
        %v2009 = vunpack.c.l.b16 %v1945
        %v2010 = vpack.c.b16 %v2003, %v2002
        %v2011 = vpack.c.b16 %v2005, %v2004
        %v2012 = vpack.c.b16 %v2007, %v2006
        %v2013 = vpack.c.b16 %v2009, %v2008
        %v2015 = vsel %vm605, %v2010, 0
        %v2018 = vsel %vm605, %v2011, 0
        %v2021 = vsel %vm605, %v2012, 0
        %v2024 = vsel %vm605, %v2013, 0
        %2026 = vmatpush.bf16.msra.mxu0 0
        %2027 = vmatpush.bf16.msra.mxu0 0
        %2028 = vmatpush.bf16.msra.mxu0 0
        %2029 = vmatpush.bf16.msra.mxu0 0
        %2030 = vmatpush.bf16.msra.mxu0 %v1958
        %2031 = vmatpush.bf16.msra.mxu0 %v1954
        %2032 = vmatpush.bf16.msra.mxu0 %v1950
        %2033 = vmatpush.bf16.msra.mxu0 %v1946
        %2034 = vmatmul.bf16.gmra.mxu0 %v2015
        %v2035 = vpop.f32.mrf.mxu0
        %v2036 = vadd.f32 %v1964, %v2035
        %v2037 = vpop.f32.mrf.mxu0
        %v2038 = vadd.f32 %v1968, %v2037
        %2039 = vmatmul.bf16.gmra.mxu0 %v2018
        %v2040 = vpop.f32.mrf.mxu0
        %v2041 = vadd.f32 %v1972, %v2040
        %v2042 = vpop.f32.mrf.mxu0
        %v2043 = vadd.f32 %v1976, %v2042
        %2044 = vmatmul.bf16.gmra.mxu0 %v2021
        %v2045 = vpop.f32.mrf.mxu0
        %v2046 = vadd.f32 %v1980, %v2045
        %v2047 = vpop.f32.mrf.mxu0
        %v2048 = vadd.f32 %v1984, %v2047
        %2049 = vmatmul.bf16.gmra.mxu0 %v2024
        %v2050 = vpop.f32.mrf.mxu0
        %v2051 = vadd.f32 %v1988, %v2050
        %v2052 = vpop.f32.mrf.mxu0
        %v2053 = vadd.f32 %v1992, %v2052
        %2054 = vdwg.mxu0
        %2055 = vmatpush.bf16.msra.mxu0 0
        %2056 = vmatpush.bf16.msra.mxu0 0
        %2057 = vmatpush.bf16.msra.mxu0 0
        %2058 = vmatpush.bf16.msra.mxu0 0
        %2059 = vmatpush.bf16.msra.mxu0 %v1959
        %2060 = vmatpush.bf16.msra.mxu0 %v1955
        %2061 = vmatpush.bf16.msra.mxu0 %v1951
        %2062 = vmatpush.bf16.msra.mxu0 %v1947
        %2063 = vmatmul.bf16.gmra.mxu0 %v2015
        %v2064 = vpop.f32.mrf.mxu0
        %v2065 = vadd.f32 %v1964, %v2064
        %v2066 = vpop.f32.mrf.mxu0
        %v2067 = vadd.f32 %v1968, %v2066
        %2068 = vmatmul.bf16.gmra.mxu0 %v2018
        %v2069 = vpop.f32.mrf.mxu0
        %v2070 = vadd.f32 %v1972, %v2069
        %v2071 = vpop.f32.mrf.mxu0
        %v2072 = vadd.f32 %v1976, %v2071
        %2073 = vmatmul.bf16.gmra.mxu0 %v2021
        %v2074 = vpop.f32.mrf.mxu0
        %v2075 = vadd.f32 %v1980, %v2074
        %v2076 = vpop.f32.mrf.mxu0
        %v2077 = vadd.f32 %v1984, %v2076
        %2078 = vmatmul.bf16.gmra.mxu0 %v2024
        %v2079 = vpop.f32.mrf.mxu0
        %v2080 = vadd.f32 %v1988, %v2079
        %v2081 = vpop.f32.mrf.mxu0
        %v2082 = vadd.f32 %v1992, %v2081
        %2083 = vdwg.mxu0
        %2084 = vmatpush.bf16.msra.mxu0 0
        %2085 = vmatpush.bf16.msra.mxu0 0
        %2086 = vmatpush.bf16.msra.mxu0 0
        %2087 = vmatpush.bf16.msra.mxu0 0
        %2088 = vmatpush.bf16.msra.mxu0 %v1960
        %2089 = vmatpush.bf16.msra.mxu0 %v1956
        %2090 = vmatpush.bf16.msra.mxu0 %v1952
        %2091 = vmatpush.bf16.msra.mxu0 %v1948
        %2092 = vmatmul.bf16.gmra.mxu0 %v2015
        %v2093 = vpop.f32.mrf.mxu0
        %v2094 = vadd.f32 %v1964, %v2093
        %v2095 = vpop.f32.mrf.mxu0
        %v2096 = vadd.f32 %v1968, %v2095
        %2097 = vmatmul.bf16.gmra.mxu0 %v2018
        %v2098 = vpop.f32.mrf.mxu0
        %v2099 = vadd.f32 %v1972, %v2098
        %v2100 = vpop.f32.mrf.mxu0
        %v2101 = vadd.f32 %v1976, %v2100
        %2102 = vmatmul.bf16.gmra.mxu0 %v2021
        %v2103 = vpop.f32.mrf.mxu0
        %v2104 = vadd.f32 %v1980, %v2103
        %v2105 = vpop.f32.mrf.mxu0
        %v2106 = vadd.f32 %v1984, %v2105
        %2107 = vmatmul.bf16.gmra.mxu0 %v2024
        %v2108 = vpop.f32.mrf.mxu0
        %v2109 = vadd.f32 %v1988, %v2108
        %v2110 = vpop.f32.mrf.mxu0
        %v2111 = vadd.f32 %v1992, %v2110
        %2112 = vdwg.mxu0
        %2113 = vmatpush.bf16.msra.mxu0 0
        %2114 = vmatpush.bf16.msra.mxu0 0
        %2115 = vmatpush.bf16.msra.mxu0 0
        %2116 = vmatpush.bf16.msra.mxu0 0
        %2117 = vmatpush.bf16.msra.mxu0 %v1961
        %2118 = vmatpush.bf16.msra.mxu0 %v1957
        %2119 = vmatpush.bf16.msra.mxu0 %v1953
        %2120 = vmatpush.bf16.msra.mxu0 %v1949
        %2121 = vmatmul.bf16.gmra.mxu0 %v2015
        %v2122 = vpop.f32.mrf.mxu0
        %v2123 = vadd.f32 %v1964, %v2122
        %v2124 = vpop.f32.mrf.mxu0
        %v2125 = vadd.f32 %v1968, %v2124
        %2126 = vmatmul.bf16.gmra.mxu0 %v2018
        %v2127 = vpop.f32.mrf.mxu0
        %v2128 = vadd.f32 %v1972, %v2127
        %v2129 = vpop.f32.mrf.mxu0
        %v2130 = vadd.f32 %v1976, %v2129
        %2131 = vmatmul.bf16.gmra.mxu0 %v2021
        %v2132 = vpop.f32.mrf.mxu0
        %v2133 = vadd.f32 %v1980, %v2132
        %v2134 = vpop.f32.mrf.mxu0
        %v2135 = vadd.f32 %v1984, %v2134
        %2136 = vmatmul.bf16.gmra.mxu0 %v2024
        %v2137 = vpop.f32.mrf.mxu0
        %v2138 = vadd.f32 %v1988, %v2137
        %v2139 = vpop.f32.mrf.mxu0
        %v2140 = vadd.f32 %v1992, %v2139
        %2141 = vdwg.mxu0
        %v2142 = vtanh.pop %v2036
        %v2143 = vtanh.pop %v2065
        %v2144 = vtanh.pop %v2094
        %v2145 = vtanh.pop %v2123
        %v2146 = vtanh.pop %v2038
        %v2147 = vtanh.pop %v2067
        %v2148 = vtanh.pop %v2096
        %v2149 = vtanh.pop %v2125
        %v2150 = vtanh.pop %v2041
        %v2151 = vtanh.pop %v2070
        %v2152 = vtanh.pop %v2099
        %v2153 = vtanh.pop %v2128
        %v2154 = vtanh.pop %v2043
        %v2155 = vtanh.pop %v2072
        %v2156 = vtanh.pop %v2101
        %v2157 = vtanh.pop %v2130
        %v2158 = vtanh.pop %v2046
        %v2159 = vtanh.pop %v2075
        %v2160 = vtanh.pop %v2104
        %v2161 = vtanh.pop %v2133
        %v2162 = vtanh.pop %v2048
        %v2163 = vtanh.pop %v2077
        %v2164 = vtanh.pop %v2106
        %v2165 = vtanh.pop %v2135
        %v2166 = vtanh.pop %v2051
        %v2167 = vtanh.pop %v2080
        %v2168 = vtanh.pop %v2109
        %v2169 = vtanh.pop %v2138
        %v2170 = vtanh.pop %v2053
        %v2171 = vtanh.pop %v2082
        %v2172 = vtanh.pop %v2111
        %v2173 = vtanh.pop %v2140
        %s2174 = scalar_lea.vmem [#allocation2], 160
        %v2175 = vld [vmem:[%s2174] sm:$0xf]
        %v2176 = vld [vmem:[%s2174 + $0x4] sm:$0xf]
        %v2177 = vld [vmem:[%s2174 + $0x8] sm:$0xf]
        %v2178 = vld [vmem:[%s2174 + $0xc] sm:$0xf]
        %v2179 = vld [vmem:[%s2174 + $0x10] sm:$0xf]
        %v2180 = vld [vmem:[%s2174 + $0x14] sm:$0xf]
        %v2181 = vld [vmem:[%s2174 + $0x18] sm:$0xf]
        %v2182 = vld [vmem:[%s2174 + $0x1c] sm:$0xf]
        %v2183 = vpack.c.bf16 %v2146, %v2142
        %v2184 = vpack.c.bf16 %v2147, %v2143
        %v2185 = vpack.c.bf16 %v2148, %v2144
        %v2186 = vpack.c.bf16 %v2149, %v2145
        %v2187 = vpack.c.bf16 %v2154, %v2150
        %v2188 = vpack.c.bf16 %v2155, %v2151
        %v2189 = vpack.c.bf16 %v2156, %v2152
        %v2190 = vpack.c.bf16 %v2157, %v2153
        %v2191 = vpack.c.bf16 %v2162, %v2158
        %v2192 = vpack.c.bf16 %v2163, %v2159
        %v2193 = vpack.c.bf16 %v2164, %v2160
        %v2194 = vpack.c.bf16 %v2165, %v2161
        %v2195 = vpack.c.bf16 %v2170, %v2166
        %v2196 = vpack.c.bf16 %v2171, %v2167
        %v2197 = vpack.c.bf16 %v2172, %v2168
        %v2198 = vpack.c.bf16 %v2173, %v2169
        %2199 = vset.pattern.permute.xlu0 5
        %2200 = vperm.xlu0 %2199, %v1424
        %v2201 = vpop.permute.xlu0 %2200
        %2203 = vset.pattern.permute.xlu0 5
        %2204 = vperm.xlu0 %2203, %v1425
        %v2205 = vpop.permute.xlu0 %2204
        %2207 = vset.pattern.permute.xlu0 5
        %2208 = vperm.xlu0 %2207, %v1426
        %v2209 = vpop.permute.xlu0 %2208
        %2211 = vset.pattern.permute.xlu0 5
        %2212 = vperm.xlu0 %2211, %v1427
        %v2213 = vpop.permute.xlu0 %2212
        %2215 = vset.pattern.permute.xlu0 5
        %2216 = vperm.xlu0 %2215, %v1428
        %v2217 = vpop.permute.xlu0 %2216
        %2219 = vset.pattern.permute.xlu0 5
        %2220 = vperm.xlu0 %2219, %v1429
        %v2221 = vpop.permute.xlu0 %2220
        %2223 = vset.pattern.permute.xlu0 5
        %2224 = vperm.xlu0 %2223, %v1430
        %v2225 = vpop.permute.xlu0 %2224
        %2227 = vset.pattern.permute.xlu0 5
        %2228 = vperm.xlu0 %2227, %v1431
        %v2229 = vpop.permute.xlu0 %2228
        %v2239 = vunpack.c.l.b16 %v2175
        %v2240 = vunpack.c.l.b16 %v2176
        %v2241 = vunpack.c.l.b16 %v2177
        %v2242 = vunpack.c.l.b16 %v2178
        %v2243 = vunpack.c.l.b16 %v2179
        %v2244 = vunpack.c.l.b16 %v2180
        %v2245 = vunpack.c.l.b16 %v2181
        %v2246 = vunpack.c.l.b16 %v2182
        %v2247 = vpack.c.b16 %v2240, %v2239
        %v2248 = vpack.c.b16 %v2242, %v2241
        %v2249 = vpack.c.b16 %v2244, %v2243
        %v2250 = vpack.c.b16 %v2246, %v2245
        %v2252 = vsel %vm605, %v2247, 0
        %v2255 = vsel %vm605, %v2248, 0
        %v2258 = vsel %vm605, %v2249, 0
        %v2261 = vsel %vm605, %v2250, 0
        %2263 = vmatpush.bf16.msra.mxu0 0
        %2264 = vmatpush.bf16.msra.mxu0 0
        %2265 = vmatpush.bf16.msra.mxu0 0
        %2266 = vmatpush.bf16.msra.mxu0 0
        %2267 = vmatpush.bf16.msra.mxu0 %v2195
        %2268 = vmatpush.bf16.msra.mxu0 %v2191
        %2269 = vmatpush.bf16.msra.mxu0 %v2187
        %2270 = vmatpush.bf16.msra.mxu0 %v2183
        %2271 = vmatmul.bf16.gmra.mxu0 %v2252
        %v2272 = vpop.f32.mrf.mxu0
        %v2273 = vadd.f32 %v2201, %v2272
        %v2274 = vpop.f32.mrf.mxu0
        %v2275 = vadd.f32 %v2205, %v2274
        %2276 = vmatmul.bf16.gmra.mxu0 %v2255
        %v2277 = vpop.f32.mrf.mxu0
        %v2278 = vadd.f32 %v2209, %v2277
        %v2279 = vpop.f32.mrf.mxu0
        %v2280 = vadd.f32 %v2213, %v2279
        %2281 = vmatmul.bf16.gmra.mxu0 %v2258
        %v2282 = vpop.f32.mrf.mxu0
        %v2283 = vadd.f32 %v2217, %v2282
        %v2284 = vpop.f32.mrf.mxu0
        %v2285 = vadd.f32 %v2221, %v2284
        %2286 = vmatmul.bf16.gmra.mxu0 %v2261
        %v2287 = vpop.f32.mrf.mxu0
        %v2288 = vadd.f32 %v2225, %v2287
        %v2289 = vpop.f32.mrf.mxu0
        %v2290 = vadd.f32 %v2229, %v2289
        %2291 = vdwg.mxu0
        %2292 = vmatpush.bf16.msra.mxu0 0
        %2293 = vmatpush.bf16.msra.mxu0 0
        %2294 = vmatpush.bf16.msra.mxu0 0
        %2295 = vmatpush.bf16.msra.mxu0 0
        %2296 = vmatpush.bf16.msra.mxu0 %v2196
        %2297 = vmatpush.bf16.msra.mxu0 %v2192
        %2298 = vmatpush.bf16.msra.mxu0 %v2188
        %2299 = vmatpush.bf16.msra.mxu0 %v2184
        %2300 = vmatmul.bf16.gmra.mxu0 %v2252
        %v2301 = vpop.f32.mrf.mxu0
        %v2302 = vadd.f32 %v2201, %v2301
        %v2303 = vpop.f32.mrf.mxu0
        %v2304 = vadd.f32 %v2205, %v2303
        %2305 = vmatmul.bf16.gmra.mxu0 %v2255
        %v2306 = vpop.f32.mrf.mxu0
        %v2307 = vadd.f32 %v2209, %v2306
        %v2308 = vpop.f32.mrf.mxu0
        %v2309 = vadd.f32 %v2213, %v2308
        %2310 = vmatmul.bf16.gmra.mxu0 %v2258
        %v2311 = vpop.f32.mrf.mxu0
        %v2312 = vadd.f32 %v2217, %v2311
        %v2313 = vpop.f32.mrf.mxu0
        %v2314 = vadd.f32 %v2221, %v2313
        %2315 = vmatmul.bf16.gmra.mxu0 %v2261
        %v2316 = vpop.f32.mrf.mxu0
        %v2317 = vadd.f32 %v2225, %v2316
        %v2318 = vpop.f32.mrf.mxu0
        %v2319 = vadd.f32 %v2229, %v2318
        %2320 = vdwg.mxu0
        %2321 = vmatpush.bf16.msra.mxu0 0
        %2322 = vmatpush.bf16.msra.mxu0 0
        %2323 = vmatpush.bf16.msra.mxu0 0
        %2324 = vmatpush.bf16.msra.mxu0 0
        %2325 = vmatpush.bf16.msra.mxu0 %v2197
        %2326 = vmatpush.bf16.msra.mxu0 %v2193
        %2327 = vmatpush.bf16.msra.mxu0 %v2189
        %2328 = vmatpush.bf16.msra.mxu0 %v2185
        %2329 = vmatmul.bf16.gmra.mxu0 %v2252
        %v2330 = vpop.f32.mrf.mxu0
        %v2331 = vadd.f32 %v2201, %v2330
        %v2332 = vpop.f32.mrf.mxu0
        %v2333 = vadd.f32 %v2205, %v2332
        %2334 = vmatmul.bf16.gmra.mxu0 %v2255
        %v2335 = vpop.f32.mrf.mxu0
        %v2336 = vadd.f32 %v2209, %v2335
        %v2337 = vpop.f32.mrf.mxu0
        %v2338 = vadd.f32 %v2213, %v2337
        %2339 = vmatmul.bf16.gmra.mxu0 %v2258
        %v2340 = vpop.f32.mrf.mxu0
        %v2341 = vadd.f32 %v2217, %v2340
        %v2342 = vpop.f32.mrf.mxu0
        %v2343 = vadd.f32 %v2221, %v2342
        %2344 = vmatmul.bf16.gmra.mxu0 %v2261
        %v2345 = vpop.f32.mrf.mxu0
        %v2346 = vadd.f32 %v2225, %v2345
        %v2347 = vpop.f32.mrf.mxu0
        %v2348 = vadd.f32 %v2229, %v2347
        %2349 = vdwg.mxu0
        %2350 = vmatpush.bf16.msra.mxu0 0
        %2351 = vmatpush.bf16.msra.mxu0 0
        %2352 = vmatpush.bf16.msra.mxu0 0
        %2353 = vmatpush.bf16.msra.mxu0 0
        %2354 = vmatpush.bf16.msra.mxu0 %v2198
        %2355 = vmatpush.bf16.msra.mxu0 %v2194
        %2356 = vmatpush.bf16.msra.mxu0 %v2190
        %2357 = vmatpush.bf16.msra.mxu0 %v2186
        %2358 = vmatmul.bf16.gmra.mxu0 %v2252
        %v2359 = vpop.f32.mrf.mxu0
        %v2360 = vadd.f32 %v2201, %v2359
        %v2361 = vpop.f32.mrf.mxu0
        %v2362 = vadd.f32 %v2205, %v2361
        %2363 = vmatmul.bf16.gmra.mxu0 %v2255
        %v2364 = vpop.f32.mrf.mxu0
        %v2365 = vadd.f32 %v2209, %v2364
        %v2366 = vpop.f32.mrf.mxu0
        %v2367 = vadd.f32 %v2213, %v2366
        %2368 = vmatmul.bf16.gmra.mxu0 %v2258
        %v2369 = vpop.f32.mrf.mxu0
        %v2370 = vadd.f32 %v2217, %v2369
        %v2371 = vpop.f32.mrf.mxu0
        %v2372 = vadd.f32 %v2221, %v2371
        %2373 = vmatmul.bf16.gmra.mxu0 %v2261
        %v2374 = vpop.f32.mrf.mxu0
        %v2375 = vadd.f32 %v2225, %v2374
        %v2376 = vpop.f32.mrf.mxu0
        %v2377 = vadd.f32 %v2229, %v2376
        %2378 = vdwg.mxu0
        %v2379 = vtanh.pop %v2273
        %v2380 = vtanh.pop %v2302
        %v2381 = vtanh.pop %v2331
        %v2382 = vtanh.pop %v2360
        %v2383 = vtanh.pop %v2275
        %v2384 = vtanh.pop %v2304
        %v2385 = vtanh.pop %v2333
        %v2386 = vtanh.pop %v2362
        %v2387 = vtanh.pop %v2278
        %v2388 = vtanh.pop %v2307
        %v2389 = vtanh.pop %v2336
        %v2390 = vtanh.pop %v2365
        %v2391 = vtanh.pop %v2280
        %v2392 = vtanh.pop %v2309
        %v2393 = vtanh.pop %v2338
        %v2394 = vtanh.pop %v2367
        %v2395 = vtanh.pop %v2283
        %v2396 = vtanh.pop %v2312
        %v2397 = vtanh.pop %v2341
        %v2398 = vtanh.pop %v2370
        %v2399 = vtanh.pop %v2285
        %v2400 = vtanh.pop %v2314
        %v2401 = vtanh.pop %v2343
        %v2402 = vtanh.pop %v2372
        %v2403 = vtanh.pop %v2288
        %v2404 = vtanh.pop %v2317
        %v2405 = vtanh.pop %v2346
        %v2406 = vtanh.pop %v2375
        %v2407 = vtanh.pop %v2290
        %v2408 = vtanh.pop %v2319
        %v2409 = vtanh.pop %v2348
        %v2410 = vtanh.pop %v2377
        %2411 = vset.pattern.permute.xlu0 6
        %2412 = vperm.xlu0 %2411, %v1424
        %v2413 = vpop.permute.xlu0 %2412
        %2415 = vset.pattern.permute.xlu0 6
        %2416 = vperm.xlu0 %2415, %v1425
        %v2417 = vpop.permute.xlu0 %2416
        %2419 = vset.pattern.permute.xlu0 6
        %2420 = vperm.xlu0 %2419, %v1426
        %v2421 = vpop.permute.xlu0 %2420
        %2423 = vset.pattern.permute.xlu0 6
        %2424 = vperm.xlu0 %2423, %v1427
        %v2425 = vpop.permute.xlu0 %2424
        %2427 = vset.pattern.permute.xlu0 6
        %2428 = vperm.xlu0 %2427, %v1428
        %v2429 = vpop.permute.xlu0 %2428
        %2431 = vset.pattern.permute.xlu0 6
        %2432 = vperm.xlu0 %2431, %v1429
        %v2433 = vpop.permute.xlu0 %2432
        %2435 = vset.pattern.permute.xlu0 6
        %2436 = vperm.xlu0 %2435, %v1430
        %v2437 = vpop.permute.xlu0 %2436
        %2439 = vset.pattern.permute.xlu0 6
        %2440 = vperm.xlu0 %2439, %v1431
        %v2441 = vpop.permute.xlu0 %2440
        %v2443 = vmul.f32 %v2379, %v2413
        %v2444 = vmul.f32 %v2380, %v2413
        %v2445 = vmul.f32 %v2381, %v2413
        %v2446 = vmul.f32 %v2382, %v2413
        %v2447 = vmul.f32 %v2383, %v2417
        %v2448 = vmul.f32 %v2384, %v2417
        %v2449 = vmul.f32 %v2385, %v2417
        %v2450 = vmul.f32 %v2386, %v2417
        %v2451 = vmul.f32 %v2387, %v2421
        %v2452 = vmul.f32 %v2388, %v2421
        %v2453 = vmul.f32 %v2389, %v2421
        %v2454 = vmul.f32 %v2390, %v2421
        %v2455 = vmul.f32 %v2391, %v2425
        %v2456 = vmul.f32 %v2392, %v2425
        %v2457 = vmul.f32 %v2393, %v2425
        %v2458 = vmul.f32 %v2394, %v2425
        %v2459 = vmul.f32 %v2395, %v2429
        %v2460 = vmul.f32 %v2396, %v2429
        %v2461 = vmul.f32 %v2397, %v2429
        %v2462 = vmul.f32 %v2398, %v2429
        %v2463 = vmul.f32 %v2399, %v2433
        %v2464 = vmul.f32 %v2400, %v2433
        %v2465 = vmul.f32 %v2401, %v2433
        %v2466 = vmul.f32 %v2402, %v2433
        %v2467 = vmul.f32 %v2403, %v2437
        %v2468 = vmul.f32 %v2404, %v2437
        %v2469 = vmul.f32 %v2405, %v2437
        %v2470 = vmul.f32 %v2406, %v2437
        %v2471 = vmul.f32 %v2407, %v2441
        %v2472 = vmul.f32 %v2408, %v2441
        %v2473 = vmul.f32 %v2409, %v2441
        %v2474 = vmul.f32 %v2410, %v2441
        %v2475 = vadd.f32 %v2443, %v2447
        %v2476 = vadd.f32 %v2475, %v2451
        %v2477 = vadd.f32 %v2476, %v2455
        %v2478 = vrot.slane %v2477, 4
        %v2479 = vadd.f32 %v2477, %v2478
        %v2480 = vrot.slane %v2479, 2
        %v2481 = vadd.f32 %v2479, %v2480
        %v2482 = vrot.slane %v2481, 1
        %v2483 = vadd.f32 %v2481, %v2482
        %v2484 = vadd.f32 %v2444, %v2448
        %v2485 = vadd.f32 %v2484, %v2452
        %v2486 = vadd.f32 %v2485, %v2456
        %v2487 = vrot.slane %v2486, 4
        %v2488 = vadd.f32 %v2486, %v2487
        %v2489 = vrot.slane %v2488, 2
        %v2490 = vadd.f32 %v2488, %v2489
        %v2491 = vrot.slane %v2490, 1
        %v2492 = vadd.f32 %v2490, %v2491
        %v2493 = vadd.f32 %v2445, %v2449
        %v2494 = vadd.f32 %v2493, %v2453
        %v2495 = vadd.f32 %v2494, %v2457
        %v2496 = vrot.slane %v2495, 4
        %v2497 = vadd.f32 %v2495, %v2496
        %v2498 = vrot.slane %v2497, 2
        %v2499 = vadd.f32 %v2497, %v2498
        %v2500 = vrot.slane %v2499, 1
        %v2501 = vadd.f32 %v2499, %v2500
        %v2502 = vadd.f32 %v2446, %v2450
        %v2503 = vadd.f32 %v2502, %v2454
        %v2504 = vadd.f32 %v2503, %v2458
        %v2505 = vrot.slane %v2504, 4
        %v2506 = vadd.f32 %v2504, %v2505
        %v2507 = vrot.slane %v2506, 2
        %v2508 = vadd.f32 %v2506, %v2507
        %v2509 = vrot.slane %v2508, 1
        %v2510 = vadd.f32 %v2508, %v2509
        %2511 = vset.pattern.permute.xlu0 7
        %2512 = vperm.xlu0 %2511, %v1424
        %v2513 = vpop.permute.xlu0 %2512
        %v2515 = vadd.f32 %v2483, %v2513
        %v2516 = vadd.f32 %v2492, %v2513
        %v2517 = vadd.f32 %v2501, %v2513
        %v2518 = vadd.f32 %v2510, %v2513
        %v2519 = vadd.f32 %v2459, %v2463
        %v2520 = vadd.f32 %v2519, %v2467
        %v2521 = vadd.f32 %v2520, %v2471
        %v2522 = vrot.slane %v2521, 4
        %v2523 = vadd.f32 %v2521, %v2522
        %v2524 = vrot.slane %v2523, 2
        %v2525 = vadd.f32 %v2523, %v2524
        %v2526 = vrot.slane %v2525, 1
        %v2527 = vadd.f32 %v2525, %v2526
        %v2528 = vadd.f32 %v2460, %v2464
        %v2529 = vadd.f32 %v2528, %v2468
        %v2530 = vadd.f32 %v2529, %v2472
        %v2531 = vrot.slane %v2530, 4
        %v2532 = vadd.f32 %v2530, %v2531
        %v2533 = vrot.slane %v2532, 2
        %v2534 = vadd.f32 %v2532, %v2533
        %v2535 = vrot.slane %v2534, 1
        %v2536 = vadd.f32 %v2534, %v2535
        %v2537 = vadd.f32 %v2461, %v2465
        %v2538 = vadd.f32 %v2537, %v2469
        %v2539 = vadd.f32 %v2538, %v2473
        %v2540 = vrot.slane %v2539, 4
        %v2541 = vadd.f32 %v2539, %v2540
        %v2542 = vrot.slane %v2541, 2
        %v2543 = vadd.f32 %v2541, %v2542
        %v2544 = vrot.slane %v2543, 1
        %v2545 = vadd.f32 %v2543, %v2544
        %v2546 = vadd.f32 %v2462, %v2466
        %v2547 = vadd.f32 %v2546, %v2470
        %v2548 = vadd.f32 %v2547, %v2474
        %v2549 = vrot.slane %v2548, 4
        %v2550 = vadd.f32 %v2548, %v2549
        %v2551 = vrot.slane %v2550, 2
        %v2552 = vadd.f32 %v2550, %v2551
        %v2553 = vrot.slane %v2552, 1
        %v2554 = vadd.f32 %v2552, %v2553
        %v2555 = vadd.f32 %v2527, %v2513
        %v2556 = vadd.f32 %v2536, %v2513
        %v2557 = vadd.f32 %v2545, %v2513
        %v2558 = vadd.f32 %v2554, %v2513
        %v2559 = vmul.f32 %v2555, 1.442695
        %v2560 = vpow.pop %v2559
        %v2561 = vmul.f32 %v2556, 1.442695
        %v2562 = vpow.pop %v2561
        %v2563 = vmul.f32 %v2557, 1.442695
        %v2564 = vpow.pop %v2563
        %v2565 = vmul.f32 %v2558, 1.442695
        %v2566 = vpow.pop %v2565
        %v2571 = vrot.slane %v2562, 4
        %v2572 = vrot.slane %v2566, 4
        %v2573 = vsel %vm1402, %v2560, %v2571
        %v2574 = vsel %vm1402, %v2564, %v2572
        %v2575 = vrot.slane %v2573, 5
        %v2576 = vrot.slane %v2575, 4
        %v2577 = vrot.slane %v2574, 5
        %v2578 = vrot.slane %v2577, 4
        %v2581 = vmul.f32 %v229, %v2576
        %v2582 = vmul.f32 %v230, %v2578
        %v2585 = vperm.slane %v2581, 0
        %v2586 = vperm.slane %v2581, 4
        %v2587 = vperm.slane %v2582, 0
        %v2588 = vperm.slane %v2582, 4
        %v2593 = vadd.f32 %v2515, %v2585
        %v2594 = vadd.f32 %v2516, %v2586
        %v2595 = vadd.f32 %v2517, %v2587
        %v2596 = vadd.f32 %v2518, %v2588
        %v2597 = vadd.f32 %v1384, %v2555
        %v2598 = vadd.f32 %v1385, %v2556
        %v2599 = vadd.f32 %v1386, %v2557
        %v2600 = vadd.f32 %v1387, %v2558
        %s2601 = scalar_lea.vmem %s1, 128
        %v2602 = vld [vmem:[%s2601] sm:$0xff]
        %v2603 = vld [vmem:[%s2601 + $0x8] sm:$0xff]
        %v2604 = vld [vmem:[%s2601 + $0x10] sm:$0xff]
        %v2605 = vld [vmem:[%s2601 + $0x18] sm:$0xff]
        %v2606 = vld [vmem:[%s2601 + $0x20] sm:$0xff]
        %v2607 = vld [vmem:[%s2601 + $0x28] sm:$0xff]
        %v2608 = vld [vmem:[%s2601 + $0x30] sm:$0xff]
        %v2609 = vld [vmem:[%s2601 + $0x38] sm:$0xff]
        %2611 = vset.pattern.permute.xlu0 0
        %2612 = vperm.xlu0 %2611, %v2602
        %v2613 = vpop.permute.xlu0 %2612
        %2616 = vset.pattern.permute.xlu0 0
        %2617 = vperm.xlu0 %2616, %v2603
        %v2618 = vpop.permute.xlu0 %2617
        %2621 = vset.pattern.permute.xlu0 0
        %2622 = vperm.xlu0 %2621, %v2604
        %v2623 = vpop.permute.xlu0 %2622
        %2626 = vset.pattern.permute.xlu0 0
        %2627 = vperm.xlu0 %2626, %v2605
        %v2628 = vpop.permute.xlu0 %2627
        %2631 = vset.pattern.permute.xlu0 0
        %2632 = vperm.xlu0 %2631, %v2606
        %v2633 = vpop.permute.xlu0 %2632
        %2636 = vset.pattern.permute.xlu0 0
        %2637 = vperm.xlu0 %2636, %v2607
        %v2638 = vpop.permute.xlu0 %2637
        %2641 = vset.pattern.permute.xlu0 0
        %2642 = vperm.xlu0 %2641, %v2608
        %v2643 = vpop.permute.xlu0 %2642
        %2646 = vset.pattern.permute.xlu0 0
        %2647 = vperm.xlu0 %2646, %v2609
        %v2648 = vpop.permute.xlu0 %2647
        %v2650 = vperm.slane %v2593, 0
        %v2651 = vperm.slane %v2594, 0
        %v2652 = vperm.slane %v2595, 0
        %v2653 = vperm.slane %v2596, 0
        %v2654 = vmul.f32 %v2613, %v2650
        %v2655 = vmul.f32 %v2613, %v2651
        %v2656 = vmul.f32 %v2613, %v2652
        %v2657 = vmul.f32 %v2613, %v2653
        %v2658 = vmul.f32 %v2618, %v2650
        %v2659 = vmul.f32 %v2618, %v2651
        %v2660 = vmul.f32 %v2618, %v2652
        %v2661 = vmul.f32 %v2618, %v2653
        %v2662 = vmul.f32 %v2623, %v2650
        %v2663 = vmul.f32 %v2623, %v2651
        %v2664 = vmul.f32 %v2623, %v2652
        %v2665 = vmul.f32 %v2623, %v2653
        %v2666 = vmul.f32 %v2628, %v2650
        %v2667 = vmul.f32 %v2628, %v2651
        %v2668 = vmul.f32 %v2628, %v2652
        %v2669 = vmul.f32 %v2628, %v2653
        %v2670 = vmul.f32 %v2633, %v2650
        %v2671 = vmul.f32 %v2633, %v2651
        %v2672 = vmul.f32 %v2633, %v2652
        %v2673 = vmul.f32 %v2633, %v2653
        %v2674 = vmul.f32 %v2638, %v2650
        %v2675 = vmul.f32 %v2638, %v2651
        %v2676 = vmul.f32 %v2638, %v2652
        %v2677 = vmul.f32 %v2638, %v2653
        %v2678 = vmul.f32 %v2643, %v2650
        %v2679 = vmul.f32 %v2643, %v2651
        %v2680 = vmul.f32 %v2643, %v2652
        %v2681 = vmul.f32 %v2643, %v2653
        %v2682 = vmul.f32 %v2648, %v2650
        %v2683 = vmul.f32 %v2648, %v2651
        %v2684 = vmul.f32 %v2648, %v2652
        %v2685 = vmul.f32 %v2648, %v2653
        %2686 = vset.pattern.permute.xlu0 1
        %2687 = vperm.xlu0 %2686, %v2602
        %v2688 = vpop.permute.xlu0 %2687
        %2690 = vset.pattern.permute.xlu0 1
        %2691 = vperm.xlu0 %2690, %v2603
        %v2692 = vpop.permute.xlu0 %2691
        %2694 = vset.pattern.permute.xlu0 1
        %2695 = vperm.xlu0 %2694, %v2604
        %v2696 = vpop.permute.xlu0 %2695
        %2698 = vset.pattern.permute.xlu0 1
        %2699 = vperm.xlu0 %2698, %v2605
        %v2700 = vpop.permute.xlu0 %2699
        %2702 = vset.pattern.permute.xlu0 1
        %2703 = vperm.xlu0 %2702, %v2606
        %v2704 = vpop.permute.xlu0 %2703
        %2706 = vset.pattern.permute.xlu0 1
        %2707 = vperm.xlu0 %2706, %v2607
        %v2708 = vpop.permute.xlu0 %2707
        %2710 = vset.pattern.permute.xlu0 1
        %2711 = vperm.xlu0 %2710, %v2608
        %v2712 = vpop.permute.xlu0 %2711
        %2714 = vset.pattern.permute.xlu0 1
        %2715 = vperm.xlu0 %2714, %v2609
        %v2716 = vpop.permute.xlu0 %2715
        %v2718 = vmul.f32 %v2688, %v365
        %v2719 = vmul.f32 %v2688, %v366
        %v2720 = vmul.f32 %v2688, %v367
        %v2721 = vmul.f32 %v2688, %v368
        %v2722 = vmul.f32 %v2692, %v365
        %v2723 = vmul.f32 %v2692, %v366
        %v2724 = vmul.f32 %v2692, %v367
        %v2725 = vmul.f32 %v2692, %v368
        %v2726 = vmul.f32 %v2696, %v365
        %v2727 = vmul.f32 %v2696, %v366
        %v2728 = vmul.f32 %v2696, %v367
        %v2729 = vmul.f32 %v2696, %v368
        %v2730 = vmul.f32 %v2700, %v365
        %v2731 = vmul.f32 %v2700, %v366
        %v2732 = vmul.f32 %v2700, %v367
        %v2733 = vmul.f32 %v2700, %v368
        %v2734 = vmul.f32 %v2704, %v365
        %v2735 = vmul.f32 %v2704, %v366
        %v2736 = vmul.f32 %v2704, %v367
        %v2737 = vmul.f32 %v2704, %v368
        %v2738 = vmul.f32 %v2708, %v365
        %v2739 = vmul.f32 %v2708, %v366
        %v2740 = vmul.f32 %v2708, %v367
        %v2741 = vmul.f32 %v2708, %v368
        %v2742 = vmul.f32 %v2712, %v365
        %v2743 = vmul.f32 %v2712, %v366
        %v2744 = vmul.f32 %v2712, %v367
        %v2745 = vmul.f32 %v2712, %v368
        %v2746 = vmul.f32 %v2716, %v365
        %v2747 = vmul.f32 %v2716, %v366
        %v2748 = vmul.f32 %v2716, %v367
        %v2749 = vmul.f32 %v2716, %v368
        %v2750 = vadd.f32 %v2654, %v2718
        %v2751 = vadd.f32 %v2655, %v2719
        %v2752 = vadd.f32 %v2656, %v2720
        %v2753 = vadd.f32 %v2657, %v2721
        %v2754 = vadd.f32 %v2658, %v2722
        %v2755 = vadd.f32 %v2659, %v2723
        %v2756 = vadd.f32 %v2660, %v2724
        %v2757 = vadd.f32 %v2661, %v2725
        %v2758 = vadd.f32 %v2662, %v2726
        %v2759 = vadd.f32 %v2663, %v2727
        %v2760 = vadd.f32 %v2664, %v2728
        %v2761 = vadd.f32 %v2665, %v2729
        %v2762 = vadd.f32 %v2666, %v2730
        %v2763 = vadd.f32 %v2667, %v2731
        %v2764 = vadd.f32 %v2668, %v2732
        %v2765 = vadd.f32 %v2669, %v2733
        %v2766 = vadd.f32 %v2670, %v2734
        %v2767 = vadd.f32 %v2671, %v2735
        %v2768 = vadd.f32 %v2672, %v2736
        %v2769 = vadd.f32 %v2673, %v2737
        %v2770 = vadd.f32 %v2674, %v2738
        %v2771 = vadd.f32 %v2675, %v2739
        %v2772 = vadd.f32 %v2676, %v2740
        %v2773 = vadd.f32 %v2677, %v2741
        %v2774 = vadd.f32 %v2678, %v2742
        %v2775 = vadd.f32 %v2679, %v2743
        %v2776 = vadd.f32 %v2680, %v2744
        %v2777 = vadd.f32 %v2681, %v2745
        %v2778 = vadd.f32 %v2682, %v2746
        %v2779 = vadd.f32 %v2683, %v2747
        %v2780 = vadd.f32 %v2684, %v2748
        %v2781 = vadd.f32 %v2685, %v2749
        %2782 = vset.pattern.permute.xlu0 2
        %2783 = vperm.xlu0 %2782, %v2602
        %v2784 = vpop.permute.xlu0 %2783
        %2786 = vset.pattern.permute.xlu0 2
        %2787 = vperm.xlu0 %2786, %v2603
        %v2788 = vpop.permute.xlu0 %2787
        %2790 = vset.pattern.permute.xlu0 2
        %2791 = vperm.xlu0 %2790, %v2604
        %v2792 = vpop.permute.xlu0 %2791
        %2794 = vset.pattern.permute.xlu0 2
        %2795 = vperm.xlu0 %2794, %v2605
        %v2796 = vpop.permute.xlu0 %2795
        %2798 = vset.pattern.permute.xlu0 2
        %2799 = vperm.xlu0 %2798, %v2606
        %v2800 = vpop.permute.xlu0 %2799
        %2802 = vset.pattern.permute.xlu0 2
        %2803 = vperm.xlu0 %2802, %v2607
        %v2804 = vpop.permute.xlu0 %2803
        %2806 = vset.pattern.permute.xlu0 2
        %2807 = vperm.xlu0 %2806, %v2608
        %v2808 = vpop.permute.xlu0 %2807
        %2810 = vset.pattern.permute.xlu0 2
        %2811 = vperm.xlu0 %2810, %v2609
        %v2812 = vpop.permute.xlu0 %2811
        %v2814 = vadd.f32 %v2750, %v2784
        %v2815 = vadd.f32 %v2751, %v2784
        %v2816 = vadd.f32 %v2752, %v2784
        %v2817 = vadd.f32 %v2753, %v2784
        %v2818 = vadd.f32 %v2754, %v2788
        %v2819 = vadd.f32 %v2755, %v2788
        %v2820 = vadd.f32 %v2756, %v2788
        %v2821 = vadd.f32 %v2757, %v2788
        %v2822 = vadd.f32 %v2758, %v2792
        %v2823 = vadd.f32 %v2759, %v2792
        %v2824 = vadd.f32 %v2760, %v2792
        %v2825 = vadd.f32 %v2761, %v2792
        %v2826 = vadd.f32 %v2762, %v2796
        %v2827 = vadd.f32 %v2763, %v2796
        %v2828 = vadd.f32 %v2764, %v2796
        %v2829 = vadd.f32 %v2765, %v2796
        %v2830 = vadd.f32 %v2766, %v2800
        %v2831 = vadd.f32 %v2767, %v2800
        %v2832 = vadd.f32 %v2768, %v2800
        %v2833 = vadd.f32 %v2769, %v2800
        %v2834 = vadd.f32 %v2770, %v2804
        %v2835 = vadd.f32 %v2771, %v2804
        %v2836 = vadd.f32 %v2772, %v2804
        %v2837 = vadd.f32 %v2773, %v2804
        %v2838 = vadd.f32 %v2774, %v2808
        %v2839 = vadd.f32 %v2775, %v2808
        %v2840 = vadd.f32 %v2776, %v2808
        %v2841 = vadd.f32 %v2777, %v2808
        %v2842 = vadd.f32 %v2778, %v2812
        %v2843 = vadd.f32 %v2779, %v2812
        %v2844 = vadd.f32 %v2780, %v2812
        %v2845 = vadd.f32 %v2781, %v2812
        %v2846 = vtanh.pop %v2814
        %v2847 = vtanh.pop %v2815
        %v2848 = vtanh.pop %v2816
        %v2849 = vtanh.pop %v2817
        %v2850 = vtanh.pop %v2818
        %v2851 = vtanh.pop %v2819
        %v2852 = vtanh.pop %v2820
        %v2853 = vtanh.pop %v2821
        %v2854 = vtanh.pop %v2822
        %v2855 = vtanh.pop %v2823
        %v2856 = vtanh.pop %v2824
        %v2857 = vtanh.pop %v2825
        %v2858 = vtanh.pop %v2826
        %v2859 = vtanh.pop %v2827
        %v2860 = vtanh.pop %v2828
        %v2861 = vtanh.pop %v2829
        %v2862 = vtanh.pop %v2830
        %v2863 = vtanh.pop %v2831
        %v2864 = vtanh.pop %v2832
        %v2865 = vtanh.pop %v2833
        %v2866 = vtanh.pop %v2834
        %v2867 = vtanh.pop %v2835
        %v2868 = vtanh.pop %v2836
        %v2869 = vtanh.pop %v2837
        %v2870 = vtanh.pop %v2838
        %v2871 = vtanh.pop %v2839
        %v2872 = vtanh.pop %v2840
        %v2873 = vtanh.pop %v2841
        %v2874 = vtanh.pop %v2842
        %v2875 = vtanh.pop %v2843
        %v2876 = vtanh.pop %v2844
        %v2877 = vtanh.pop %v2845
        %s2878 = scalar_lea.vmem [#allocation2], 192
        %v2879 = vld [vmem:[%s2878] sm:$0xf]
        %v2880 = vld [vmem:[%s2878 + $0x4] sm:$0xf]
        %v2881 = vld [vmem:[%s2878 + $0x8] sm:$0xf]
        %v2882 = vld [vmem:[%s2878 + $0xc] sm:$0xf]
        %v2883 = vld [vmem:[%s2878 + $0x10] sm:$0xf]
        %v2884 = vld [vmem:[%s2878 + $0x14] sm:$0xf]
        %v2885 = vld [vmem:[%s2878 + $0x18] sm:$0xf]
        %v2886 = vld [vmem:[%s2878 + $0x1c] sm:$0xf]
        %v2887 = vpack.c.bf16 %v2850, %v2846
        %v2888 = vpack.c.bf16 %v2851, %v2847
        %v2889 = vpack.c.bf16 %v2852, %v2848
        %v2890 = vpack.c.bf16 %v2853, %v2849
        %v2891 = vpack.c.bf16 %v2858, %v2854
        %v2892 = vpack.c.bf16 %v2859, %v2855
        %v2893 = vpack.c.bf16 %v2860, %v2856
        %v2894 = vpack.c.bf16 %v2861, %v2857
        %v2895 = vpack.c.bf16 %v2866, %v2862
        %v2896 = vpack.c.bf16 %v2867, %v2863
        %v2897 = vpack.c.bf16 %v2868, %v2864
        %v2898 = vpack.c.bf16 %v2869, %v2865
        %v2899 = vpack.c.bf16 %v2874, %v2870
        %v2900 = vpack.c.bf16 %v2875, %v2871
        %v2901 = vpack.c.bf16 %v2876, %v2872
        %v2902 = vpack.c.bf16 %v2877, %v2873
        %2903 = vset.pattern.permute.xlu0 3
        %2904 = vperm.xlu0 %2903, %v2602
        %v2905 = vpop.permute.xlu0 %2904
        %2907 = vset.pattern.permute.xlu0 3
        %2908 = vperm.xlu0 %2907, %v2603
        %v2909 = vpop.permute.xlu0 %2908
        %2911 = vset.pattern.permute.xlu0 3
        %2912 = vperm.xlu0 %2911, %v2604
        %v2913 = vpop.permute.xlu0 %2912
        %2915 = vset.pattern.permute.xlu0 3
        %2916 = vperm.xlu0 %2915, %v2605
        %v2917 = vpop.permute.xlu0 %2916
        %2919 = vset.pattern.permute.xlu0 3
        %2920 = vperm.xlu0 %2919, %v2606
        %v2921 = vpop.permute.xlu0 %2920
        %2923 = vset.pattern.permute.xlu0 3
        %2924 = vperm.xlu0 %2923, %v2607
        %v2925 = vpop.permute.xlu0 %2924
        %2927 = vset.pattern.permute.xlu0 3
        %2928 = vperm.xlu0 %2927, %v2608
        %v2929 = vpop.permute.xlu0 %2928
        %2931 = vset.pattern.permute.xlu0 3
        %2932 = vperm.xlu0 %2931, %v2609
        %v2933 = vpop.permute.xlu0 %2932
        %v2943 = vunpack.c.l.b16 %v2879
        %v2944 = vunpack.c.l.b16 %v2880
        %v2945 = vunpack.c.l.b16 %v2881
        %v2946 = vunpack.c.l.b16 %v2882
        %v2947 = vunpack.c.l.b16 %v2883
        %v2948 = vunpack.c.l.b16 %v2884
        %v2949 = vunpack.c.l.b16 %v2885
        %v2950 = vunpack.c.l.b16 %v2886
        %v2951 = vpack.c.b16 %v2944, %v2943
        %v2952 = vpack.c.b16 %v2946, %v2945
        %v2953 = vpack.c.b16 %v2948, %v2947
        %v2954 = vpack.c.b16 %v2950, %v2949
        %v2956 = vsel %vm605, %v2951, 0
        %v2959 = vsel %vm605, %v2952, 0
        %v2962 = vsel %vm605, %v2953, 0
        %v2965 = vsel %vm605, %v2954, 0
        %2967 = vmatpush.bf16.msra.mxu0 0
        %2968 = vmatpush.bf16.msra.mxu0 0
        %2969 = vmatpush.bf16.msra.mxu0 0
        %2970 = vmatpush.bf16.msra.mxu0 0
        %2971 = vmatpush.bf16.msra.mxu0 %v2899
        %2972 = vmatpush.bf16.msra.mxu0 %v2895
        %2973 = vmatpush.bf16.msra.mxu0 %v2891
        %2974 = vmatpush.bf16.msra.mxu0 %v2887
        %2975 = vmatmul.bf16.gmra.mxu0 %v2956
        %v2976 = vpop.f32.mrf.mxu0
        %v2977 = vadd.f32 %v2905, %v2976
        %v2978 = vpop.f32.mrf.mxu0
        %v2979 = vadd.f32 %v2909, %v2978
        %2980 = vmatmul.bf16.gmra.mxu0 %v2959
        %v2981 = vpop.f32.mrf.mxu0
        %v2982 = vadd.f32 %v2913, %v2981
        %v2983 = vpop.f32.mrf.mxu0
        %v2984 = vadd.f32 %v2917, %v2983
        %2985 = vmatmul.bf16.gmra.mxu0 %v2962
        %v2986 = vpop.f32.mrf.mxu0
        %v2987 = vadd.f32 %v2921, %v2986
        %v2988 = vpop.f32.mrf.mxu0
        %v2989 = vadd.f32 %v2925, %v2988
        %2990 = vmatmul.bf16.gmra.mxu0 %v2965
        %v2991 = vpop.f32.mrf.mxu0
        %v2992 = vadd.f32 %v2929, %v2991
        %v2993 = vpop.f32.mrf.mxu0
        %v2994 = vadd.f32 %v2933, %v2993
        %2995 = vdwg.mxu0
        %2996 = vmatpush.bf16.msra.mxu0 0
        %2997 = vmatpush.bf16.msra.mxu0 0
        %2998 = vmatpush.bf16.msra.mxu0 0
        %2999 = vmatpush.bf16.msra.mxu0 0
        %3000 = vmatpush.bf16.msra.mxu0 %v2900
        %3001 = vmatpush.bf16.msra.mxu0 %v2896
        %3002 = vmatpush.bf16.msra.mxu0 %v2892
        %3003 = vmatpush.bf16.msra.mxu0 %v2888
        %3004 = vmatmul.bf16.gmra.mxu0 %v2956
        %v3005 = vpop.f32.mrf.mxu0
        %v3006 = vadd.f32 %v2905, %v3005
        %v3007 = vpop.f32.mrf.mxu0
        %v3008 = vadd.f32 %v2909, %v3007
        %3009 = vmatmul.bf16.gmra.mxu0 %v2959
        %v3010 = vpop.f32.mrf.mxu0
        %v3011 = vadd.f32 %v2913, %v3010
        %v3012 = vpop.f32.mrf.mxu0
        %v3013 = vadd.f32 %v2917, %v3012
        %3014 = vmatmul.bf16.gmra.mxu0 %v2962
        %v3015 = vpop.f32.mrf.mxu0
        %v3016 = vadd.f32 %v2921, %v3015
        %v3017 = vpop.f32.mrf.mxu0
        %v3018 = vadd.f32 %v2925, %v3017
        %3019 = vmatmul.bf16.gmra.mxu0 %v2965
        %v3020 = vpop.f32.mrf.mxu0
        %v3021 = vadd.f32 %v2929, %v3020
        %v3022 = vpop.f32.mrf.mxu0
        %v3023 = vadd.f32 %v2933, %v3022
        %3024 = vdwg.mxu0
        %3025 = vmatpush.bf16.msra.mxu0 0
        %3026 = vmatpush.bf16.msra.mxu0 0
        %3027 = vmatpush.bf16.msra.mxu0 0
        %3028 = vmatpush.bf16.msra.mxu0 0
        %3029 = vmatpush.bf16.msra.mxu0 %v2901
        %3030 = vmatpush.bf16.msra.mxu0 %v2897
        %3031 = vmatpush.bf16.msra.mxu0 %v2893
        %3032 = vmatpush.bf16.msra.mxu0 %v2889
        %3033 = vmatmul.bf16.gmra.mxu0 %v2956
        %v3034 = vpop.f32.mrf.mxu0
        %v3035 = vadd.f32 %v2905, %v3034
        %v3036 = vpop.f32.mrf.mxu0
        %v3037 = vadd.f32 %v2909, %v3036
        %3038 = vmatmul.bf16.gmra.mxu0 %v2959
        %v3039 = vpop.f32.mrf.mxu0
        %v3040 = vadd.f32 %v2913, %v3039
        %v3041 = vpop.f32.mrf.mxu0
        %v3042 = vadd.f32 %v2917, %v3041
        %3043 = vmatmul.bf16.gmra.mxu0 %v2962
        %v3044 = vpop.f32.mrf.mxu0
        %v3045 = vadd.f32 %v2921, %v3044
        %v3046 = vpop.f32.mrf.mxu0
        %v3047 = vadd.f32 %v2925, %v3046
        %3048 = vmatmul.bf16.gmra.mxu0 %v2965
        %v3049 = vpop.f32.mrf.mxu0
        %v3050 = vadd.f32 %v2929, %v3049
        %v3051 = vpop.f32.mrf.mxu0
        %v3052 = vadd.f32 %v2933, %v3051
        %3053 = vdwg.mxu0
        %3054 = vmatpush.bf16.msra.mxu0 0
        %3055 = vmatpush.bf16.msra.mxu0 0
        %3056 = vmatpush.bf16.msra.mxu0 0
        %3057 = vmatpush.bf16.msra.mxu0 0
        %3058 = vmatpush.bf16.msra.mxu0 %v2902
        %3059 = vmatpush.bf16.msra.mxu0 %v2898
        %3060 = vmatpush.bf16.msra.mxu0 %v2894
        %3061 = vmatpush.bf16.msra.mxu0 %v2890
        %3062 = vmatmul.bf16.gmra.mxu0 %v2956
        %v3063 = vpop.f32.mrf.mxu0
        %v3064 = vadd.f32 %v2905, %v3063
        %v3065 = vpop.f32.mrf.mxu0
        %v3066 = vadd.f32 %v2909, %v3065
        %3067 = vmatmul.bf16.gmra.mxu0 %v2959
        %v3068 = vpop.f32.mrf.mxu0
        %v3069 = vadd.f32 %v2913, %v3068
        %v3070 = vpop.f32.mrf.mxu0
        %v3071 = vadd.f32 %v2917, %v3070
        %3072 = vmatmul.bf16.gmra.mxu0 %v2962
        %v3073 = vpop.f32.mrf.mxu0
        %v3074 = vadd.f32 %v2921, %v3073
        %v3075 = vpop.f32.mrf.mxu0
        %v3076 = vadd.f32 %v2925, %v3075
        %3077 = vmatmul.bf16.gmra.mxu0 %v2965
        %v3078 = vpop.f32.mrf.mxu0
        %v3079 = vadd.f32 %v2929, %v3078
        %v3080 = vpop.f32.mrf.mxu0
        %v3081 = vadd.f32 %v2933, %v3080
        %3082 = vdwg.mxu0
        %v3083 = vtanh.pop %v2977
        %v3084 = vtanh.pop %v3006
        %v3085 = vtanh.pop %v3035
        %v3086 = vtanh.pop %v3064
        %v3087 = vtanh.pop %v2979
        %v3088 = vtanh.pop %v3008
        %v3089 = vtanh.pop %v3037
        %v3090 = vtanh.pop %v3066
        %v3091 = vtanh.pop %v2982
        %v3092 = vtanh.pop %v3011
        %v3093 = vtanh.pop %v3040
        %v3094 = vtanh.pop %v3069
        %v3095 = vtanh.pop %v2984
        %v3096 = vtanh.pop %v3013
        %v3097 = vtanh.pop %v3042
        %v3098 = vtanh.pop %v3071
        %v3099 = vtanh.pop %v2987
        %v3100 = vtanh.pop %v3016
        %v3101 = vtanh.pop %v3045
        %v3102 = vtanh.pop %v3074
        %v3103 = vtanh.pop %v2989
        %v3104 = vtanh.pop %v3018
        %v3105 = vtanh.pop %v3047
        %v3106 = vtanh.pop %v3076
        %v3107 = vtanh.pop %v2992
        %v3108 = vtanh.pop %v3021
        %v3109 = vtanh.pop %v3050
        %v3110 = vtanh.pop %v3079
        %v3111 = vtanh.pop %v2994
        %v3112 = vtanh.pop %v3023
        %v3113 = vtanh.pop %v3052
        %v3114 = vtanh.pop %v3081
        %s3115 = scalar_lea.vmem [#allocation2], 224
        %v3116 = vld [vmem:[%s3115] sm:$0xf]
        %v3117 = vld [vmem:[%s3115 + $0x4] sm:$0xf]
        %v3118 = vld [vmem:[%s3115 + $0x8] sm:$0xf]
        %v3119 = vld [vmem:[%s3115 + $0xc] sm:$0xf]
        %v3120 = vld [vmem:[%s3115 + $0x10] sm:$0xf]
        %v3121 = vld [vmem:[%s3115 + $0x14] sm:$0xf]
        %v3122 = vld [vmem:[%s3115 + $0x18] sm:$0xf]
        %v3123 = vld [vmem:[%s3115 + $0x1c] sm:$0xf]
        %v3124 = vpack.c.bf16 %v3087, %v3083
        %v3125 = vpack.c.bf16 %v3088, %v3084
        %v3126 = vpack.c.bf16 %v3089, %v3085
        %v3127 = vpack.c.bf16 %v3090, %v3086
        %v3128 = vpack.c.bf16 %v3095, %v3091
        %v3129 = vpack.c.bf16 %v3096, %v3092
        %v3130 = vpack.c.bf16 %v3097, %v3093
        %v3131 = vpack.c.bf16 %v3098, %v3094
        %v3132 = vpack.c.bf16 %v3103, %v3099
        %v3133 = vpack.c.bf16 %v3104, %v3100
        %v3134 = vpack.c.bf16 %v3105, %v3101
        %v3135 = vpack.c.bf16 %v3106, %v3102
        %v3136 = vpack.c.bf16 %v3111, %v3107
        %v3137 = vpack.c.bf16 %v3112, %v3108
        %v3138 = vpack.c.bf16 %v3113, %v3109
        %v3139 = vpack.c.bf16 %v3114, %v3110
        %3140 = vset.pattern.permute.xlu0 4
        %3141 = vperm.xlu0 %3140, %v2602
        %v3142 = vpop.permute.xlu0 %3141
        %3144 = vset.pattern.permute.xlu0 4
        %3145 = vperm.xlu0 %3144, %v2603
        %v3146 = vpop.permute.xlu0 %3145
        %3148 = vset.pattern.permute.xlu0 4
        %3149 = vperm.xlu0 %3148, %v2604
        %v3150 = vpop.permute.xlu0 %3149
        %3152 = vset.pattern.permute.xlu0 4
        %3153 = vperm.xlu0 %3152, %v2605
        %v3154 = vpop.permute.xlu0 %3153
        %3156 = vset.pattern.permute.xlu0 4
        %3157 = vperm.xlu0 %3156, %v2606
        %v3158 = vpop.permute.xlu0 %3157
        %3160 = vset.pattern.permute.xlu0 4
        %3161 = vperm.xlu0 %3160, %v2607
        %v3162 = vpop.permute.xlu0 %3161
        %3164 = vset.pattern.permute.xlu0 4
        %3165 = vperm.xlu0 %3164, %v2608
        %v3166 = vpop.permute.xlu0 %3165
        %3168 = vset.pattern.permute.xlu0 4
        %3169 = vperm.xlu0 %3168, %v2609
        %v3170 = vpop.permute.xlu0 %3169
        %v3180 = vunpack.c.l.b16 %v3116
        %v3181 = vunpack.c.l.b16 %v3117
        %v3182 = vunpack.c.l.b16 %v3118
        %v3183 = vunpack.c.l.b16 %v3119
        %v3184 = vunpack.c.l.b16 %v3120
        %v3185 = vunpack.c.l.b16 %v3121
        %v3186 = vunpack.c.l.b16 %v3122
        %v3187 = vunpack.c.l.b16 %v3123
        %v3188 = vpack.c.b16 %v3181, %v3180
        %v3189 = vpack.c.b16 %v3183, %v3182
        %v3190 = vpack.c.b16 %v3185, %v3184
        %v3191 = vpack.c.b16 %v3187, %v3186
        %v3193 = vsel %vm605, %v3188, 0
        %v3196 = vsel %vm605, %v3189, 0
        %v3199 = vsel %vm605, %v3190, 0
        %v3202 = vsel %vm605, %v3191, 0
        %3204 = vmatpush.bf16.msra.mxu0 0
        %3205 = vmatpush.bf16.msra.mxu0 0
        %3206 = vmatpush.bf16.msra.mxu0 0
        %3207 = vmatpush.bf16.msra.mxu0 0
        %3208 = vmatpush.bf16.msra.mxu0 %v3136
        %3209 = vmatpush.bf16.msra.mxu0 %v3132
        %3210 = vmatpush.bf16.msra.mxu0 %v3128
        %3211 = vmatpush.bf16.msra.mxu0 %v3124
        %3212 = vmatmul.bf16.gmra.mxu0 %v3193
        %v3213 = vpop.f32.mrf.mxu0
        %v3214 = vadd.f32 %v3142, %v3213
        %v3215 = vpop.f32.mrf.mxu0
        %v3216 = vadd.f32 %v3146, %v3215
        %3217 = vmatmul.bf16.gmra.mxu0 %v3196
        %v3218 = vpop.f32.mrf.mxu0
        %v3219 = vadd.f32 %v3150, %v3218
        %v3220 = vpop.f32.mrf.mxu0
        %v3221 = vadd.f32 %v3154, %v3220
        %3222 = vmatmul.bf16.gmra.mxu0 %v3199
        %v3223 = vpop.f32.mrf.mxu0
        %v3224 = vadd.f32 %v3158, %v3223
        %v3225 = vpop.f32.mrf.mxu0
        %v3226 = vadd.f32 %v3162, %v3225
        %3227 = vmatmul.bf16.gmra.mxu0 %v3202
        %v3228 = vpop.f32.mrf.mxu0
        %v3229 = vadd.f32 %v3166, %v3228
        %v3230 = vpop.f32.mrf.mxu0
        %v3231 = vadd.f32 %v3170, %v3230
        %3232 = vdwg.mxu0
        %3233 = vmatpush.bf16.msra.mxu0 0
        %3234 = vmatpush.bf16.msra.mxu0 0
        %3235 = vmatpush.bf16.msra.mxu0 0
        %3236 = vmatpush.bf16.msra.mxu0 0
        %3237 = vmatpush.bf16.msra.mxu0 %v3137
        %3238 = vmatpush.bf16.msra.mxu0 %v3133
        %3239 = vmatpush.bf16.msra.mxu0 %v3129
        %3240 = vmatpush.bf16.msra.mxu0 %v3125
        %3241 = vmatmul.bf16.gmra.mxu0 %v3193
        %v3242 = vpop.f32.mrf.mxu0
        %v3243 = vadd.f32 %v3142, %v3242
        %v3244 = vpop.f32.mrf.mxu0
        %v3245 = vadd.f32 %v3146, %v3244
        %3246 = vmatmul.bf16.gmra.mxu0 %v3196
        %v3247 = vpop.f32.mrf.mxu0
        %v3248 = vadd.f32 %v3150, %v3247
        %v3249 = vpop.f32.mrf.mxu0
        %v3250 = vadd.f32 %v3154, %v3249
        %3251 = vmatmul.bf16.gmra.mxu0 %v3199
        %v3252 = vpop.f32.mrf.mxu0
        %v3253 = vadd.f32 %v3158, %v3252
        %v3254 = vpop.f32.mrf.mxu0
        %v3255 = vadd.f32 %v3162, %v3254
        %3256 = vmatmul.bf16.gmra.mxu0 %v3202
        %v3257 = vpop.f32.mrf.mxu0
        %v3258 = vadd.f32 %v3166, %v3257
        %v3259 = vpop.f32.mrf.mxu0
        %v3260 = vadd.f32 %v3170, %v3259
        %3261 = vdwg.mxu0
        %3262 = vmatpush.bf16.msra.mxu0 0
        %3263 = vmatpush.bf16.msra.mxu0 0
        %3264 = vmatpush.bf16.msra.mxu0 0
        %3265 = vmatpush.bf16.msra.mxu0 0
        %3266 = vmatpush.bf16.msra.mxu0 %v3138
        %3267 = vmatpush.bf16.msra.mxu0 %v3134
        %3268 = vmatpush.bf16.msra.mxu0 %v3130
        %3269 = vmatpush.bf16.msra.mxu0 %v3126
        %3270 = vmatmul.bf16.gmra.mxu0 %v3193
        %v3271 = vpop.f32.mrf.mxu0
        %v3272 = vadd.f32 %v3142, %v3271
        %v3273 = vpop.f32.mrf.mxu0
        %v3274 = vadd.f32 %v3146, %v3273
        %3275 = vmatmul.bf16.gmra.mxu0 %v3196
        %v3276 = vpop.f32.mrf.mxu0
        %v3277 = vadd.f32 %v3150, %v3276
        %v3278 = vpop.f32.mrf.mxu0
        %v3279 = vadd.f32 %v3154, %v3278
        %3280 = vmatmul.bf16.gmra.mxu0 %v3199
        %v3281 = vpop.f32.mrf.mxu0
        %v3282 = vadd.f32 %v3158, %v3281
        %v3283 = vpop.f32.mrf.mxu0
        %v3284 = vadd.f32 %v3162, %v3283
        %3285 = vmatmul.bf16.gmra.mxu0 %v3202
        %v3286 = vpop.f32.mrf.mxu0
        %v3287 = vadd.f32 %v3166, %v3286
        %v3288 = vpop.f32.mrf.mxu0
        %v3289 = vadd.f32 %v3170, %v3288
        %3290 = vdwg.mxu0
        %3291 = vmatpush.bf16.msra.mxu0 0
        %3292 = vmatpush.bf16.msra.mxu0 0
        %3293 = vmatpush.bf16.msra.mxu0 0
        %3294 = vmatpush.bf16.msra.mxu0 0
        %3295 = vmatpush.bf16.msra.mxu0 %v3139
        %3296 = vmatpush.bf16.msra.mxu0 %v3135
        %3297 = vmatpush.bf16.msra.mxu0 %v3131
        %3298 = vmatpush.bf16.msra.mxu0 %v3127
        %3299 = vmatmul.bf16.gmra.mxu0 %v3193
        %v3300 = vpop.f32.mrf.mxu0
        %v3301 = vadd.f32 %v3142, %v3300
        %v3302 = vpop.f32.mrf.mxu0
        %v3303 = vadd.f32 %v3146, %v3302
        %3304 = vmatmul.bf16.gmra.mxu0 %v3196
        %v3305 = vpop.f32.mrf.mxu0
        %v3306 = vadd.f32 %v3150, %v3305
        %v3307 = vpop.f32.mrf.mxu0
        %v3308 = vadd.f32 %v3154, %v3307
        %3309 = vmatmul.bf16.gmra.mxu0 %v3199
        %v3310 = vpop.f32.mrf.mxu0
        %v3311 = vadd.f32 %v3158, %v3310
        %v3312 = vpop.f32.mrf.mxu0
        %v3313 = vadd.f32 %v3162, %v3312
        %3314 = vmatmul.bf16.gmra.mxu0 %v3202
        %v3315 = vpop.f32.mrf.mxu0
        %v3316 = vadd.f32 %v3166, %v3315
        %v3317 = vpop.f32.mrf.mxu0
        %v3318 = vadd.f32 %v3170, %v3317
        %3319 = vdwg.mxu0
        %v3320 = vtanh.pop %v3214
        %v3321 = vtanh.pop %v3243
        %v3322 = vtanh.pop %v3272
        %v3323 = vtanh.pop %v3301
        %v3324 = vtanh.pop %v3216
        %v3325 = vtanh.pop %v3245
        %v3326 = vtanh.pop %v3274
        %v3327 = vtanh.pop %v3303
        %v3328 = vtanh.pop %v3219
        %v3329 = vtanh.pop %v3248
        %v3330 = vtanh.pop %v3277
        %v3331 = vtanh.pop %v3306
        %v3332 = vtanh.pop %v3221
        %v3333 = vtanh.pop %v3250
        %v3334 = vtanh.pop %v3279
        %v3335 = vtanh.pop %v3308
        %v3336 = vtanh.pop %v3224
        %v3337 = vtanh.pop %v3253
        %v3338 = vtanh.pop %v3282
        %v3339 = vtanh.pop %v3311
        %v3340 = vtanh.pop %v3226
        %v3341 = vtanh.pop %v3255
        %v3342 = vtanh.pop %v3284
        %v3343 = vtanh.pop %v3313
        %v3344 = vtanh.pop %v3229
        %v3345 = vtanh.pop %v3258
        %v3346 = vtanh.pop %v3287
        %v3347 = vtanh.pop %v3316
        %v3348 = vtanh.pop %v3231
        %v3349 = vtanh.pop %v3260
        %v3350 = vtanh.pop %v3289
        %v3351 = vtanh.pop %v3318
        %s3352 = scalar_lea.vmem [#allocation2], 256
        %v3353 = vld [vmem:[%s3352] sm:$0xf]
        %v3354 = vld [vmem:[%s3352 + $0x4] sm:$0xf]
        %v3355 = vld [vmem:[%s3352 + $0x8] sm:$0xf]
        %v3356 = vld [vmem:[%s3352 + $0xc] sm:$0xf]
        %v3357 = vld [vmem:[%s3352 + $0x10] sm:$0xf]
        %v3358 = vld [vmem:[%s3352 + $0x14] sm:$0xf]
        %v3359 = vld [vmem:[%s3352 + $0x18] sm:$0xf]
        %v3360 = vld [vmem:[%s3352 + $0x1c] sm:$0xf]
        %v3361 = vpack.c.bf16 %v3324, %v3320
        %v3362 = vpack.c.bf16 %v3325, %v3321
        %v3363 = vpack.c.bf16 %v3326, %v3322
        %v3364 = vpack.c.bf16 %v3327, %v3323
        %v3365 = vpack.c.bf16 %v3332, %v3328
        %v3366 = vpack.c.bf16 %v3333, %v3329
        %v3367 = vpack.c.bf16 %v3334, %v3330
        %v3368 = vpack.c.bf16 %v3335, %v3331
        %v3369 = vpack.c.bf16 %v3340, %v3336
        %v3370 = vpack.c.bf16 %v3341, %v3337
        %v3371 = vpack.c.bf16 %v3342, %v3338
        %v3372 = vpack.c.bf16 %v3343, %v3339
        %v3373 = vpack.c.bf16 %v3348, %v3344
        %v3374 = vpack.c.bf16 %v3349, %v3345
        %v3375 = vpack.c.bf16 %v3350, %v3346
        %v3376 = vpack.c.bf16 %v3351, %v3347
        %3377 = vset.pattern.permute.xlu0 5
        %3378 = vperm.xlu0 %3377, %v2602
        %v3379 = vpop.permute.xlu0 %3378
        %3381 = vset.pattern.permute.xlu0 5
        %3382 = vperm.xlu0 %3381, %v2603
        %v3383 = vpop.permute.xlu0 %3382
        %3385 = vset.pattern.permute.xlu0 5
        %3386 = vperm.xlu0 %3385, %v2604
        %v3387 = vpop.permute.xlu0 %3386
        %3389 = vset.pattern.permute.xlu0 5
        %3390 = vperm.xlu0 %3389, %v2605
        %v3391 = vpop.permute.xlu0 %3390
        %3393 = vset.pattern.permute.xlu0 5
        %3394 = vperm.xlu0 %3393, %v2606
        %v3395 = vpop.permute.xlu0 %3394
        %3397 = vset.pattern.permute.xlu0 5
        %3398 = vperm.xlu0 %3397, %v2607
        %v3399 = vpop.permute.xlu0 %3398
        %3401 = vset.pattern.permute.xlu0 5
        %3402 = vperm.xlu0 %3401, %v2608
        %v3403 = vpop.permute.xlu0 %3402
        %3405 = vset.pattern.permute.xlu0 5
        %3406 = vperm.xlu0 %3405, %v2609
        %v3407 = vpop.permute.xlu0 %3406
        %v3417 = vunpack.c.l.b16 %v3353
        %v3418 = vunpack.c.l.b16 %v3354
        %v3419 = vunpack.c.l.b16 %v3355
        %v3420 = vunpack.c.l.b16 %v3356
        %v3421 = vunpack.c.l.b16 %v3357
        %v3422 = vunpack.c.l.b16 %v3358
        %v3423 = vunpack.c.l.b16 %v3359
        %v3424 = vunpack.c.l.b16 %v3360
        %v3425 = vpack.c.b16 %v3418, %v3417
        %v3426 = vpack.c.b16 %v3420, %v3419
        %v3427 = vpack.c.b16 %v3422, %v3421
        %v3428 = vpack.c.b16 %v3424, %v3423
        %v3430 = vsel %vm605, %v3425, 0
        %v3433 = vsel %vm605, %v3426, 0
        %v3436 = vsel %vm605, %v3427, 0
        %v3439 = vsel %vm605, %v3428, 0
        %3441 = vmatpush.bf16.msra.mxu0 0
        %3442 = vmatpush.bf16.msra.mxu0 0
        %3443 = vmatpush.bf16.msra.mxu0 0
        %3444 = vmatpush.bf16.msra.mxu0 0
        %3445 = vmatpush.bf16.msra.mxu0 %v3373
        %3446 = vmatpush.bf16.msra.mxu0 %v3369
        %3447 = vmatpush.bf16.msra.mxu0 %v3365
        %3448 = vmatpush.bf16.msra.mxu0 %v3361
        %3449 = vmatmul.bf16.gmra.mxu0 %v3430
        %v3450 = vpop.f32.mrf.mxu0
        %v3451 = vadd.f32 %v3379, %v3450
        %v3452 = vpop.f32.mrf.mxu0
        %v3453 = vadd.f32 %v3383, %v3452
        %3454 = vmatmul.bf16.gmra.mxu0 %v3433
        %v3455 = vpop.f32.mrf.mxu0
        %v3456 = vadd.f32 %v3387, %v3455
        %v3457 = vpop.f32.mrf.mxu0
        %v3458 = vadd.f32 %v3391, %v3457
        %3459 = vmatmul.bf16.gmra.mxu0 %v3436
        %v3460 = vpop.f32.mrf.mxu0
        %v3461 = vadd.f32 %v3395, %v3460
        %v3462 = vpop.f32.mrf.mxu0
        %v3463 = vadd.f32 %v3399, %v3462
        %3464 = vmatmul.bf16.gmra.mxu0 %v3439
        %v3465 = vpop.f32.mrf.mxu0
        %v3466 = vadd.f32 %v3403, %v3465
        %v3467 = vpop.f32.mrf.mxu0
        %v3468 = vadd.f32 %v3407, %v3467
        %3469 = vdwg.mxu0
        %3470 = vmatpush.bf16.msra.mxu0 0
        %3471 = vmatpush.bf16.msra.mxu0 0
        %3472 = vmatpush.bf16.msra.mxu0 0
        %3473 = vmatpush.bf16.msra.mxu0 0
        %3474 = vmatpush.bf16.msra.mxu0 %v3374
        %3475 = vmatpush.bf16.msra.mxu0 %v3370
        %3476 = vmatpush.bf16.msra.mxu0 %v3366
        %3477 = vmatpush.bf16.msra.mxu0 %v3362
        %3478 = vmatmul.bf16.gmra.mxu0 %v3430
        %v3479 = vpop.f32.mrf.mxu0
        %v3480 = vadd.f32 %v3379, %v3479
        %v3481 = vpop.f32.mrf.mxu0
        %v3482 = vadd.f32 %v3383, %v3481
        %3483 = vmatmul.bf16.gmra.mxu0 %v3433
        %v3484 = vpop.f32.mrf.mxu0
        %v3485 = vadd.f32 %v3387, %v3484
        %v3486 = vpop.f32.mrf.mxu0
        %v3487 = vadd.f32 %v3391, %v3486
        %3488 = vmatmul.bf16.gmra.mxu0 %v3436
        %v3489 = vpop.f32.mrf.mxu0
        %v3490 = vadd.f32 %v3395, %v3489
        %v3491 = vpop.f32.mrf.mxu0
        %v3492 = vadd.f32 %v3399, %v3491
        %3493 = vmatmul.bf16.gmra.mxu0 %v3439
        %v3494 = vpop.f32.mrf.mxu0
        %v3495 = vadd.f32 %v3403, %v3494
        %v3496 = vpop.f32.mrf.mxu0
        %v3497 = vadd.f32 %v3407, %v3496
        %3498 = vdwg.mxu0
        %3499 = vmatpush.bf16.msra.mxu0 0
        %3500 = vmatpush.bf16.msra.mxu0 0
        %3501 = vmatpush.bf16.msra.mxu0 0
        %3502 = vmatpush.bf16.msra.mxu0 0
        %3503 = vmatpush.bf16.msra.mxu0 %v3375
        %3504 = vmatpush.bf16.msra.mxu0 %v3371
        %3505 = vmatpush.bf16.msra.mxu0 %v3367
        %3506 = vmatpush.bf16.msra.mxu0 %v3363
        %3507 = vmatmul.bf16.gmra.mxu0 %v3430
        %v3508 = vpop.f32.mrf.mxu0
        %v3509 = vadd.f32 %v3379, %v3508
        %v3510 = vpop.f32.mrf.mxu0
        %v3511 = vadd.f32 %v3383, %v3510
        %3512 = vmatmul.bf16.gmra.mxu0 %v3433
        %v3513 = vpop.f32.mrf.mxu0
        %v3514 = vadd.f32 %v3387, %v3513
        %v3515 = vpop.f32.mrf.mxu0
        %v3516 = vadd.f32 %v3391, %v3515
        %3517 = vmatmul.bf16.gmra.mxu0 %v3436
        %v3518 = vpop.f32.mrf.mxu0
        %v3519 = vadd.f32 %v3395, %v3518
        %v3520 = vpop.f32.mrf.mxu0
        %v3521 = vadd.f32 %v3399, %v3520
        %3522 = vmatmul.bf16.gmra.mxu0 %v3439
        %v3523 = vpop.f32.mrf.mxu0
        %v3524 = vadd.f32 %v3403, %v3523
        %v3525 = vpop.f32.mrf.mxu0
        %v3526 = vadd.f32 %v3407, %v3525
        %3527 = vdwg.mxu0
        %3528 = vmatpush.bf16.msra.mxu0 0
        %3529 = vmatpush.bf16.msra.mxu0 0
        %3530 = vmatpush.bf16.msra.mxu0 0
        %3531 = vmatpush.bf16.msra.mxu0 0
        %3532 = vmatpush.bf16.msra.mxu0 %v3376
        %3533 = vmatpush.bf16.msra.mxu0 %v3372
        %3534 = vmatpush.bf16.msra.mxu0 %v3368
        %3535 = vmatpush.bf16.msra.mxu0 %v3364
        %3536 = vmatmul.bf16.gmra.mxu0 %v3430
        %v3537 = vpop.f32.mrf.mxu0
        %v3538 = vadd.f32 %v3379, %v3537
        %v3539 = vpop.f32.mrf.mxu0
        %v3540 = vadd.f32 %v3383, %v3539
        %3541 = vmatmul.bf16.gmra.mxu0 %v3433
        %v3542 = vpop.f32.mrf.mxu0
        %v3543 = vadd.f32 %v3387, %v3542
        %v3544 = vpop.f32.mrf.mxu0
        %v3545 = vadd.f32 %v3391, %v3544
        %3546 = vmatmul.bf16.gmra.mxu0 %v3436
        %v3547 = vpop.f32.mrf.mxu0
        %v3548 = vadd.f32 %v3395, %v3547
        %v3549 = vpop.f32.mrf.mxu0
        %v3550 = vadd.f32 %v3399, %v3549
        %3551 = vmatmul.bf16.gmra.mxu0 %v3439
        %v3552 = vpop.f32.mrf.mxu0
        %v3553 = vadd.f32 %v3403, %v3552
        %v3554 = vpop.f32.mrf.mxu0
        %v3555 = vadd.f32 %v3407, %v3554
        %3556 = vdwg.mxu0
        %v3557 = vtanh.pop %v3451
        %v3558 = vtanh.pop %v3480
        %v3559 = vtanh.pop %v3509
        %v3560 = vtanh.pop %v3538
        %v3561 = vtanh.pop %v3453
        %v3562 = vtanh.pop %v3482
        %v3563 = vtanh.pop %v3511
        %v3564 = vtanh.pop %v3540
        %v3565 = vtanh.pop %v3456
        %v3566 = vtanh.pop %v3485
        %v3567 = vtanh.pop %v3514
        %v3568 = vtanh.pop %v3543
        %v3569 = vtanh.pop %v3458
        %v3570 = vtanh.pop %v3487
        %v3571 = vtanh.pop %v3516
        %v3572 = vtanh.pop %v3545
        %v3573 = vtanh.pop %v3461
        %v3574 = vtanh.pop %v3490
        %v3575 = vtanh.pop %v3519
        %v3576 = vtanh.pop %v3548
        %v3577 = vtanh.pop %v3463
        %v3578 = vtanh.pop %v3492
        %v3579 = vtanh.pop %v3521
        %v3580 = vtanh.pop %v3550
        %v3581 = vtanh.pop %v3466
        %v3582 = vtanh.pop %v3495
        %v3583 = vtanh.pop %v3524
        %v3584 = vtanh.pop %v3553
        %v3585 = vtanh.pop %v3468
        %v3586 = vtanh.pop %v3497
        %v3587 = vtanh.pop %v3526
        %v3588 = vtanh.pop %v3555
        %3589 = vset.pattern.permute.xlu0 6
        %3590 = vperm.xlu0 %3589, %v2602
        %v3591 = vpop.permute.xlu0 %3590
        %3593 = vset.pattern.permute.xlu0 6
        %3594 = vperm.xlu0 %3593, %v2603
        %v3595 = vpop.permute.xlu0 %3594
        %3597 = vset.pattern.permute.xlu0 6
        %3598 = vperm.xlu0 %3597, %v2604
        %v3599 = vpop.permute.xlu0 %3598
        %3601 = vset.pattern.permute.xlu0 6
        %3602 = vperm.xlu0 %3601, %v2605
        %v3603 = vpop.permute.xlu0 %3602
        %3605 = vset.pattern.permute.xlu0 6
        %3606 = vperm.xlu0 %3605, %v2606
        %v3607 = vpop.permute.xlu0 %3606
        %3609 = vset.pattern.permute.xlu0 6
        %3610 = vperm.xlu0 %3609, %v2607
        %v3611 = vpop.permute.xlu0 %3610
        %3613 = vset.pattern.permute.xlu0 6
        %3614 = vperm.xlu0 %3613, %v2608
        %v3615 = vpop.permute.xlu0 %3614
        %3617 = vset.pattern.permute.xlu0 6
        %3618 = vperm.xlu0 %3617, %v2609
        %v3619 = vpop.permute.xlu0 %3618
        %v3621 = vmul.f32 %v3557, %v3591
        %v3622 = vmul.f32 %v3558, %v3591
        %v3623 = vmul.f32 %v3559, %v3591
        %v3624 = vmul.f32 %v3560, %v3591
        %v3625 = vmul.f32 %v3561, %v3595
        %v3626 = vmul.f32 %v3562, %v3595
        %v3627 = vmul.f32 %v3563, %v3595
        %v3628 = vmul.f32 %v3564, %v3595
        %v3629 = vmul.f32 %v3565, %v3599
        %v3630 = vmul.f32 %v3566, %v3599
        %v3631 = vmul.f32 %v3567, %v3599
        %v3632 = vmul.f32 %v3568, %v3599
        %v3633 = vmul.f32 %v3569, %v3603
        %v3634 = vmul.f32 %v3570, %v3603
        %v3635 = vmul.f32 %v3571, %v3603
        %v3636 = vmul.f32 %v3572, %v3603
        %v3637 = vmul.f32 %v3573, %v3607
        %v3638 = vmul.f32 %v3574, %v3607
        %v3639 = vmul.f32 %v3575, %v3607
        %v3640 = vmul.f32 %v3576, %v3607
        %v3641 = vmul.f32 %v3577, %v3611
        %v3642 = vmul.f32 %v3578, %v3611
        %v3643 = vmul.f32 %v3579, %v3611
        %v3644 = vmul.f32 %v3580, %v3611
        %v3645 = vmul.f32 %v3581, %v3615
        %v3646 = vmul.f32 %v3582, %v3615
        %v3647 = vmul.f32 %v3583, %v3615
        %v3648 = vmul.f32 %v3584, %v3615
        %v3649 = vmul.f32 %v3585, %v3619
        %v3650 = vmul.f32 %v3586, %v3619
        %v3651 = vmul.f32 %v3587, %v3619
        %v3652 = vmul.f32 %v3588, %v3619
        %v3653 = vadd.f32 %v3621, %v3625
        %v3654 = vadd.f32 %v3653, %v3629
        %v3655 = vadd.f32 %v3654, %v3633
        %v3656 = vrot.slane %v3655, 4
        %v3657 = vadd.f32 %v3655, %v3656
        %v3658 = vrot.slane %v3657, 2
        %v3659 = vadd.f32 %v3657, %v3658
        %v3660 = vrot.slane %v3659, 1
        %v3661 = vadd.f32 %v3659, %v3660
        %v3662 = vadd.f32 %v3622, %v3626
        %v3663 = vadd.f32 %v3662, %v3630
        %v3664 = vadd.f32 %v3663, %v3634
        %v3665 = vrot.slane %v3664, 4
        %v3666 = vadd.f32 %v3664, %v3665
        %v3667 = vrot.slane %v3666, 2
        %v3668 = vadd.f32 %v3666, %v3667
        %v3669 = vrot.slane %v3668, 1
        %v3670 = vadd.f32 %v3668, %v3669
        %v3671 = vadd.f32 %v3623, %v3627
        %v3672 = vadd.f32 %v3671, %v3631
        %v3673 = vadd.f32 %v3672, %v3635
        %v3674 = vrot.slane %v3673, 4
        %v3675 = vadd.f32 %v3673, %v3674
        %v3676 = vrot.slane %v3675, 2
        %v3677 = vadd.f32 %v3675, %v3676
        %v3678 = vrot.slane %v3677, 1
        %v3679 = vadd.f32 %v3677, %v3678
        %v3680 = vadd.f32 %v3624, %v3628
        %v3681 = vadd.f32 %v3680, %v3632
        %v3682 = vadd.f32 %v3681, %v3636
        %v3683 = vrot.slane %v3682, 4
        %v3684 = vadd.f32 %v3682, %v3683
        %v3685 = vrot.slane %v3684, 2
        %v3686 = vadd.f32 %v3684, %v3685
        %v3687 = vrot.slane %v3686, 1
        %v3688 = vadd.f32 %v3686, %v3687
        %3689 = vset.pattern.permute.xlu0 7
        %3690 = vperm.xlu0 %3689, %v2602
        %v3691 = vpop.permute.xlu0 %3690
        %v3693 = vadd.f32 %v3661, %v3691
        %v3694 = vadd.f32 %v3670, %v3691
        %v3695 = vadd.f32 %v3679, %v3691
        %v3696 = vadd.f32 %v3688, %v3691
        %v3697 = vadd.f32 %v3637, %v3641
        %v3698 = vadd.f32 %v3697, %v3645
        %v3699 = vadd.f32 %v3698, %v3649
        %v3700 = vrot.slane %v3699, 4
        %v3701 = vadd.f32 %v3699, %v3700
        %v3702 = vrot.slane %v3701, 2
        %v3703 = vadd.f32 %v3701, %v3702
        %v3704 = vrot.slane %v3703, 1
        %v3705 = vadd.f32 %v3703, %v3704
        %v3706 = vadd.f32 %v3638, %v3642
        %v3707 = vadd.f32 %v3706, %v3646
        %v3708 = vadd.f32 %v3707, %v3650
        %v3709 = vrot.slane %v3708, 4
        %v3710 = vadd.f32 %v3708, %v3709
        %v3711 = vrot.slane %v3710, 2
        %v3712 = vadd.f32 %v3710, %v3711
        %v3713 = vrot.slane %v3712, 1
        %v3714 = vadd.f32 %v3712, %v3713
        %v3715 = vadd.f32 %v3639, %v3643
        %v3716 = vadd.f32 %v3715, %v3647
        %v3717 = vadd.f32 %v3716, %v3651
        %v3718 = vrot.slane %v3717, 4
        %v3719 = vadd.f32 %v3717, %v3718
        %v3720 = vrot.slane %v3719, 2
        %v3721 = vadd.f32 %v3719, %v3720
        %v3722 = vrot.slane %v3721, 1
        %v3723 = vadd.f32 %v3721, %v3722
        %v3724 = vadd.f32 %v3640, %v3644
        %v3725 = vadd.f32 %v3724, %v3648
        %v3726 = vadd.f32 %v3725, %v3652
        %v3727 = vrot.slane %v3726, 4
        %v3728 = vadd.f32 %v3726, %v3727
        %v3729 = vrot.slane %v3728, 2
        %v3730 = vadd.f32 %v3728, %v3729
        %v3731 = vrot.slane %v3730, 1
        %v3732 = vadd.f32 %v3730, %v3731
        %v3733 = vadd.f32 %v3705, %v3691
        %v3734 = vadd.f32 %v3714, %v3691
        %v3735 = vadd.f32 %v3723, %v3691
        %v3736 = vadd.f32 %v3732, %v3691
        %v3737 = vmul.f32 %v3733, 1.442695
        %v3738 = vpow.pop %v3737
        %v3739 = vmul.f32 %v3734, 1.442695
        %v3740 = vpow.pop %v3739
        %v3741 = vmul.f32 %v3735, 1.442695
        %v3742 = vpow.pop %v3741
        %v3743 = vmul.f32 %v3736, 1.442695
        %v3744 = vpow.pop %v3743
        %v3749 = vrot.slane %v3738, 1
        %v3750 = vrot.slane %v3740, 1
        %v3751 = vrot.slane %v3742, 1
        %v3752 = vrot.slane %v3744, 1
        %v3757 = vmul.f32 %v1419, %v3749
        %v3758 = vmul.f32 %v1420, %v3750
        %v3759 = vmul.f32 %v1421, %v3751
        %v3760 = vmul.f32 %v1422, %v3752
        %v3761 = vadd.f32 %v3693, %v3757
        %v3762 = vadd.f32 %v3694, %v3758
        %v3763 = vadd.f32 %v3695, %v3759
        %v3764 = vadd.f32 %v3696, %v3760
        %v3765 = vadd.f32 %v2597, %v3733
        %v3766 = vadd.f32 %v2598, %v3734
        %v3767 = vadd.f32 %v2599, %v3735
        %v3768 = vadd.f32 %v2600, %v3736
        %s3769 = scalar_lea.vmem %s1, 192
        %v3770 = vld [vmem:[%s3769] sm:$0xff]
        %v3771 = vld [vmem:[%s3769 + $0x8] sm:$0xff]
        %v3772 = vld [vmem:[%s3769 + $0x10] sm:$0xff]
        %v3773 = vld [vmem:[%s3769 + $0x18] sm:$0xff]
        %v3774 = vld [vmem:[%s3769 + $0x20] sm:$0xff]
        %v3775 = vld [vmem:[%s3769 + $0x28] sm:$0xff]
        %v3776 = vld [vmem:[%s3769 + $0x30] sm:$0xff]
        %v3777 = vld [vmem:[%s3769 + $0x38] sm:$0xff]
        %3779 = vset.pattern.permute.xlu0 0
        %3780 = vperm.xlu0 %3779, %v3770
        %v3781 = vpop.permute.xlu0 %3780
        %3784 = vset.pattern.permute.xlu0 0
        %3785 = vperm.xlu0 %3784, %v3771
        %v3786 = vpop.permute.xlu0 %3785
        %3789 = vset.pattern.permute.xlu0 0
        %3790 = vperm.xlu0 %3789, %v3772
        %v3791 = vpop.permute.xlu0 %3790
        %3794 = vset.pattern.permute.xlu0 0
        %3795 = vperm.xlu0 %3794, %v3773
        %v3796 = vpop.permute.xlu0 %3795
        %3799 = vset.pattern.permute.xlu0 0
        %3800 = vperm.xlu0 %3799, %v3774
        %v3801 = vpop.permute.xlu0 %3800
        %3804 = vset.pattern.permute.xlu0 0
        %3805 = vperm.xlu0 %3804, %v3775
        %v3806 = vpop.permute.xlu0 %3805
        %3809 = vset.pattern.permute.xlu0 0
        %3810 = vperm.xlu0 %3809, %v3776
        %v3811 = vpop.permute.xlu0 %3810
        %3814 = vset.pattern.permute.xlu0 0
        %3815 = vperm.xlu0 %3814, %v3777
        %v3816 = vpop.permute.xlu0 %3815
        %v3818 = vperm.slane %v3761, 0
        %v3819 = vperm.slane %v3762, 0
        %v3820 = vperm.slane %v3763, 0
        %v3821 = vperm.slane %v3764, 0
        %v3822 = vmul.f32 %v3781, %v3818
        %v3823 = vmul.f32 %v3781, %v3819
        %v3824 = vmul.f32 %v3781, %v3820
        %v3825 = vmul.f32 %v3781, %v3821
        %v3826 = vmul.f32 %v3786, %v3818
        %v3827 = vmul.f32 %v3786, %v3819
        %v3828 = vmul.f32 %v3786, %v3820
        %v3829 = vmul.f32 %v3786, %v3821
        %v3830 = vmul.f32 %v3791, %v3818
        %v3831 = vmul.f32 %v3791, %v3819
        %v3832 = vmul.f32 %v3791, %v3820
        %v3833 = vmul.f32 %v3791, %v3821
        %v3834 = vmul.f32 %v3796, %v3818
        %v3835 = vmul.f32 %v3796, %v3819
        %v3836 = vmul.f32 %v3796, %v3820
        %v3837 = vmul.f32 %v3796, %v3821
        %v3838 = vmul.f32 %v3801, %v3818
        %v3839 = vmul.f32 %v3801, %v3819
        %v3840 = vmul.f32 %v3801, %v3820
        %v3841 = vmul.f32 %v3801, %v3821
        %v3842 = vmul.f32 %v3806, %v3818
        %v3843 = vmul.f32 %v3806, %v3819
        %v3844 = vmul.f32 %v3806, %v3820
        %v3845 = vmul.f32 %v3806, %v3821
        %v3846 = vmul.f32 %v3811, %v3818
        %v3847 = vmul.f32 %v3811, %v3819
        %v3848 = vmul.f32 %v3811, %v3820
        %v3849 = vmul.f32 %v3811, %v3821
        %v3850 = vmul.f32 %v3816, %v3818
        %v3851 = vmul.f32 %v3816, %v3819
        %v3852 = vmul.f32 %v3816, %v3820
        %v3853 = vmul.f32 %v3816, %v3821
        %3854 = vset.pattern.permute.xlu0 1
        %3855 = vperm.xlu0 %3854, %v3770
        %v3856 = vpop.permute.xlu0 %3855
        %3858 = vset.pattern.permute.xlu0 1
        %3859 = vperm.xlu0 %3858, %v3771
        %v3860 = vpop.permute.xlu0 %3859
        %3862 = vset.pattern.permute.xlu0 1
        %3863 = vperm.xlu0 %3862, %v3772
        %v3864 = vpop.permute.xlu0 %3863
        %3866 = vset.pattern.permute.xlu0 1
        %3867 = vperm.xlu0 %3866, %v3773
        %v3868 = vpop.permute.xlu0 %3867
        %3870 = vset.pattern.permute.xlu0 1
        %3871 = vperm.xlu0 %3870, %v3774
        %v3872 = vpop.permute.xlu0 %3871
        %3874 = vset.pattern.permute.xlu0 1
        %3875 = vperm.xlu0 %3874, %v3775
        %v3876 = vpop.permute.xlu0 %3875
        %3878 = vset.pattern.permute.xlu0 1
        %3879 = vperm.xlu0 %3878, %v3776
        %v3880 = vpop.permute.xlu0 %3879
        %3882 = vset.pattern.permute.xlu0 1
        %3883 = vperm.xlu0 %3882, %v3777
        %v3884 = vpop.permute.xlu0 %3883
        %v3886 = vmul.f32 %v3856, %v365
        %v3887 = vmul.f32 %v3856, %v366
        %v3888 = vmul.f32 %v3856, %v367
        %v3889 = vmul.f32 %v3856, %v368
        %v3890 = vmul.f32 %v3860, %v365
        %v3891 = vmul.f32 %v3860, %v366
        %v3892 = vmul.f32 %v3860, %v367
        %v3893 = vmul.f32 %v3860, %v368
        %v3894 = vmul.f32 %v3864, %v365
        %v3895 = vmul.f32 %v3864, %v366
        %v3896 = vmul.f32 %v3864, %v367
        %v3897 = vmul.f32 %v3864, %v368
        %v3898 = vmul.f32 %v3868, %v365
        %v3899 = vmul.f32 %v3868, %v366
        %v3900 = vmul.f32 %v3868, %v367
        %v3901 = vmul.f32 %v3868, %v368
        %v3902 = vmul.f32 %v3872, %v365
        %v3903 = vmul.f32 %v3872, %v366
        %v3904 = vmul.f32 %v3872, %v367
        %v3905 = vmul.f32 %v3872, %v368
        %v3906 = vmul.f32 %v3876, %v365
        %v3907 = vmul.f32 %v3876, %v366
        %v3908 = vmul.f32 %v3876, %v367
        %v3909 = vmul.f32 %v3876, %v368
        %v3910 = vmul.f32 %v3880, %v365
        %v3911 = vmul.f32 %v3880, %v366
        %v3912 = vmul.f32 %v3880, %v367
        %v3913 = vmul.f32 %v3880, %v368
        %v3914 = vmul.f32 %v3884, %v365
        %v3915 = vmul.f32 %v3884, %v366
        %v3916 = vmul.f32 %v3884, %v367
        %v3917 = vmul.f32 %v3884, %v368
        %v3918 = vadd.f32 %v3822, %v3886
        %v3919 = vadd.f32 %v3823, %v3887
        %v3920 = vadd.f32 %v3824, %v3888
        %v3921 = vadd.f32 %v3825, %v3889
        %v3922 = vadd.f32 %v3826, %v3890
        %v3923 = vadd.f32 %v3827, %v3891
        %v3924 = vadd.f32 %v3828, %v3892
        %v3925 = vadd.f32 %v3829, %v3893
        %v3926 = vadd.f32 %v3830, %v3894
        %v3927 = vadd.f32 %v3831, %v3895
        %v3928 = vadd.f32 %v3832, %v3896
        %v3929 = vadd.f32 %v3833, %v3897
        %v3930 = vadd.f32 %v3834, %v3898
        %v3931 = vadd.f32 %v3835, %v3899
        %v3932 = vadd.f32 %v3836, %v3900
        %v3933 = vadd.f32 %v3837, %v3901
        %v3934 = vadd.f32 %v3838, %v3902
        %v3935 = vadd.f32 %v3839, %v3903
        %v3936 = vadd.f32 %v3840, %v3904
        %v3937 = vadd.f32 %v3841, %v3905
        %v3938 = vadd.f32 %v3842, %v3906
        %v3939 = vadd.f32 %v3843, %v3907
        %v3940 = vadd.f32 %v3844, %v3908
        %v3941 = vadd.f32 %v3845, %v3909
        %v3942 = vadd.f32 %v3846, %v3910
        %v3943 = vadd.f32 %v3847, %v3911
        %v3944 = vadd.f32 %v3848, %v3912
        %v3945 = vadd.f32 %v3849, %v3913
        %v3946 = vadd.f32 %v3850, %v3914
        %v3947 = vadd.f32 %v3851, %v3915
        %v3948 = vadd.f32 %v3852, %v3916
        %v3949 = vadd.f32 %v3853, %v3917
        %3950 = vset.pattern.permute.xlu0 2
        %3951 = vperm.xlu0 %3950, %v3770
        %v3952 = vpop.permute.xlu0 %3951
        %3954 = vset.pattern.permute.xlu0 2
        %3955 = vperm.xlu0 %3954, %v3771
        %v3956 = vpop.permute.xlu0 %3955
        %3958 = vset.pattern.permute.xlu0 2
        %3959 = vperm.xlu0 %3958, %v3772
        %v3960 = vpop.permute.xlu0 %3959
        %3962 = vset.pattern.permute.xlu0 2
        %3963 = vperm.xlu0 %3962, %v3773
        %v3964 = vpop.permute.xlu0 %3963
        %3966 = vset.pattern.permute.xlu0 2
        %3967 = vperm.xlu0 %3966, %v3774
        %v3968 = vpop.permute.xlu0 %3967
        %3970 = vset.pattern.permute.xlu0 2
        %3971 = vperm.xlu0 %3970, %v3775
        %v3972 = vpop.permute.xlu0 %3971
        %3974 = vset.pattern.permute.xlu0 2
        %3975 = vperm.xlu0 %3974, %v3776
        %v3976 = vpop.permute.xlu0 %3975
        %3978 = vset.pattern.permute.xlu0 2
        %3979 = vperm.xlu0 %3978, %v3777
        %v3980 = vpop.permute.xlu0 %3979
        %v3982 = vadd.f32 %v3918, %v3952
        %v3983 = vadd.f32 %v3919, %v3952
        %v3984 = vadd.f32 %v3920, %v3952
        %v3985 = vadd.f32 %v3921, %v3952
        %v3986 = vadd.f32 %v3922, %v3956
        %v3987 = vadd.f32 %v3923, %v3956
        %v3988 = vadd.f32 %v3924, %v3956
        %v3989 = vadd.f32 %v3925, %v3956
        %v3990 = vadd.f32 %v3926, %v3960
        %v3991 = vadd.f32 %v3927, %v3960
        %v3992 = vadd.f32 %v3928, %v3960
        %v3993 = vadd.f32 %v3929, %v3960
        %v3994 = vadd.f32 %v3930, %v3964
        %v3995 = vadd.f32 %v3931, %v3964
        %v3996 = vadd.f32 %v3932, %v3964
        %v3997 = vadd.f32 %v3933, %v3964
        %v3998 = vadd.f32 %v3934, %v3968
        %v3999 = vadd.f32 %v3935, %v3968
        %v4000 = vadd.f32 %v3936, %v3968
        %v4001 = vadd.f32 %v3937, %v3968
        %v4002 = vadd.f32 %v3938, %v3972
        %v4003 = vadd.f32 %v3939, %v3972
        %v4004 = vadd.f32 %v3940, %v3972
        %v4005 = vadd.f32 %v3941, %v3972
        %v4006 = vadd.f32 %v3942, %v3976
        %v4007 = vadd.f32 %v3943, %v3976
        %v4008 = vadd.f32 %v3944, %v3976
        %v4009 = vadd.f32 %v3945, %v3976
        %v4010 = vadd.f32 %v3946, %v3980
        %v4011 = vadd.f32 %v3947, %v3980
        %v4012 = vadd.f32 %v3948, %v3980
        %v4013 = vadd.f32 %v3949, %v3980
        %v4014 = vtanh.pop %v3982
        %v4015 = vtanh.pop %v3983
        %v4016 = vtanh.pop %v3984
        %v4017 = vtanh.pop %v3985
        %v4018 = vtanh.pop %v3986
        %v4019 = vtanh.pop %v3987
        %v4020 = vtanh.pop %v3988
        %v4021 = vtanh.pop %v3989
        %v4022 = vtanh.pop %v3990
        %v4023 = vtanh.pop %v3991
        %v4024 = vtanh.pop %v3992
        %v4025 = vtanh.pop %v3993
        %v4026 = vtanh.pop %v3994
        %v4027 = vtanh.pop %v3995
        %v4028 = vtanh.pop %v3996
        %v4029 = vtanh.pop %v3997
        %v4030 = vtanh.pop %v3998
        %v4031 = vtanh.pop %v3999
        %v4032 = vtanh.pop %v4000
        %v4033 = vtanh.pop %v4001
        %v4034 = vtanh.pop %v4002
        %v4035 = vtanh.pop %v4003
        %v4036 = vtanh.pop %v4004
        %v4037 = vtanh.pop %v4005
        %v4038 = vtanh.pop %v4006
        %v4039 = vtanh.pop %v4007
        %v4040 = vtanh.pop %v4008
        %v4041 = vtanh.pop %v4009
        %v4042 = vtanh.pop %v4010
        %v4043 = vtanh.pop %v4011
        %v4044 = vtanh.pop %v4012
        %v4045 = vtanh.pop %v4013
        %s4046 = scalar_lea.vmem [#allocation2], 288
        %v4047 = vld [vmem:[%s4046] sm:$0xf]
        %v4048 = vld [vmem:[%s4046 + $0x4] sm:$0xf]
        %v4049 = vld [vmem:[%s4046 + $0x8] sm:$0xf]
        %v4050 = vld [vmem:[%s4046 + $0xc] sm:$0xf]
        %v4051 = vld [vmem:[%s4046 + $0x10] sm:$0xf]
        %v4052 = vld [vmem:[%s4046 + $0x14] sm:$0xf]
        %v4053 = vld [vmem:[%s4046 + $0x18] sm:$0xf]
        %v4054 = vld [vmem:[%s4046 + $0x1c] sm:$0xf]
        %v4055 = vpack.c.bf16 %v4018, %v4014
        %v4056 = vpack.c.bf16 %v4019, %v4015
        %v4057 = vpack.c.bf16 %v4020, %v4016
        %v4058 = vpack.c.bf16 %v4021, %v4017
        %v4059 = vpack.c.bf16 %v4026, %v4022
        %v4060 = vpack.c.bf16 %v4027, %v4023
        %v4061 = vpack.c.bf16 %v4028, %v4024
        %v4062 = vpack.c.bf16 %v4029, %v4025
        %v4063 = vpack.c.bf16 %v4034, %v4030
        %v4064 = vpack.c.bf16 %v4035, %v4031
        %v4065 = vpack.c.bf16 %v4036, %v4032
        %v4066 = vpack.c.bf16 %v4037, %v4033
        %v4067 = vpack.c.bf16 %v4042, %v4038
        %v4068 = vpack.c.bf16 %v4043, %v4039
        %v4069 = vpack.c.bf16 %v4044, %v4040
        %v4070 = vpack.c.bf16 %v4045, %v4041
        %4071 = vset.pattern.permute.xlu0 3
        %4072 = vperm.xlu0 %4071, %v3770
        %v4073 = vpop.permute.xlu0 %4072
        %4075 = vset.pattern.permute.xlu0 3
        %4076 = vperm.xlu0 %4075, %v3771
        %v4077 = vpop.permute.xlu0 %4076
        %4079 = vset.pattern.permute.xlu0 3
        %4080 = vperm.xlu0 %4079, %v3772
        %v4081 = vpop.permute.xlu0 %4080
        %4083 = vset.pattern.permute.xlu0 3
        %4084 = vperm.xlu0 %4083, %v3773
        %v4085 = vpop.permute.xlu0 %4084
        %4087 = vset.pattern.permute.xlu0 3
        %4088 = vperm.xlu0 %4087, %v3774
        %v4089 = vpop.permute.xlu0 %4088
        %4091 = vset.pattern.permute.xlu0 3
        %4092 = vperm.xlu0 %4091, %v3775
        %v4093 = vpop.permute.xlu0 %4092
        %4095 = vset.pattern.permute.xlu0 3
        %4096 = vperm.xlu0 %4095, %v3776
        %v4097 = vpop.permute.xlu0 %4096
        %4099 = vset.pattern.permute.xlu0 3
        %4100 = vperm.xlu0 %4099, %v3777
        %v4101 = vpop.permute.xlu0 %4100
        %v4111 = vunpack.c.l.b16 %v4047
        %v4112 = vunpack.c.l.b16 %v4048
        %v4113 = vunpack.c.l.b16 %v4049
        %v4114 = vunpack.c.l.b16 %v4050
        %v4115 = vunpack.c.l.b16 %v4051
        %v4116 = vunpack.c.l.b16 %v4052
        %v4117 = vunpack.c.l.b16 %v4053
        %v4118 = vunpack.c.l.b16 %v4054
        %v4119 = vpack.c.b16 %v4112, %v4111
        %v4120 = vpack.c.b16 %v4114, %v4113
        %v4121 = vpack.c.b16 %v4116, %v4115
        %v4122 = vpack.c.b16 %v4118, %v4117
        %v4124 = vsel %vm605, %v4119, 0
        %v4127 = vsel %vm605, %v4120, 0
        %v4130 = vsel %vm605, %v4121, 0
        %v4133 = vsel %vm605, %v4122, 0
        %4135 = vmatpush.bf16.msra.mxu0 0
        %4136 = vmatpush.bf16.msra.mxu0 0
        %4137 = vmatpush.bf16.msra.mxu0 0
        %4138 = vmatpush.bf16.msra.mxu0 0
        %4139 = vmatpush.bf16.msra.mxu0 %v4067
        %4140 = vmatpush.bf16.msra.mxu0 %v4063
        %4141 = vmatpush.bf16.msra.mxu0 %v4059
        %4142 = vmatpush.bf16.msra.mxu0 %v4055
        %4143 = vmatmul.bf16.gmra.mxu0 %v4124
        %v4144 = vpop.f32.mrf.mxu0
        %v4145 = vadd.f32 %v4073, %v4144
        %v4146 = vpop.f32.mrf.mxu0
        %v4147 = vadd.f32 %v4077, %v4146
        %4148 = vmatmul.bf16.gmra.mxu0 %v4127
        %v4149 = vpop.f32.mrf.mxu0
        %v4150 = vadd.f32 %v4081, %v4149
        %v4151 = vpop.f32.mrf.mxu0
        %v4152 = vadd.f32 %v4085, %v4151
        %4153 = vmatmul.bf16.gmra.mxu0 %v4130
        %v4154 = vpop.f32.mrf.mxu0
        %v4155 = vadd.f32 %v4089, %v4154
        %v4156 = vpop.f32.mrf.mxu0
        %v4157 = vadd.f32 %v4093, %v4156
        %4158 = vmatmul.bf16.gmra.mxu0 %v4133
        %v4159 = vpop.f32.mrf.mxu0
        %v4160 = vadd.f32 %v4097, %v4159
        %v4161 = vpop.f32.mrf.mxu0
        %v4162 = vadd.f32 %v4101, %v4161
        %4163 = vdwg.mxu0
        %4164 = vmatpush.bf16.msra.mxu0 0
        %4165 = vmatpush.bf16.msra.mxu0 0
        %4166 = vmatpush.bf16.msra.mxu0 0
        %4167 = vmatpush.bf16.msra.mxu0 0
        %4168 = vmatpush.bf16.msra.mxu0 %v4068
        %4169 = vmatpush.bf16.msra.mxu0 %v4064
        %4170 = vmatpush.bf16.msra.mxu0 %v4060
        %4171 = vmatpush.bf16.msra.mxu0 %v4056
        %4172 = vmatmul.bf16.gmra.mxu0 %v4124
        %v4173 = vpop.f32.mrf.mxu0
        %v4174 = vadd.f32 %v4073, %v4173
        %v4175 = vpop.f32.mrf.mxu0
        %v4176 = vadd.f32 %v4077, %v4175
        %4177 = vmatmul.bf16.gmra.mxu0 %v4127
        %v4178 = vpop.f32.mrf.mxu0
        %v4179 = vadd.f32 %v4081, %v4178
        %v4180 = vpop.f32.mrf.mxu0
        %v4181 = vadd.f32 %v4085, %v4180
        %4182 = vmatmul.bf16.gmra.mxu0 %v4130
        %v4183 = vpop.f32.mrf.mxu0
        %v4184 = vadd.f32 %v4089, %v4183
        %v4185 = vpop.f32.mrf.mxu0
        %v4186 = vadd.f32 %v4093, %v4185
        %4187 = vmatmul.bf16.gmra.mxu0 %v4133
        %v4188 = vpop.f32.mrf.mxu0
        %v4189 = vadd.f32 %v4097, %v4188
        %v4190 = vpop.f32.mrf.mxu0
        %v4191 = vadd.f32 %v4101, %v4190
        %4192 = vdwg.mxu0
        %4193 = vmatpush.bf16.msra.mxu0 0
        %4194 = vmatpush.bf16.msra.mxu0 0
        %4195 = vmatpush.bf16.msra.mxu0 0
        %4196 = vmatpush.bf16.msra.mxu0 0
        %4197 = vmatpush.bf16.msra.mxu0 %v4069
        %4198 = vmatpush.bf16.msra.mxu0 %v4065
        %4199 = vmatpush.bf16.msra.mxu0 %v4061
        %4200 = vmatpush.bf16.msra.mxu0 %v4057
        %4201 = vmatmul.bf16.gmra.mxu0 %v4124
        %v4202 = vpop.f32.mrf.mxu0
        %v4203 = vadd.f32 %v4073, %v4202
        %v4204 = vpop.f32.mrf.mxu0
        %v4205 = vadd.f32 %v4077, %v4204
        %4206 = vmatmul.bf16.gmra.mxu0 %v4127
        %v4207 = vpop.f32.mrf.mxu0
        %v4208 = vadd.f32 %v4081, %v4207
        %v4209 = vpop.f32.mrf.mxu0
        %v4210 = vadd.f32 %v4085, %v4209
        %4211 = vmatmul.bf16.gmra.mxu0 %v4130
        %v4212 = vpop.f32.mrf.mxu0
        %v4213 = vadd.f32 %v4089, %v4212
        %v4214 = vpop.f32.mrf.mxu0
        %v4215 = vadd.f32 %v4093, %v4214
        %4216 = vmatmul.bf16.gmra.mxu0 %v4133
        %v4217 = vpop.f32.mrf.mxu0
        %v4218 = vadd.f32 %v4097, %v4217
        %v4219 = vpop.f32.mrf.mxu0
        %v4220 = vadd.f32 %v4101, %v4219
        %4221 = vdwg.mxu0
        %4222 = vmatpush.bf16.msra.mxu0 0
        %4223 = vmatpush.bf16.msra.mxu0 0
        %4224 = vmatpush.bf16.msra.mxu0 0
        %4225 = vmatpush.bf16.msra.mxu0 0
        %4226 = vmatpush.bf16.msra.mxu0 %v4070
        %4227 = vmatpush.bf16.msra.mxu0 %v4066
        %4228 = vmatpush.bf16.msra.mxu0 %v4062
        %4229 = vmatpush.bf16.msra.mxu0 %v4058
        %4230 = vmatmul.bf16.gmra.mxu0 %v4124
        %v4231 = vpop.f32.mrf.mxu0
        %v4232 = vadd.f32 %v4073, %v4231
        %v4233 = vpop.f32.mrf.mxu0
        %v4234 = vadd.f32 %v4077, %v4233
        %4235 = vmatmul.bf16.gmra.mxu0 %v4127
        %v4236 = vpop.f32.mrf.mxu0
        %v4237 = vadd.f32 %v4081, %v4236
        %v4238 = vpop.f32.mrf.mxu0
        %v4239 = vadd.f32 %v4085, %v4238
        %4240 = vmatmul.bf16.gmra.mxu0 %v4130
        %v4241 = vpop.f32.mrf.mxu0
        %v4242 = vadd.f32 %v4089, %v4241
        %v4243 = vpop.f32.mrf.mxu0
        %v4244 = vadd.f32 %v4093, %v4243
        %4245 = vmatmul.bf16.gmra.mxu0 %v4133
        %v4246 = vpop.f32.mrf.mxu0
        %v4247 = vadd.f32 %v4097, %v4246
        %v4248 = vpop.f32.mrf.mxu0
        %v4249 = vadd.f32 %v4101, %v4248
        %4250 = vdwg.mxu0
        %v4251 = vtanh.pop %v4145
        %v4252 = vtanh.pop %v4174
        %v4253 = vtanh.pop %v4203
        %v4254 = vtanh.pop %v4232
        %v4255 = vtanh.pop %v4147
        %v4256 = vtanh.pop %v4176
        %v4257 = vtanh.pop %v4205
        %v4258 = vtanh.pop %v4234
        %v4259 = vtanh.pop %v4150
        %v4260 = vtanh.pop %v4179
        %v4261 = vtanh.pop %v4208
        %v4262 = vtanh.pop %v4237
        %v4263 = vtanh.pop %v4152
        %v4264 = vtanh.pop %v4181
        %v4265 = vtanh.pop %v4210
        %v4266 = vtanh.pop %v4239
        %v4267 = vtanh.pop %v4155
        %v4268 = vtanh.pop %v4184
        %v4269 = vtanh.pop %v4213
        %v4270 = vtanh.pop %v4242
        %v4271 = vtanh.pop %v4157
        %v4272 = vtanh.pop %v4186
        %v4273 = vtanh.pop %v4215
        %v4274 = vtanh.pop %v4244
        %v4275 = vtanh.pop %v4160
        %v4276 = vtanh.pop %v4189
        %v4277 = vtanh.pop %v4218
        %v4278 = vtanh.pop %v4247
        %v4279 = vtanh.pop %v4162
        %v4280 = vtanh.pop %v4191
        %v4281 = vtanh.pop %v4220
        %v4282 = vtanh.pop %v4249
        %s4283 = scalar_lea.vmem [#allocation2], 320
        %v4284 = vld [vmem:[%s4283] sm:$0xf]
        %v4285 = vld [vmem:[%s4283 + $0x4] sm:$0xf]
        %v4286 = vld [vmem:[%s4283 + $0x8] sm:$0xf]
        %v4287 = vld [vmem:[%s4283 + $0xc] sm:$0xf]
        %v4288 = vld [vmem:[%s4283 + $0x10] sm:$0xf]
        %v4289 = vld [vmem:[%s4283 + $0x14] sm:$0xf]
        %v4290 = vld [vmem:[%s4283 + $0x18] sm:$0xf]
        %v4291 = vld [vmem:[%s4283 + $0x1c] sm:$0xf]
        %v4292 = vpack.c.bf16 %v4255, %v4251
        %v4293 = vpack.c.bf16 %v4256, %v4252
        %v4294 = vpack.c.bf16 %v4257, %v4253
        %v4295 = vpack.c.bf16 %v4258, %v4254
        %v4296 = vpack.c.bf16 %v4263, %v4259
        %v4297 = vpack.c.bf16 %v4264, %v4260
        %v4298 = vpack.c.bf16 %v4265, %v4261
        %v4299 = vpack.c.bf16 %v4266, %v4262
        %v4300 = vpack.c.bf16 %v4271, %v4267
        %v4301 = vpack.c.bf16 %v4272, %v4268
        %v4302 = vpack.c.bf16 %v4273, %v4269
        %v4303 = vpack.c.bf16 %v4274, %v4270
        %v4304 = vpack.c.bf16 %v4279, %v4275
        %v4305 = vpack.c.bf16 %v4280, %v4276
        %v4306 = vpack.c.bf16 %v4281, %v4277
        %v4307 = vpack.c.bf16 %v4282, %v4278
        %4308 = vset.pattern.permute.xlu0 4
        %4309 = vperm.xlu0 %4308, %v3770
        %v4310 = vpop.permute.xlu0 %4309
        %4312 = vset.pattern.permute.xlu0 4
        %4313 = vperm.xlu0 %4312, %v3771
        %v4314 = vpop.permute.xlu0 %4313
        %4316 = vset.pattern.permute.xlu0 4
        %4317 = vperm.xlu0 %4316, %v3772
        %v4318 = vpop.permute.xlu0 %4317
        %4320 = vset.pattern.permute.xlu0 4
        %4321 = vperm.xlu0 %4320, %v3773
        %v4322 = vpop.permute.xlu0 %4321
        %4324 = vset.pattern.permute.xlu0 4
        %4325 = vperm.xlu0 %4324, %v3774
        %v4326 = vpop.permute.xlu0 %4325
        %4328 = vset.pattern.permute.xlu0 4
        %4329 = vperm.xlu0 %4328, %v3775
        %v4330 = vpop.permute.xlu0 %4329
        %4332 = vset.pattern.permute.xlu0 4
        %4333 = vperm.xlu0 %4332, %v3776
        %v4334 = vpop.permute.xlu0 %4333
        %4336 = vset.pattern.permute.xlu0 4
        %4337 = vperm.xlu0 %4336, %v3777
        %v4338 = vpop.permute.xlu0 %4337
        %v4348 = vunpack.c.l.b16 %v4284
        %v4349 = vunpack.c.l.b16 %v4285
        %v4350 = vunpack.c.l.b16 %v4286
        %v4351 = vunpack.c.l.b16 %v4287
        %v4352 = vunpack.c.l.b16 %v4288
        %v4353 = vunpack.c.l.b16 %v4289
        %v4354 = vunpack.c.l.b16 %v4290
        %v4355 = vunpack.c.l.b16 %v4291
        %v4356 = vpack.c.b16 %v4349, %v4348
        %v4357 = vpack.c.b16 %v4351, %v4350
        %v4358 = vpack.c.b16 %v4353, %v4352
        %v4359 = vpack.c.b16 %v4355, %v4354
        %v4361 = vsel %vm605, %v4356, 0
        %v4364 = vsel %vm605, %v4357, 0
        %v4367 = vsel %vm605, %v4358, 0
        %v4370 = vsel %vm605, %v4359, 0
        %4372 = vmatpush.bf16.msra.mxu0 0
        %4373 = vmatpush.bf16.msra.mxu0 0
        %4374 = vmatpush.bf16.msra.mxu0 0
        %4375 = vmatpush.bf16.msra.mxu0 0
        %4376 = vmatpush.bf16.msra.mxu0 %v4304
        %4377 = vmatpush.bf16.msra.mxu0 %v4300
        %4378 = vmatpush.bf16.msra.mxu0 %v4296
        %4379 = vmatpush.bf16.msra.mxu0 %v4292
        %4380 = vmatmul.bf16.gmra.mxu0 %v4361
        %v4381 = vpop.f32.mrf.mxu0
        %v4382 = vadd.f32 %v4310, %v4381
        %v4383 = vpop.f32.mrf.mxu0
        %v4384 = vadd.f32 %v4314, %v4383
        %4385 = vmatmul.bf16.gmra.mxu0 %v4364
        %v4386 = vpop.f32.mrf.mxu0
        %v4387 = vadd.f32 %v4318, %v4386
        %v4388 = vpop.f32.mrf.mxu0
        %v4389 = vadd.f32 %v4322, %v4388
        %4390 = vmatmul.bf16.gmra.mxu0 %v4367
        %v4391 = vpop.f32.mrf.mxu0
        %v4392 = vadd.f32 %v4326, %v4391
        %v4393 = vpop.f32.mrf.mxu0
        %v4394 = vadd.f32 %v4330, %v4393
        %4395 = vmatmul.bf16.gmra.mxu0 %v4370
        %v4396 = vpop.f32.mrf.mxu0
        %v4397 = vadd.f32 %v4334, %v4396
        %v4398 = vpop.f32.mrf.mxu0
        %v4399 = vadd.f32 %v4338, %v4398
        %4400 = vdwg.mxu0
        %4401 = vmatpush.bf16.msra.mxu0 0
        %4402 = vmatpush.bf16.msra.mxu0 0
        %4403 = vmatpush.bf16.msra.mxu0 0
        %4404 = vmatpush.bf16.msra.mxu0 0
        %4405 = vmatpush.bf16.msra.mxu0 %v4305
        %4406 = vmatpush.bf16.msra.mxu0 %v4301
        %4407 = vmatpush.bf16.msra.mxu0 %v4297
        %4408 = vmatpush.bf16.msra.mxu0 %v4293
        %4409 = vmatmul.bf16.gmra.mxu0 %v4361
        %v4410 = vpop.f32.mrf.mxu0
        %v4411 = vadd.f32 %v4310, %v4410
        %v4412 = vpop.f32.mrf.mxu0
        %v4413 = vadd.f32 %v4314, %v4412
        %4414 = vmatmul.bf16.gmra.mxu0 %v4364
        %v4415 = vpop.f32.mrf.mxu0
        %v4416 = vadd.f32 %v4318, %v4415
        %v4417 = vpop.f32.mrf.mxu0
        %v4418 = vadd.f32 %v4322, %v4417
        %4419 = vmatmul.bf16.gmra.mxu0 %v4367
        %v4420 = vpop.f32.mrf.mxu0
        %v4421 = vadd.f32 %v4326, %v4420
        %v4422 = vpop.f32.mrf.mxu0
        %v4423 = vadd.f32 %v4330, %v4422
        %4424 = vmatmul.bf16.gmra.mxu0 %v4370
        %v4425 = vpop.f32.mrf.mxu0
        %v4426 = vadd.f32 %v4334, %v4425
        %v4427 = vpop.f32.mrf.mxu0
        %v4428 = vadd.f32 %v4338, %v4427
        %4429 = vdwg.mxu0
        %4430 = vmatpush.bf16.msra.mxu0 0
        %4431 = vmatpush.bf16.msra.mxu0 0
        %4432 = vmatpush.bf16.msra.mxu0 0
        %4433 = vmatpush.bf16.msra.mxu0 0
        %4434 = vmatpush.bf16.msra.mxu0 %v4306
        %4435 = vmatpush.bf16.msra.mxu0 %v4302
        %4436 = vmatpush.bf16.msra.mxu0 %v4298
        %4437 = vmatpush.bf16.msra.mxu0 %v4294
        %4438 = vmatmul.bf16.gmra.mxu0 %v4361
        %v4439 = vpop.f32.mrf.mxu0
        %v4440 = vadd.f32 %v4310, %v4439
        %v4441 = vpop.f32.mrf.mxu0
        %v4442 = vadd.f32 %v4314, %v4441
        %4443 = vmatmul.bf16.gmra.mxu0 %v4364
        %v4444 = vpop.f32.mrf.mxu0
        %v4445 = vadd.f32 %v4318, %v4444
        %v4446 = vpop.f32.mrf.mxu0
        %v4447 = vadd.f32 %v4322, %v4446
        %4448 = vmatmul.bf16.gmra.mxu0 %v4367
        %v4449 = vpop.f32.mrf.mxu0
        %v4450 = vadd.f32 %v4326, %v4449
        %v4451 = vpop.f32.mrf.mxu0
        %v4452 = vadd.f32 %v4330, %v4451
        %4453 = vmatmul.bf16.gmra.mxu0 %v4370
        %v4454 = vpop.f32.mrf.mxu0
        %v4455 = vadd.f32 %v4334, %v4454
        %v4456 = vpop.f32.mrf.mxu0
        %v4457 = vadd.f32 %v4338, %v4456
        %4458 = vdwg.mxu0
        %4459 = vmatpush.bf16.msra.mxu0 0
        %4460 = vmatpush.bf16.msra.mxu0 0
        %4461 = vmatpush.bf16.msra.mxu0 0
        %4462 = vmatpush.bf16.msra.mxu0 0
        %4463 = vmatpush.bf16.msra.mxu0 %v4307
        %4464 = vmatpush.bf16.msra.mxu0 %v4303
        %4465 = vmatpush.bf16.msra.mxu0 %v4299
        %4466 = vmatpush.bf16.msra.mxu0 %v4295
        %4467 = vmatmul.bf16.gmra.mxu0 %v4361
        %v4468 = vpop.f32.mrf.mxu0
        %v4469 = vadd.f32 %v4310, %v4468
        %v4470 = vpop.f32.mrf.mxu0
        %v4471 = vadd.f32 %v4314, %v4470
        %4472 = vmatmul.bf16.gmra.mxu0 %v4364
        %v4473 = vpop.f32.mrf.mxu0
        %v4474 = vadd.f32 %v4318, %v4473
        %v4475 = vpop.f32.mrf.mxu0
        %v4476 = vadd.f32 %v4322, %v4475
        %4477 = vmatmul.bf16.gmra.mxu0 %v4367
        %v4478 = vpop.f32.mrf.mxu0
        %v4479 = vadd.f32 %v4326, %v4478
        %v4480 = vpop.f32.mrf.mxu0
        %v4481 = vadd.f32 %v4330, %v4480
        %4482 = vmatmul.bf16.gmra.mxu0 %v4370
        %v4483 = vpop.f32.mrf.mxu0
        %v4484 = vadd.f32 %v4334, %v4483
        %v4485 = vpop.f32.mrf.mxu0
        %v4486 = vadd.f32 %v4338, %v4485
        %4487 = vdwg.mxu0
        %v4488 = vtanh.pop %v4382
        %v4489 = vtanh.pop %v4411
        %v4490 = vtanh.pop %v4440
        %v4491 = vtanh.pop %v4469
        %v4492 = vtanh.pop %v4384
        %v4493 = vtanh.pop %v4413
        %v4494 = vtanh.pop %v4442
        %v4495 = vtanh.pop %v4471
        %v4496 = vtanh.pop %v4387
        %v4497 = vtanh.pop %v4416
        %v4498 = vtanh.pop %v4445
        %v4499 = vtanh.pop %v4474
        %v4500 = vtanh.pop %v4389
        %v4501 = vtanh.pop %v4418
        %v4502 = vtanh.pop %v4447
        %v4503 = vtanh.pop %v4476
        %v4504 = vtanh.pop %v4392
        %v4505 = vtanh.pop %v4421
        %v4506 = vtanh.pop %v4450
        %v4507 = vtanh.pop %v4479
        %v4508 = vtanh.pop %v4394
        %v4509 = vtanh.pop %v4423
        %v4510 = vtanh.pop %v4452
        %v4511 = vtanh.pop %v4481
        %v4512 = vtanh.pop %v4397
        %v4513 = vtanh.pop %v4426
        %v4514 = vtanh.pop %v4455
        %v4515 = vtanh.pop %v4484
        %v4516 = vtanh.pop %v4399
        %v4517 = vtanh.pop %v4428
        %v4518 = vtanh.pop %v4457
        %v4519 = vtanh.pop %v4486
        %s4520 = scalar_lea.vmem [#allocation2], 352
        %v4521 = vld [vmem:[%s4520] sm:$0xf]
        %v4522 = vld [vmem:[%s4520 + $0x4] sm:$0xf]
        %v4523 = vld [vmem:[%s4520 + $0x8] sm:$0xf]
        %v4524 = vld [vmem:[%s4520 + $0xc] sm:$0xf]
        %v4525 = vld [vmem:[%s4520 + $0x10] sm:$0xf]
        %v4526 = vld [vmem:[%s4520 + $0x14] sm:$0xf]
        %v4527 = vld [vmem:[%s4520 + $0x18] sm:$0xf]
        %v4528 = vld [vmem:[%s4520 + $0x1c] sm:$0xf]
        %v4529 = vpack.c.bf16 %v4492, %v4488
        %v4530 = vpack.c.bf16 %v4493, %v4489
        %v4531 = vpack.c.bf16 %v4494, %v4490
        %v4532 = vpack.c.bf16 %v4495, %v4491
        %v4533 = vpack.c.bf16 %v4500, %v4496
        %v4534 = vpack.c.bf16 %v4501, %v4497
        %v4535 = vpack.c.bf16 %v4502, %v4498
        %v4536 = vpack.c.bf16 %v4503, %v4499
        %v4537 = vpack.c.bf16 %v4508, %v4504
        %v4538 = vpack.c.bf16 %v4509, %v4505
        %v4539 = vpack.c.bf16 %v4510, %v4506
        %v4540 = vpack.c.bf16 %v4511, %v4507
        %v4541 = vpack.c.bf16 %v4516, %v4512
        %v4542 = vpack.c.bf16 %v4517, %v4513
        %v4543 = vpack.c.bf16 %v4518, %v4514
        %v4544 = vpack.c.bf16 %v4519, %v4515
        %4545 = vset.pattern.permute.xlu0 5
        %4546 = vperm.xlu0 %4545, %v3770
        %v4547 = vpop.permute.xlu0 %4546
        %4549 = vset.pattern.permute.xlu0 5
        %4550 = vperm.xlu0 %4549, %v3771
        %v4551 = vpop.permute.xlu0 %4550
        %4553 = vset.pattern.permute.xlu0 5
        %4554 = vperm.xlu0 %4553, %v3772
        %v4555 = vpop.permute.xlu0 %4554
        %4557 = vset.pattern.permute.xlu0 5
        %4558 = vperm.xlu0 %4557, %v3773
        %v4559 = vpop.permute.xlu0 %4558
        %4561 = vset.pattern.permute.xlu0 5
        %4562 = vperm.xlu0 %4561, %v3774
        %v4563 = vpop.permute.xlu0 %4562
        %4565 = vset.pattern.permute.xlu0 5
        %4566 = vperm.xlu0 %4565, %v3775
        %v4567 = vpop.permute.xlu0 %4566
        %4569 = vset.pattern.permute.xlu0 5
        %4570 = vperm.xlu0 %4569, %v3776
        %v4571 = vpop.permute.xlu0 %4570
        %4573 = vset.pattern.permute.xlu0 5
        %4574 = vperm.xlu0 %4573, %v3777
        %v4575 = vpop.permute.xlu0 %4574
        %v4585 = vunpack.c.l.b16 %v4521
        %v4586 = vunpack.c.l.b16 %v4522
        %v4587 = vunpack.c.l.b16 %v4523
        %v4588 = vunpack.c.l.b16 %v4524
        %v4589 = vunpack.c.l.b16 %v4525
        %v4590 = vunpack.c.l.b16 %v4526
        %v4591 = vunpack.c.l.b16 %v4527
        %v4592 = vunpack.c.l.b16 %v4528
        %v4593 = vpack.c.b16 %v4586, %v4585
        %v4594 = vpack.c.b16 %v4588, %v4587
        %v4595 = vpack.c.b16 %v4590, %v4589
        %v4596 = vpack.c.b16 %v4592, %v4591
        %v4598 = vsel %vm605, %v4593, 0
        %v4601 = vsel %vm605, %v4594, 0
        %v4604 = vsel %vm605, %v4595, 0
        %v4607 = vsel %vm605, %v4596, 0
        %4609 = vmatpush.bf16.msra.mxu0 0
        %4610 = vmatpush.bf16.msra.mxu0 0
        %4611 = vmatpush.bf16.msra.mxu0 0
        %4612 = vmatpush.bf16.msra.mxu0 0
        %4613 = vmatpush.bf16.msra.mxu0 %v4541
        %4614 = vmatpush.bf16.msra.mxu0 %v4537
        %4615 = vmatpush.bf16.msra.mxu0 %v4533
        %4616 = vmatpush.bf16.msra.mxu0 %v4529
        %4617 = vmatmul.bf16.gmra.mxu0 %v4598
        %v4618 = vpop.f32.mrf.mxu0
        %v4619 = vadd.f32 %v4547, %v4618
        %v4620 = vpop.f32.mrf.mxu0
        %v4621 = vadd.f32 %v4551, %v4620
        %4622 = vmatmul.bf16.gmra.mxu0 %v4601
        %v4623 = vpop.f32.mrf.mxu0
        %v4624 = vadd.f32 %v4555, %v4623
        %v4625 = vpop.f32.mrf.mxu0
        %v4626 = vadd.f32 %v4559, %v4625
        %4627 = vmatmul.bf16.gmra.mxu0 %v4604
        %v4628 = vpop.f32.mrf.mxu0
        %v4629 = vadd.f32 %v4563, %v4628
        %v4630 = vpop.f32.mrf.mxu0
        %v4631 = vadd.f32 %v4567, %v4630
        %4632 = vmatmul.bf16.gmra.mxu0 %v4607
        %v4633 = vpop.f32.mrf.mxu0
        %v4634 = vadd.f32 %v4571, %v4633
        %v4635 = vpop.f32.mrf.mxu0
        %v4636 = vadd.f32 %v4575, %v4635
        %4637 = vdwg.mxu0
        %4638 = vmatpush.bf16.msra.mxu0 0
        %4639 = vmatpush.bf16.msra.mxu0 0
        %4640 = vmatpush.bf16.msra.mxu0 0
        %4641 = vmatpush.bf16.msra.mxu0 0
        %4642 = vmatpush.bf16.msra.mxu0 %v4542
        %4643 = vmatpush.bf16.msra.mxu0 %v4538
        %4644 = vmatpush.bf16.msra.mxu0 %v4534
        %4645 = vmatpush.bf16.msra.mxu0 %v4530
        %4646 = vmatmul.bf16.gmra.mxu0 %v4598
        %v4647 = vpop.f32.mrf.mxu0
        %v4648 = vadd.f32 %v4547, %v4647
        %v4649 = vpop.f32.mrf.mxu0
        %v4650 = vadd.f32 %v4551, %v4649
        %4651 = vmatmul.bf16.gmra.mxu0 %v4601
        %v4652 = vpop.f32.mrf.mxu0
        %v4653 = vadd.f32 %v4555, %v4652
        %v4654 = vpop.f32.mrf.mxu0
        %v4655 = vadd.f32 %v4559, %v4654
        %4656 = vmatmul.bf16.gmra.mxu0 %v4604
        %v4657 = vpop.f32.mrf.mxu0
        %v4658 = vadd.f32 %v4563, %v4657
        %v4659 = vpop.f32.mrf.mxu0
        %v4660 = vadd.f32 %v4567, %v4659
        %4661 = vmatmul.bf16.gmra.mxu0 %v4607
        %v4662 = vpop.f32.mrf.mxu0
        %v4663 = vadd.f32 %v4571, %v4662
        %v4664 = vpop.f32.mrf.mxu0
        %v4665 = vadd.f32 %v4575, %v4664
        %4666 = vdwg.mxu0
        %4667 = vmatpush.bf16.msra.mxu0 0
        %4668 = vmatpush.bf16.msra.mxu0 0
        %4669 = vmatpush.bf16.msra.mxu0 0
        %4670 = vmatpush.bf16.msra.mxu0 0
        %4671 = vmatpush.bf16.msra.mxu0 %v4543
        %4672 = vmatpush.bf16.msra.mxu0 %v4539
        %4673 = vmatpush.bf16.msra.mxu0 %v4535
        %4674 = vmatpush.bf16.msra.mxu0 %v4531
        %4675 = vmatmul.bf16.gmra.mxu0 %v4598
        %v4676 = vpop.f32.mrf.mxu0
        %v4677 = vadd.f32 %v4547, %v4676
        %v4678 = vpop.f32.mrf.mxu0
        %v4679 = vadd.f32 %v4551, %v4678
        %4680 = vmatmul.bf16.gmra.mxu0 %v4601
        %v4681 = vpop.f32.mrf.mxu0
        %v4682 = vadd.f32 %v4555, %v4681
        %v4683 = vpop.f32.mrf.mxu0
        %v4684 = vadd.f32 %v4559, %v4683
        %4685 = vmatmul.bf16.gmra.mxu0 %v4604
        %v4686 = vpop.f32.mrf.mxu0
        %v4687 = vadd.f32 %v4563, %v4686
        %v4688 = vpop.f32.mrf.mxu0
        %v4689 = vadd.f32 %v4567, %v4688
        %4690 = vmatmul.bf16.gmra.mxu0 %v4607
        %v4691 = vpop.f32.mrf.mxu0
        %v4692 = vadd.f32 %v4571, %v4691
        %v4693 = vpop.f32.mrf.mxu0
        %v4694 = vadd.f32 %v4575, %v4693
        %4695 = vdwg.mxu0
        %4696 = vmatpush.bf16.msra.mxu0 0
        %4697 = vmatpush.bf16.msra.mxu0 0
        %4698 = vmatpush.bf16.msra.mxu0 0
        %4699 = vmatpush.bf16.msra.mxu0 0
        %4700 = vmatpush.bf16.msra.mxu0 %v4544
        %4701 = vmatpush.bf16.msra.mxu0 %v4540
        %4702 = vmatpush.bf16.msra.mxu0 %v4536
        %4703 = vmatpush.bf16.msra.mxu0 %v4532
        %4704 = vmatmul.bf16.gmra.mxu0 %v4598
        %v4705 = vpop.f32.mrf.mxu0
        %v4706 = vadd.f32 %v4547, %v4705
        %v4707 = vpop.f32.mrf.mxu0
        %v4708 = vadd.f32 %v4551, %v4707
        %4709 = vmatmul.bf16.gmra.mxu0 %v4601
        %v4710 = vpop.f32.mrf.mxu0
        %v4711 = vadd.f32 %v4555, %v4710
        %v4712 = vpop.f32.mrf.mxu0
        %v4713 = vadd.f32 %v4559, %v4712
        %4714 = vmatmul.bf16.gmra.mxu0 %v4604
        %v4715 = vpop.f32.mrf.mxu0
        %v4716 = vadd.f32 %v4563, %v4715
        %v4717 = vpop.f32.mrf.mxu0
        %v4718 = vadd.f32 %v4567, %v4717
        %4719 = vmatmul.bf16.gmra.mxu0 %v4607
        %v4720 = vpop.f32.mrf.mxu0
        %v4721 = vadd.f32 %v4571, %v4720
        %v4722 = vpop.f32.mrf.mxu0
        %v4723 = vadd.f32 %v4575, %v4722
        %4724 = vdwg.mxu0
        %v4725 = vtanh.pop %v4619
        %v4726 = vtanh.pop %v4648
        %v4727 = vtanh.pop %v4677
        %v4728 = vtanh.pop %v4706
        %v4729 = vtanh.pop %v4621
        %v4730 = vtanh.pop %v4650
        %v4731 = vtanh.pop %v4679
        %v4732 = vtanh.pop %v4708
        %v4733 = vtanh.pop %v4624
        %v4734 = vtanh.pop %v4653
        %v4735 = vtanh.pop %v4682
        %v4736 = vtanh.pop %v4711
        %v4737 = vtanh.pop %v4626
        %v4738 = vtanh.pop %v4655
        %v4739 = vtanh.pop %v4684
        %v4740 = vtanh.pop %v4713
        %v4741 = vtanh.pop %v4629
        %v4742 = vtanh.pop %v4658
        %v4743 = vtanh.pop %v4687
        %v4744 = vtanh.pop %v4716
        %v4745 = vtanh.pop %v4631
        %v4746 = vtanh.pop %v4660
        %v4747 = vtanh.pop %v4689
        %v4748 = vtanh.pop %v4718
        %v4749 = vtanh.pop %v4634
        %v4750 = vtanh.pop %v4663
        %v4751 = vtanh.pop %v4692
        %v4752 = vtanh.pop %v4721
        %v4753 = vtanh.pop %v4636
        %v4754 = vtanh.pop %v4665
        %v4755 = vtanh.pop %v4694
        %v4756 = vtanh.pop %v4723
        %4757 = vset.pattern.permute.xlu0 6
        %4758 = vperm.xlu0 %4757, %v3770
        %v4759 = vpop.permute.xlu0 %4758
        %4761 = vset.pattern.permute.xlu0 6
        %4762 = vperm.xlu0 %4761, %v3771
        %v4763 = vpop.permute.xlu0 %4762
        %4765 = vset.pattern.permute.xlu0 6
        %4766 = vperm.xlu0 %4765, %v3772
        %v4767 = vpop.permute.xlu0 %4766
        %4769 = vset.pattern.permute.xlu0 6
        %4770 = vperm.xlu0 %4769, %v3773
        %v4771 = vpop.permute.xlu0 %4770
        %4773 = vset.pattern.permute.xlu0 6
        %4774 = vperm.xlu0 %4773, %v3774
        %v4775 = vpop.permute.xlu0 %4774
        %4777 = vset.pattern.permute.xlu0 6
        %4778 = vperm.xlu0 %4777, %v3775
        %v4779 = vpop.permute.xlu0 %4778
        %4781 = vset.pattern.permute.xlu0 6
        %4782 = vperm.xlu0 %4781, %v3776
        %v4783 = vpop.permute.xlu0 %4782
        %4785 = vset.pattern.permute.xlu0 6
        %4786 = vperm.xlu0 %4785, %v3777
        %v4787 = vpop.permute.xlu0 %4786
        %v4789 = vmul.f32 %v4725, %v4759
        %v4790 = vmul.f32 %v4726, %v4759
        %v4791 = vmul.f32 %v4727, %v4759
        %v4792 = vmul.f32 %v4728, %v4759
        %v4793 = vmul.f32 %v4729, %v4763
        %v4794 = vmul.f32 %v4730, %v4763
        %v4795 = vmul.f32 %v4731, %v4763
        %v4796 = vmul.f32 %v4732, %v4763
        %v4797 = vmul.f32 %v4733, %v4767
        %v4798 = vmul.f32 %v4734, %v4767
        %v4799 = vmul.f32 %v4735, %v4767
        %v4800 = vmul.f32 %v4736, %v4767
        %v4801 = vmul.f32 %v4737, %v4771
        %v4802 = vmul.f32 %v4738, %v4771
        %v4803 = vmul.f32 %v4739, %v4771
        %v4804 = vmul.f32 %v4740, %v4771
        %v4805 = vmul.f32 %v4741, %v4775
        %v4806 = vmul.f32 %v4742, %v4775
        %v4807 = vmul.f32 %v4743, %v4775
        %v4808 = vmul.f32 %v4744, %v4775
        %v4809 = vmul.f32 %v4745, %v4779
        %v4810 = vmul.f32 %v4746, %v4779
        %v4811 = vmul.f32 %v4747, %v4779
        %v4812 = vmul.f32 %v4748, %v4779
        %v4813 = vmul.f32 %v4749, %v4783
        %v4814 = vmul.f32 %v4750, %v4783
        %v4815 = vmul.f32 %v4751, %v4783
        %v4816 = vmul.f32 %v4752, %v4783
        %v4817 = vmul.f32 %v4753, %v4787
        %v4818 = vmul.f32 %v4754, %v4787
        %v4819 = vmul.f32 %v4755, %v4787
        %v4820 = vmul.f32 %v4756, %v4787
        %v4821 = vadd.f32 %v4789, %v4793
        %v4822 = vadd.f32 %v4821, %v4797
        %v4823 = vadd.f32 %v4822, %v4801
        %v4824 = vrot.slane %v4823, 4
        %v4825 = vadd.f32 %v4823, %v4824
        %v4826 = vrot.slane %v4825, 2
        %v4827 = vadd.f32 %v4825, %v4826
        %v4828 = vrot.slane %v4827, 1
        %v4829 = vadd.f32 %v4827, %v4828
        %v4830 = vadd.f32 %v4790, %v4794
        %v4831 = vadd.f32 %v4830, %v4798
        %v4832 = vadd.f32 %v4831, %v4802
        %v4833 = vrot.slane %v4832, 4
        %v4834 = vadd.f32 %v4832, %v4833
        %v4835 = vrot.slane %v4834, 2
        %v4836 = vadd.f32 %v4834, %v4835
        %v4837 = vrot.slane %v4836, 1
        %v4838 = vadd.f32 %v4836, %v4837
        %v4839 = vadd.f32 %v4791, %v4795
        %v4840 = vadd.f32 %v4839, %v4799
        %v4841 = vadd.f32 %v4840, %v4803
        %v4842 = vrot.slane %v4841, 4
        %v4843 = vadd.f32 %v4841, %v4842
        %v4844 = vrot.slane %v4843, 2
        %v4845 = vadd.f32 %v4843, %v4844
        %v4846 = vrot.slane %v4845, 1
        %v4847 = vadd.f32 %v4845, %v4846
        %v4848 = vadd.f32 %v4792, %v4796
        %v4849 = vadd.f32 %v4848, %v4800
        %v4850 = vadd.f32 %v4849, %v4804
        %v4851 = vrot.slane %v4850, 4
        %v4852 = vadd.f32 %v4850, %v4851
        %v4853 = vrot.slane %v4852, 2
        %v4854 = vadd.f32 %v4852, %v4853
        %v4855 = vrot.slane %v4854, 1
        %v4856 = vadd.f32 %v4854, %v4855
        %4857 = vset.pattern.permute.xlu0 7
        %4858 = vperm.xlu0 %4857, %v3770
        %v4859 = vpop.permute.xlu0 %4858
        %v4861 = vadd.f32 %v4829, %v4859
        %v4862 = vadd.f32 %v4838, %v4859
        %v4863 = vadd.f32 %v4847, %v4859
        %v4864 = vadd.f32 %v4856, %v4859
        %v4865 = vadd.f32 %v4805, %v4809
        %v4866 = vadd.f32 %v4865, %v4813
        %v4867 = vadd.f32 %v4866, %v4817
        %v4868 = vrot.slane %v4867, 4
        %v4869 = vadd.f32 %v4867, %v4868
        %v4870 = vrot.slane %v4869, 2
        %v4871 = vadd.f32 %v4869, %v4870
        %v4872 = vrot.slane %v4871, 1
        %v4873 = vadd.f32 %v4871, %v4872
        %v4874 = vadd.f32 %v4806, %v4810
        %v4875 = vadd.f32 %v4874, %v4814
        %v4876 = vadd.f32 %v4875, %v4818
        %v4877 = vrot.slane %v4876, 4
        %v4878 = vadd.f32 %v4876, %v4877
        %v4879 = vrot.slane %v4878, 2
        %v4880 = vadd.f32 %v4878, %v4879
        %v4881 = vrot.slane %v4880, 1
        %v4882 = vadd.f32 %v4880, %v4881
        %v4883 = vadd.f32 %v4807, %v4811
        %v4884 = vadd.f32 %v4883, %v4815
        %v4885 = vadd.f32 %v4884, %v4819
        %v4886 = vrot.slane %v4885, 4
        %v4887 = vadd.f32 %v4885, %v4886
        %v4888 = vrot.slane %v4887, 2
        %v4889 = vadd.f32 %v4887, %v4888
        %v4890 = vrot.slane %v4889, 1
        %v4891 = vadd.f32 %v4889, %v4890
        %v4892 = vadd.f32 %v4808, %v4812
        %v4893 = vadd.f32 %v4892, %v4816
        %v4894 = vadd.f32 %v4893, %v4820
        %v4895 = vrot.slane %v4894, 4
        %v4896 = vadd.f32 %v4894, %v4895
        %v4897 = vrot.slane %v4896, 2
        %v4898 = vadd.f32 %v4896, %v4897
        %v4899 = vrot.slane %v4898, 1
        %v4900 = vadd.f32 %v4898, %v4899
        %v4901 = vadd.f32 %v4873, %v4859
        %v4902 = vadd.f32 %v4882, %v4859
        %v4903 = vadd.f32 %v4891, %v4859
        %v4904 = vadd.f32 %v4900, %v4859
        %v4905 = vmul.f32 %v4901, 1.442695
        %v4906 = vpow.pop %v4905
        %v4907 = vmul.f32 %v4902, 1.442695
        %v4908 = vpow.pop %v4907
        %v4909 = vmul.f32 %v4903, 1.442695
        %v4910 = vpow.pop %v4909
        %v4911 = vmul.f32 %v4904, 1.442695
        %v4912 = vpow.pop %v4911
        %v4917 = vrot.slane %v4906, 1
        %v4918 = vrot.slane %v4908, 1
        %v4919 = vrot.slane %v4910, 1
        %v4920 = vrot.slane %v4912, 1
        %v4925 = vmul.f32 %v2593, %v4917
        %v4926 = vmul.f32 %v2594, %v4918
        %v4927 = vmul.f32 %v2595, %v4919
        %v4928 = vmul.f32 %v2596, %v4920
        %v4929 = vadd.f32 %v4861, %v4925
        %v4930 = vadd.f32 %v4862, %v4926
        %v4931 = vadd.f32 %v4863, %v4927
        %v4932 = vadd.f32 %v4864, %v4928
        %v4933 = vadd.f32 %v3765, %v4901
        %v4934 = vadd.f32 %v3766, %v4902
        %v4935 = vadd.f32 %v3767, %v4903
        %v4936 = vadd.f32 %v3768, %v4904
        %v4941 = vrot.slane %v4930, 7
        %v4942 = vrot.slane %v4931, 6
        %v4943 = vrot.slane %v4932, 5
        %vm4944 = vcmask 1040384
        %v4945 = vsel %vm4944, %v4929, %v4941
        %vm4946 = vcmask 1042434
        %v4947 = vsel %vm4946, %v4942, %v4943
        %vm4948 = vcmask 1041408
        %v4949 = vsel %vm4948, %v4945, %v4947
        %v4951 = vlaneseq
        %vm4952 = vcmp.ge.s32.totalorder %v4951, 0
        %vm4953 = vcmp.lt.s32.totalorder %v4951, 512
        %vm4954 = vmand %vm4952, %vm4953
        %4955 = vst.msk [vmem:[%s212] ss:$4 sm:$0xf] %vm4954, %v4949
        %v4960 = vrot.slane %v3762, 7
        %v4961 = vrot.slane %v3763, 6
        %v4962 = vrot.slane %v3764, 5
        %v4963 = vsel %vm4944, %v3761, %v4960
        %v4964 = vsel %vm4946, %v4961, %v4962
        %v4965 = vsel %vm4948, %v4963, %v4964
        %s4967 = scalar_lea.vmem %s212, 1 [#allocation5]
        %4968 = vst.msk [vmem:[%s4967] ss:$4 sm:$0xf] %vm4954, %v4965
        %4969 = vst [vmem:[#allocation1] sm:$0xff] %v229
        %4970 = vst [vmem:[#allocation1 + $0x8] sm:$0xff] %v230
        %s4971 = scalar_lea.vmem [#allocation1], 2
        %v4972 = vld [vmem:[%s4971] ss:$4 sm:$0xff]
        %s4974 = scalar_lea.vmem %s212, 2 [#allocation5]
        %4975 = vst.msk [vmem:[%s4974] ss:$4 sm:$0xf] %vm4954, %v4972
        %4980 = vst [vmem:[#allocation1] sm:$0xff] %v4933
        %4981 = vst [vmem:[#allocation1 + $0x9] sm:$0xff] %v4934
        %4982 = vst [vmem:[#allocation1 + $0x12] sm:$0xff] %v4935
        %4983 = vst [vmem:[#allocation1 + $0x1b] sm:$0xff] %v4936
        %s4984 = scalar_lea.vmem [#allocation1], 1
        %v4985 = vld [vmem:[%s4984] ss:$9 sm:$0xff]
        %4987 = vst.msk [vmem:[%s219] sm:$0xf] %vm4954, %v4985
        %s4988 = sand.u32 %s99, 1
        %s4989 = scalar_lea.sflag [#allocation4], %s4988
        %s4990 = sand.u32 %s99, 1
        %s4991 = smul.addr %s4990, 16
        %s4992 = scalar_lea.vmem [#allocation5], %s4991
        %s4993 = sand.u32 %s125, 1
        %s4994 = scalar_lea.sflag [#allocation7], %s4993
        %s4995 = sand.u32 %s125, 1
        %s4996 = smul.addr %s4995, 4
        %s4997 = scalar_lea.vmem [#allocation6], %s4996
        // Predicated region
        $region37: #{tpu_custom_call.1} parent=31 // pred_check
          %p4998 = pneg %p109
        $region38: #{tpu_custom_call.1} parent=31 // pred_check_branch
          %5000 = sbr.rel (%p4998) target = $region40
        $region39: #{tpu_custom_call.1} parent=31 // pred_region
          %s5001 = smul.u32 4, %s23
          %5003 = vsyncadd %s4989, 0
          %s5004 = smul.addr %s5001, 4
          %s5005 = scalar_lea.hbm %s3, %s5004
          %s5007 = sshll.u32 %s4992, 4
          %s5008 = int_to_ptr.vmem [resolvable:$true] %s5007
          %s5009 = sshll.u32 %s5005, 4
          %s5010 = int_to_ptr.hbm [resolvable:$true] %s5009
          %5012 = dma.vmem_to_hbm [thread:$0]  %s5008, 256, %s5010, %s4989
        $region40: #{tpu_custom_call.1} parent=31 // pred_fallthru
          _
        // Predicated region
        $region41: #{tpu_custom_call.1} parent=31 // pred_check
          %p5013 = pneg %p135
        $region42: #{tpu_custom_call.1} parent=31 // pred_check_branch
          %5015 = sbr.rel (%p5013) target = $region44
        $region43: #{tpu_custom_call.1} parent=31 // pred_region
          %s5016 = smul.u32 4, %s23
          %5018 = vsyncadd %s4994, 0
          %s5019 = scalar_lea.hbm %s4, %s5016
          %s5021 = sshll.u32 %s4997, 4
          %s5022 = int_to_ptr.vmem [resolvable:$true] %s5021
          %s5023 = sshll.u32 %s5019, 4
          %s5024 = int_to_ptr.hbm [resolvable:$true] %s5023
          %5026 = dma.vmem_to_hbm [thread:$0]  %s5022, 64, %s5024, %s4994
        $region44: #{tpu_custom_call.1} parent=31 // pred_fallthru
          _
      $region32: #{tpu_custom_call.1} parent=5 // pred_fallthru
        _
      %p5027 = scmp.le.s32.totalorder 2, %s18
      // Predicated region
      $region45: #{tpu_custom_call.1} parent=5 // pred_check
        %p5028 = pneg %p5027
      $region46: #{tpu_custom_call.1} parent=5 // pred_check_branch
        %5030 = sbr.rel (%p5028) target = $region48
      $region47: #{tpu_custom_call.1} parent=5 // pred_region
        %s5031 = ssub.s32 %s18, 2
        // Predicated region
        $region49: #{tpu_custom_call.1} parent=47 // pred_check
          %p5032 = pneg %p115
        $region50: #{tpu_custom_call.1} parent=47 // pred_check_branch
          %5034 = sbr.rel (%p5032) target = $region52
        $region51: #{tpu_custom_call.1} parent=47 // pred_region
          %s5035 = sand.u32 %s100, 1
          %s5036 = scalar_lea.sflag [#allocation4], %s5035
          %s5037 = sand.u32 %s100, 1
          %s5038 = smul.addr %s5037, 16
          %s5039 = scalar_lea.vmem [#allocation5], %s5038
          %5041 = dma.done %s5036, 256
        $region52: #{tpu_custom_call.1} parent=47 // pred_fallthru
          _
        // Predicated region
        $region53: #{tpu_custom_call.1} parent=47 // pred_check
          %p5042 = pneg %p141
        $region54: #{tpu_custom_call.1} parent=47 // pred_check_branch
          %5044 = sbr.rel (%p5042) target = $region56
        $region55: #{tpu_custom_call.1} parent=47 // pred_region
          %s5045 = sand.u32 %s126, 1
          %s5046 = scalar_lea.sflag [#allocation7], %s5045
          %s5047 = sand.u32 %s126, 1
          %s5048 = smul.addr %s5047, 4
          %s5049 = scalar_lea.vmem [#allocation6], %s5048
          %5051 = dma.done %s5046, 64
        $region56: #{tpu_custom_call.1} parent=47 // pred_fallthru
          _
      $region48: #{tpu_custom_call.1} parent=5 // pred_fallthru
        _
    $region6: #{tpu_custom_call.1} parent=1 // loop_footer
      %s22 = sadd.s32 1, %s18
    $region7: #{tpu_custom_call.1} parent=1 // loop_footer_branch
      %17 = sbr.rel target = $region3
    $region8: #{tpu_custom_call.1} parent=1 // loop_exit
      _
    %5052 = vsyncpa [#allocation3], 1
    %s5053 = scalar_lea.sflag [#allocation3], 1
    %5054 = vsyncpa %s5053, 1
    %5055 = vsyncpa [#allocation4], 1
    %s5056 = scalar_lea.sflag [#allocation4], 1
    %5057 = vsyncpa %s5056, 1
    %5058 = vsyncpa [#allocation7], 1
    %s5059 = scalar_lea.sflag [#allocation7], 1
    %5060 = vsyncpa %s5059, 1

</llo_original>
